<compile_context>
chip_gen: v5e
topology: v5e:2x2
jax: 0.10.0
libtpu: 0.0.40
codegen_flags: <defaults>
</compile_context>

<pallas_src>
import math

import jax
import jax.numpy as jnp
from jax.experimental import pallas as pl
from jax.experimental.pallas import tpu as pltpu


def _round_up(x, m):
    return ((x + m - 1) // m) * m


def _chip_info():
    """(is_v5e, physical VMEM bytes per TensorCore) with conservative defaults."""
    try:
        kind = jax.devices()[0].device_kind.lower()
    except Exception:
        kind = ""
    is_v5e = ("v5 lite" in kind) or ("v5e" in kind) or ("v5lite" in kind)
    is_v7 = "v7" in kind
    if is_v7 or kind == "":
        phys = 64 * 1024 * 1024          # v7x (or unknown -> be conservative)
    else:
        phys = 128 * 1024 * 1024         # v5e / v6e
    return is_v5e, phys


def _pick_toh(OH, OW, tn):
    """Largest TOH dividing OH s.t. the (TOH*OW, tn) f32 acc stays ~<=128 KiB.

    Falls back to TOH=OH (no spatial tiling) when the whole image already
    fits the budget or no 8-divisible tile exists.
    """
    m_budget = max(32768 // tn, OW)       # rows of the flattened M dim per step
    if OH * OW <= m_budget:
        return OH
    cands = [d for d in range(1, OH)
             if OH % d == 0 and d * OW <= m_budget and (d * OW) % 8 == 0]
    return max(cands) if cands else OH


def _fused_conv2d_pallas(xp, w_taps, bias2d, *, kernel_size, stride, dilation,
                         out_hw, is_v5e, vmem_phys):
    """Fused direct convolution.

    xp:      (N, HP, WP, C)      zero-padded NHWC activations (bf16)
    w_taps:  (KH*KW, C, O_pad)   per-tap weight slices (bf16)
    bias2d:  (1, O_pad) f32, or None
    returns: (N, OH*OW, O_pad) f32
    """
    N, HP, WP, C = xp.shape
    KHKW, C2, O_pad = w_taps.shape
    KH, KW = kernel_size
    SH, SW = stride
    DH, DW = dilation
    OH, OW = out_hw
    M = OH * OW
    assert C2 == C and KHKW == KH * KW

    # Lane-dense output tile, chip-aware: 256 matches the v6e/v7x 256x256 MXU,
    # 128 for v5e's 128x128 MXU and for small out_channels.
    tn = 256 if (O_pad % 256 == 0 and not is_v5e) else 128
    assert O_pad % tn == 0
    num_o = O_pad // tn

    TOH = _pick_toh(OH, OW, tn)
    TM = TOH * OW
    num_m = OH // TOH
    use_bias = bias2d is not None
    itemsize = jnp.dtype(xp.dtype).itemsize

    # ---- chip-aware VMEM budget ------------------------------------------
    x_block = HP * WP * C * itemsize
    w_block = KHKW * C * tn * itemsize
    o_block = TM * tn * 4
    b_block = tn * 4 if use_bias else 0
    cap = int(vmem_phys * 0.85)
    # Single-buffer the activation slab when double-buffering it would eat
    # more than ~1/3 of the budget: its block index only changes with n, so
    # the only cost is one exposed DMA per batch element.
    x_bufs = 2 if 2 * x_block <= cap // 3 else 1
    need = x_bufs * x_block + 2 * (w_block + o_block + b_block)
    vmem_limit = int(min(max(need + (16 << 20), 32 << 20), cap))

    def kernel(*refs):
        if use_bias:
            x_ref, w_ref, b_ref, o_ref = refs
        else:
            x_ref, w_ref, o_ref = refs
        m = pl.program_id(2)
        row0 = m * (TOH * SH)
        if (TOH * SH) % 8 == 0:
            row0 = pl.multiple_of(row0, 8)

        # Accumulator initialized from the broadcast bias (saves one full
        # (TM, tn) VPU pass per grid step).
        if use_bias:
            acc = jnp.broadcast_to(b_ref[...], (TM, tn)).astype(jnp.float32)
        else:
            acc = jnp.zeros((TM, tn), jnp.float32)

        # Static unroll over KH*KW taps: each tap is a (TM, C) x (C, tn) bf16
        # matmul accumulated in f32 on the MXU.
        for kh in range(KH):
            r0 = row0 + kh * DH
            rows = pl.ds(r0, TOH) if SH == 1 else pl.ds(r0, TOH, stride=SH)
            for kw in range(KW):
                c0 = kw * DW
                cols = (slice(c0, c0 + OW) if SW == 1
                        else pl.ds(c0, OW, stride=SW))
                xs = x_ref[0, rows, cols, :].reshape(TM, C)
                acc = acc + jnp.dot(xs, w_ref[kh * KW + kw],
                                    preferred_element_type=jnp.float32)
        o_ref[0] = acc.astype(o_ref.dtype)

    x_spec_kwargs = {}
    if x_bufs == 1:
        x_spec_kwargs["pipeline_mode"] = pl.Buffered(1)

    in_specs = [
        # Full padded spatial slab for one batch element; re-used across all
        # (o, m) tiles (Pallas skips the re-DMA when the block index repeats).
        pl.BlockSpec((1, HP, WP, C), lambda n, o, m: (n, 0, 0, 0),
                     **x_spec_kwargs),
        # All taps of one C_out tile, resident in VMEM across all m tiles.
        pl.BlockSpec((KHKW, C, tn), lambda n, o, m: (0, 0, o)),
    ]
    operands = [xp, w_taps]
    if use_bias:
        in_specs.append(pl.BlockSpec((1, tn), lambda n, o, m: (0, o)))
        operands.append(bias2d)

    out = pl.pallas_call(
        kernel,
        out_shape=jax.ShapeDtypeStruct((N, M, O_pad), jnp.float32),
        grid_spec=pltpu.PrefetchScalarGridSpec(
            num_scalar_prefetch=0,
            grid=(N, num_o, num_m),
            in_specs=in_specs,
            out_specs=pl.BlockSpec((1, TM, tn), lambda n, o, m: (n, m, o)),
        ),
        compiler_params=pltpu.CompilerParams(
            dimension_semantics=("parallel", "parallel", "parallel"),
            vmem_limit_bytes=vmem_limit,
        ),
    )(*operands)
    return out


class Conv2dPallas:
    """Mirror of the bnnp Conv2d module (groups=1, padding_mode='zeros')."""

    def __init__(self, in_channels, out_channels, kernel_size, stride=1,
                 padding=0, dilation=1, groups=1, bias=True,
                 padding_mode="zeros", key=None, compute_dtype=jnp.bfloat16):
        def _pair(v):
            return (v, v) if isinstance(v, int) else tuple(v)

        if groups != 1:
            raise NotImplementedError("groups > 1")        # TODO(synk): grouped conv
        if padding_mode != "zeros":
            raise NotImplementedError("padding_mode")       # TODO(synk): reflect/replicate/circular

        self.in_channels = in_channels
        self.out_channels = out_channels
        self.kernel_size = _pair(kernel_size)
        self.stride = _pair(stride)
        self.dilation = _pair(dilation)
        self.compute_dtype = compute_dtype
        self.is_v5e, self.vmem_phys = _chip_info()

        KH, KW = self.kernel_size
        DH, DW = self.dilation
        if isinstance(padding, str):
            if padding == "valid":
                self.padding = ((0, 0), (0, 0))
            elif padding == "same":
                if any(s != 1 for s in self.stride):
                    raise ValueError("padding='same' requires stride=1")
                pads = []
                for d, k in zip((DH, DW), (KH, KW)):
                    total = d * (k - 1)
                    lo = total // 2
                    pads.append((lo, total - lo))
                self.padding = tuple(pads)
            else:
                raise ValueError(f"invalid padding string {padding!r}")
        else:
            ph, pw = _pair(padding)
            self.padding = ((ph, ph), (pw, pw))

        fan_in = in_channels * KH * KW
        if key is None:
            key = jax.random.PRNGKey(0)
        # Flat weight (O, C*KH*KW), Normal(0, 0.5/sqrt(fan_in)) -- matches the module.
        self.weight = (0.5 / math.sqrt(fan_in)) * jax.random.normal(
            key, (out_channels, fan_in), dtype=jnp.float32)
        self.bias = jnp.zeros((out_channels,), jnp.float32) if bias else None

        # ---- layout plumbing hoisted out of the per-call path ---------------
        # Chip-aware lane padding: 256-multiples feed the v6e/v7x 256-wide MXU
        # when the layer is big enough to use them; otherwise keep 128 to
        # avoid doubling the f32 writeback of padded columns.
        lane_mult = 128 if (self.is_v5e or out_channels <= 128) else 256
        self.o_pad = _round_up(out_channels, lane_mult)
        # Weight flat (O, C*KH*KW) -> per-tap (KH*KW, C, O_pad), bf16.
        w4 = self.weight.reshape(out_channels, in_channels, KH, KW)
        w_taps = jnp.transpose(w4, (2, 3, 1, 0)).reshape(
            KH * KW, in_channels, out_channels)
        self.w_taps = jnp.pad(
            w_taps, ((0, 0), (0, 0), (0, self.o_pad - out_channels))
        ).astype(compute_dtype)
        self.bias_pad = (
            jnp.pad(self.bias, (0, self.o_pad - out_channels)).reshape(1, self.o_pad)
            if bias else None)

        # Jit the whole forward so the NCHW<->NHWC transposes, zero pad and
        # bf16 cast fuse instead of making separate HBM passes.
        self._forward = jax.jit(self._forward_impl)

    def _forward_impl(self, x, w_taps, bias_pad):
        N, C, H, W = x.shape
        assert C == self.in_channels
        KH, KW = self.kernel_size
        SH, SW = self.stride
        DH, DW = self.dilation
        (pt, pb), (pw_lo, pw_hi) = self.padding
        OH = (H + pt + pb - DH * (KH - 1) - 1) // SH + 1
        OW = (W + pw_lo + pw_hi - DW * (KW - 1) - 1) // SW + 1

        # NCHW -> zero-padded NHWC in the compute dtype (fused under jit).
        # TODO(synk): keep activations NHWC end-to-end upstream to drop the
        # transposes entirely.
        xp = jnp.transpose(x, (0, 2, 3, 1))
        xp = jnp.pad(xp, ((0, 0), (pt, pb), (pw_lo, pw_hi), (0, 0)))
        xp = xp.astype(self.compute_dtype)

        out = _fused_conv2d_pallas(
            xp, w_taps, bias_pad,
            kernel_size=self.kernel_size, stride=self.stride,
            dilation=self.dilation, out_hw=(OH, OW),
            is_v5e=self.is_v5e, vmem_phys=self.vmem_phys)
        out = out[:, :, :self.out_channels].reshape(N, OH, OW, self.out_channels)
        return jnp.transpose(out, (0, 3, 1, 2)).astype(x.dtype)

    def __call__(self, x):
        return self._forward(x, self.w_taps, self.bias_pad)


def _reference_conv(x, weight_flat, bias, kernel_size, stride, padding, dilation,
                    compute_dtype):
    O, fan_in = weight_flat.shape
    C = x.shape[1]
    KH, KW = kernel_size
    w = weight_flat.reshape(O, C, KH, KW)
    # Match the kernel's bf16-operand / f32-accumulate numerics.
    x_c = x.astype(compute_dtype).astype(jnp.float32)
    w_c = w.astype(compute_dtype).astype(jnp.float32)
    out = jax.lax.conv_general_dilated(
        x_c, w_c,
        window_strides=stride,
        padding=list(padding),
        rhs_dilation=dilation,
        dimension_numbers=("NCHW", "OIHW", "NCHW"),
        precision=jax.lax.Precision.HIGHEST,
    )
    if bias is not None:
        out = out + bias.reshape(1, O, 1, 1)
    return out


def _check(conv, x):
    y = jax.block_until_ready(conv(x))
    y_ref = _reference_conv(x, conv.weight, conv.bias, conv.kernel_size,
                            conv.stride, conv.padding, conv.dilation,
                            conv.compute_dtype)
    assert y.shape == y_ref.shape, (y.shape, y_ref.shape)
    err = float(jnp.max(jnp.abs(y - y_ref)))
    assert jnp.allclose(y, y_ref, atol=2e-3, rtol=2e-3), f"mismatch, max |err|={err}"
    return y


if __name__ == "__main__":
    key = jax.random.PRNGKey(0)
    k_x, k_w1, k_w2 = jax.random.split(key, 3)

    # Small deterministic example consistent with the module.
    N, C_in, H, W = 2, 4, 16, 16
    x = jax.random.normal(k_x, (N, C_in, H, W), dtype=jnp.float32)

    # Case 1: bias, explicit padding.
    conv1 = Conv2dPallas(C_in, 8, 3, stride=1, padding=1, dilation=1,
                         bias=True, key=k_w1)
    _check(conv1, x)

    # Case 2: no bias, padding='same'.
    conv2 = Conv2dPallas(C_in, 16, 3, stride=1, padding="same", dilation=1,
                         bias=False, key=k_w2)
    _check(conv2, x)

    print("KERNEL_OK")
</pallas_src>

<mosaic_0001>
module attributes {stable_mosaic.version = 11 : i64} {
  func.func @kernel(%arg0: i32, %arg1: i32, %arg2: i32, %arg3: memref<1x18x18x4xbf16, #tpu.memory_space<vmem>>, %arg4: memref<9x4x128xbf16, #tpu.memory_space<vmem>>, %arg5: memref<1x128xf32, #tpu.memory_space<vmem>>, %arg6: memref<1x256x128xf32, #tpu.memory_space<vmem>>) attributes {dimension_semantics = [#tpu.dimension_semantics<parallel>, #tpu.dimension_semantics<parallel>, #tpu.dimension_semantics<parallel>], iteration_bounds = array<i64: 2, 1, 1>, scalar_prefetch = 0 : i64, scratch_operands = 0 : i64, tpu.core_type = #tpu.core_type<tc>, window_params = [{transform_indices = @transform_0, window_bounds = array<i64: 1, 18, 18, 4>}, {transform_indices = @transform_1, window_bounds = array<i64: 9, 4, 128>}, {transform_indices = @transform_2, window_bounds = array<i64: 1, 128>}, {transform_indices = @transform_3, window_bounds = array<i64: 1, 256, 128>}]} {
    %c16_i32 = arith.constant 16 : i32
    %0 = arith.muli %arg2, %c16_i32 : i32
    %1 = tpu.assume_multiple %0, 8 : i32
    %c0 = arith.constant 0 : index
    %c0_0 = arith.constant 0 : index
    %2 = vector.load %arg5[%c0, %c0_0] : memref<1x128xf32, #tpu.memory_space<vmem>>, vector<1x128xf32>
    %3 = vector.shape_cast %2 : vector<1x128xf32> to vector<1x128xf32>
    %4 = vector.broadcast %3 : vector<1x128xf32> to vector<256x128xf32>
    %c0_i32 = arith.constant 0 : i32
    %5 = arith.addi %1, %c0_i32 : i32
    %c0_1 = arith.constant 0 : index
    %6 = arith.index_cast %5 : i32 to index
    %c0_2 = arith.constant 0 : index
    %c0_3 = arith.constant 0 : index
    %7 = vector.load %arg3[%c0_1, %6, %c0_2, %c0_3] : memref<1x18x18x4xbf16, #tpu.memory_space<vmem>>, vector<1x16x16x4xbf16>
    %8 = vector.shape_cast %7 : vector<1x16x16x4xbf16> to vector<16x16x4xbf16>
    %9 = vector.shape_cast %8 : vector<16x16x4xbf16> to vector<256x4xbf16>
    %c0_4 = arith.constant 0 : index
    %c0_5 = arith.constant 0 : index
    %c0_6 = arith.constant 0 : index
    %10 = vector.load %arg4[%c0_4, %c0_5, %c0_6] : memref<9x4x128xbf16, #tpu.memory_space<vmem>>, vector<1x4x128xbf16>
    %11 = vector.shape_cast %10 : vector<1x4x128xbf16> to vector<4x128xbf16>
    %cst = arith.constant dense<0.000000e+00> : vector<256x128xf32>
    %12 = tpu.matmul %9, %11, %cst {dimension_numbers = #tpu.dot_dimension_numbers<[1], [0], [0], [1], [0, 0, 1, 1], [], []>} : vector<256x4xbf16>, vector<4x128xbf16>, vector<256x128xf32> -> vector<256x128xf32>
    %13 = arith.addf %4, %12 : vector<256x128xf32>
    %c0_7 = arith.constant 0 : index
    %14 = arith.index_cast %5 : i32 to index
    %c1 = arith.constant 1 : index
    %c0_8 = arith.constant 0 : index
    %15 = vector.load %arg3[%c0_7, %14, %c1, %c0_8] : memref<1x18x18x4xbf16, #tpu.memory_space<vmem>>, vector<1x16x16x4xbf16>
    %16 = vector.shape_cast %15 : vector<1x16x16x4xbf16> to vector<16x16x4xbf16>
    %17 = vector.shape_cast %16 : vector<16x16x4xbf16> to vector<256x4xbf16>
    %c1_9 = arith.constant 1 : index
    %c0_10 = arith.constant 0 : index
    %c0_11 = arith.constant 0 : index
    %18 = vector.load %arg4[%c1_9, %c0_10, %c0_11] : memref<9x4x128xbf16, #tpu.memory_space<vmem>>, vector<1x4x128xbf16>
    %19 = vector.shape_cast %18 : vector<1x4x128xbf16> to vector<4x128xbf16>
    %cst_12 = arith.constant dense<0.000000e+00> : vector<256x128xf32>
    %20 = tpu.matmul %17, %19, %cst_12 {dimension_numbers = #tpu.dot_dimension_numbers<[1], [0], [0], [1], [0, 0, 1, 1], [], []>} : vector<256x4xbf16>, vector<4x128xbf16>, vector<256x128xf32> -> vector<256x128xf32>
    %21 = arith.addf %13, %20 : vector<256x128xf32>
    %c0_13 = arith.constant 0 : index
    %22 = arith.index_cast %5 : i32 to index
    %c2 = arith.constant 2 : index
    %c0_14 = arith.constant 0 : index
    %23 = vector.load %arg3[%c0_13, %22, %c2, %c0_14] : memref<1x18x18x4xbf16, #tpu.memory_space<vmem>>, vector<1x16x16x4xbf16>
    %24 = vector.shape_cast %23 : vector<1x16x16x4xbf16> to vector<16x16x4xbf16>
    %25 = vector.shape_cast %24 : vector<16x16x4xbf16> to vector<256x4xbf16>
    %c2_15 = arith.constant 2 : index
    %c0_16 = arith.constant 0 : index
    %c0_17 = arith.constant 0 : index
    %26 = vector.load %arg4[%c2_15, %c0_16, %c0_17] : memref<9x4x128xbf16, #tpu.memory_space<vmem>>, vector<1x4x128xbf16>
    %27 = vector.shape_cast %26 : vector<1x4x128xbf16> to vector<4x128xbf16>
    %cst_18 = arith.constant dense<0.000000e+00> : vector<256x128xf32>
    %28 = tpu.matmul %25, %27, %cst_18 {dimension_numbers = #tpu.dot_dimension_numbers<[1], [0], [0], [1], [0, 0, 1, 1], [], []>} : vector<256x4xbf16>, vector<4x128xbf16>, vector<256x128xf32> -> vector<256x128xf32>
    %29 = arith.addf %21, %28 : vector<256x128xf32>
    %c1_i32 = arith.constant 1 : i32
    %30 = arith.addi %1, %c1_i32 : i32
    %c0_19 = arith.constant 0 : index
    %31 = arith.index_cast %30 : i32 to index
    %c0_20 = arith.constant 0 : index
    %c0_21 = arith.constant 0 : index
    %32 = vector.load %arg3[%c0_19, %31, %c0_20, %c0_21] : memref<1x18x18x4xbf16, #tpu.memory_space<vmem>>, vector<1x16x16x4xbf16>
    %33 = vector.shape_cast %32 : vector<1x16x16x4xbf16> to vector<16x16x4xbf16>
    %34 = vector.shape_cast %33 : vector<16x16x4xbf16> to vector<256x4xbf16>
    %c3 = arith.constant 3 : index
    %c0_22 = arith.constant 0 : index
    %c0_23 = arith.constant 0 : index
    %35 = vector.load %arg4[%c3, %c0_22, %c0_23] : memref<9x4x128xbf16, #tpu.memory_space<vmem>>, vector<1x4x128xbf16>
    %36 = vector.shape_cast %35 : vector<1x4x128xbf16> to vector<4x128xbf16>
    %cst_24 = arith.constant dense<0.000000e+00> : vector<256x128xf32>
    %37 = tpu.matmul %34, %36, %cst_24 {dimension_numbers = #tpu.dot_dimension_numbers<[1], [0], [0], [1], [0, 0, 1, 1], [], []>} : vector<256x4xbf16>, vector<4x128xbf16>, vector<256x128xf32> -> vector<256x128xf32>
    %38 = arith.addf %29, %37 : vector<256x128xf32>
    %c0_25 = arith.constant 0 : index
    %39 = arith.index_cast %30 : i32 to index
    %c1_26 = arith.constant 1 : index
    %c0_27 = arith.constant 0 : index
    %40 = vector.load %arg3[%c0_25, %39, %c1_26, %c0_27] : memref<1x18x18x4xbf16, #tpu.memory_space<vmem>>, vector<1x16x16x4xbf16>
    %41 = vector.shape_cast %40 : vector<1x16x16x4xbf16> to vector<16x16x4xbf16>
    %42 = vector.shape_cast %41 : vector<16x16x4xbf16> to vector<256x4xbf16>
    %c4 = arith.constant 4 : index
    %c0_28 = arith.constant 0 : index
    %c0_29 = arith.constant 0 : index
    %43 = vector.load %arg4[%c4, %c0_28, %c0_29] : memref<9x4x128xbf16, #tpu.memory_space<vmem>>, vector<1x4x128xbf16>
    %44 = vector.shape_cast %43 : vector<1x4x128xbf16> to vector<4x128xbf16>
    %cst_30 = arith.constant dense<0.000000e+00> : vector<256x128xf32>
    %45 = tpu.matmul %42, %44, %cst_30 {dimension_numbers = #tpu.dot_dimension_numbers<[1], [0], [0], [1], [0, 0, 1, 1], [], []>} : vector<256x4xbf16>, vector<4x128xbf16>, vector<256x128xf32> -> vector<256x128xf32>
    %46 = arith.addf %38, %45 : vector<256x128xf32>
    %c0_31 = arith.constant 0 : index
    %47 = arith.index_cast %30 : i32 to index
    %c2_32 = arith.constant 2 : index
    %c0_33 = arith.constant 0 : index
    %48 = vector.load %arg3[%c0_31, %47, %c2_32, %c0_33] : memref<1x18x18x4xbf16, #tpu.memory_space<vmem>>, vector<1x16x16x4xbf16>
    %49 = vector.shape_cast %48 : vector<1x16x16x4xbf16> to vector<16x16x4xbf16>
    %50 = vector.shape_cast %49 : vector<16x16x4xbf16> to vector<256x4xbf16>
    %c5 = arith.constant 5 : index
    %c0_34 = arith.constant 0 : index
    %c0_35 = arith.constant 0 : index
    %51 = vector.load %arg4[%c5, %c0_34, %c0_35] : memref<9x4x128xbf16, #tpu.memory_space<vmem>>, vector<1x4x128xbf16>
    %52 = vector.shape_cast %51 : vector<1x4x128xbf16> to vector<4x128xbf16>
    %cst_36 = arith.constant dense<0.000000e+00> : vector<256x128xf32>
    %53 = tpu.matmul %50, %52, %cst_36 {dimension_numbers = #tpu.dot_dimension_numbers<[1], [0], [0], [1], [0, 0, 1, 1], [], []>} : vector<256x4xbf16>, vector<4x128xbf16>, vector<256x128xf32> -> vector<256x128xf32>
    %54 = arith.addf %46, %53 : vector<256x128xf32>
    %c2_i32 = arith.constant 2 : i32
    %55 = arith.addi %1, %c2_i32 : i32
    %c0_37 = arith.constant 0 : index
    %56 = arith.index_cast %55 : i32 to index
    %c0_38 = arith.constant 0 : index
    %c0_39 = arith.constant 0 : index
    %57 = vector.load %arg3[%c0_37, %56, %c0_38, %c0_39] : memref<1x18x18x4xbf16, #tpu.memory_space<vmem>>, vector<1x16x16x4xbf16>
    %58 = vector.shape_cast %57 : vector<1x16x16x4xbf16> to vector<16x16x4xbf16>
    %59 = vector.shape_cast %58 : vector<16x16x4xbf16> to vector<256x4xbf16>
    %c6 = arith.constant 6 : index
    %c0_40 = arith.constant 0 : index
    %c0_41 = arith.constant 0 : index
    %60 = vector.load %arg4[%c6, %c0_40, %c0_41] : memref<9x4x128xbf16, #tpu.memory_space<vmem>>, vector<1x4x128xbf16>
    %61 = vector.shape_cast %60 : vector<1x4x128xbf16> to vector<4x128xbf16>
    %cst_42 = arith.constant dense<0.000000e+00> : vector<256x128xf32>
    %62 = tpu.matmul %59, %61, %cst_42 {dimension_numbers = #tpu.dot_dimension_numbers<[1], [0], [0], [1], [0, 0, 1, 1], [], []>} : vector<256x4xbf16>, vector<4x128xbf16>, vector<256x128xf32> -> vector<256x128xf32>
    %63 = arith.addf %54, %62 : vector<256x128xf32>
    %c0_43 = arith.constant 0 : index
    %64 = arith.index_cast %55 : i32 to index
    %c1_44 = arith.constant 1 : index
    %c0_45 = arith.constant 0 : index
    %65 = vector.load %arg3[%c0_43, %64, %c1_44, %c0_45] : memref<1x18x18x4xbf16, #tpu.memory_space<vmem>>, vector<1x16x16x4xbf16>
    %66 = vector.shape_cast %65 : vector<1x16x16x4xbf16> to vector<16x16x4xbf16>
    %67 = vector.shape_cast %66 : vector<16x16x4xbf16> to vector<256x4xbf16>
    %c7 = arith.constant 7 : index
    %c0_46 = arith.constant 0 : index
    %c0_47 = arith.constant 0 : index
    %68 = vector.load %arg4[%c7, %c0_46, %c0_47] : memref<9x4x128xbf16, #tpu.memory_space<vmem>>, vector<1x4x128xbf16>
    %69 = vector.shape_cast %68 : vector<1x4x128xbf16> to vector<4x128xbf16>
    %cst_48 = arith.constant dense<0.000000e+00> : vector<256x128xf32>
    %70 = tpu.matmul %67, %69, %cst_48 {dimension_numbers = #tpu.dot_dimension_numbers<[1], [0], [0], [1], [0, 0, 1, 1], [], []>} : vector<256x4xbf16>, vector<4x128xbf16>, vector<256x128xf32> -> vector<256x128xf32>
    %71 = arith.addf %63, %70 : vector<256x128xf32>
    %c0_49 = arith.constant 0 : index
    %72 = arith.index_cast %55 : i32 to index
    %c2_50 = arith.constant 2 : index
    %c0_51 = arith.constant 0 : index
    %73 = vector.load %arg3[%c0_49, %72, %c2_50, %c0_51] : memref<1x18x18x4xbf16, #tpu.memory_space<vmem>>, vector<1x16x16x4xbf16>
    %74 = vector.shape_cast %73 : vector<1x16x16x4xbf16> to vector<16x16x4xbf16>
    %75 = vector.shape_cast %74 : vector<16x16x4xbf16> to vector<256x4xbf16>
    %c8 = arith.constant 8 : index
    %c0_52 = arith.constant 0 : index
    %c0_53 = arith.constant 0 : index
    %76 = vector.load %arg4[%c8, %c0_52, %c0_53] : memref<9x4x128xbf16, #tpu.memory_space<vmem>>, vector<1x4x128xbf16>
    %77 = vector.shape_cast %76 : vector<1x4x128xbf16> to vector<4x128xbf16>
    %cst_54 = arith.constant dense<0.000000e+00> : vector<256x128xf32>
    %78 = tpu.matmul %75, %77, %cst_54 {dimension_numbers = #tpu.dot_dimension_numbers<[1], [0], [0], [1], [0, 0, 1, 1], [], []>} : vector<256x4xbf16>, vector<4x128xbf16>, vector<256x128xf32> -> vector<256x128xf32>
    %79 = arith.addf %71, %78 : vector<256x128xf32>
    %c0_55 = arith.constant 0 : index
    %c0_56 = arith.constant 0 : index
    %c0_57 = arith.constant 0 : index
    %80 = vector.load %arg6[%c0_55, %c0_56, %c0_57] : memref<1x256x128xf32, #tpu.memory_space<vmem>>, vector<1x256x128xf32>
    %81 = vector.shape_cast %80 : vector<1x256x128xf32> to vector<256x128xf32>
    %82 = vector.shape_cast %79 : vector<256x128xf32> to vector<1x256x128xf32>
    tpu.vector_store %arg6[%c0_55, %c0_56, %c0_57], %82 {strides = array<i32>} : memref<1x256x128xf32, #tpu.memory_space<vmem>>, vector<1x256x128xf32>,
    return
  }
  func.func @transform_0(%arg0: i32, %arg1: i32, %arg2: i32) -> (i32, i32, i32, i32) {
    %c0_i32 = arith.constant 0 : i32
    %c0_i32_0 = arith.constant 0 : i32
    %c0_i32_1 = arith.constant 0 : i32
    %c0_i32_2 = arith.constant 0 : i32
    return %arg0, %c0_i32, %c0_i32_0, %c0_i32_1 : i32, i32, i32, i32
  }
  func.func @transform_1(%arg0: i32, %arg1: i32, %arg2: i32) -> (i32, i32, i32) {
    %c0_i32 = arith.constant 0 : i32
    %c0_i32_0 = arith.constant 0 : i32
    %c0_i32_1 = arith.constant 0 : i32
    return %c0_i32, %c0_i32_0, %arg1 : i32, i32, i32
  }
  func.func @transform_2(%arg0: i32, %arg1: i32, %arg2: i32) -> (i32, i32) {
    %c0_i32 = arith.constant 0 : i32
    %c0_i32_0 = arith.constant 0 : i32
    return %c0_i32, %arg1 : i32, i32
  }
  func.func @transform_3(%arg0: i32, %arg1: i32, %arg2: i32) -> (i32, i32, i32) {
    %c0_i32 = arith.constant 0 : i32
    return %arg0, %arg2, %arg1 : i32, i32, i32
  }
}

</mosaic_0001>

<llo_original>
// kernel: _forward_impl.1
$region0: #{_forward_impl.1}
  #allocation0 [shape = 'u32[]', space=smem, size = 0x4, offset = 0x4, fixed_abs, tag = 'smem constant byte address 0x4 - core index']
  #allocation1 [shape = 'u32[72,128]{1,0:T(1,128)}', space=vmem, size = 0x9000, scoped, tag = 'internal scratch']
  %s0 = inlined_call_operand.vmem [shape: bf16[2,18,18,4], index: 0, kind: input, shape index: {}]
  %s1 = inlined_call_operand.vmem [shape: bf16[9,4,128], index: 1, kind: input, shape index: {}]
  %s2 = inlined_call_operand.vmem [shape: f32[1,128], index: 2, kind: input, shape index: {}]
  %s3 = inlined_call_operand.vmem [shape: f32[2,256,128], index: 3, kind: output, shape index: {}]
  %s4 = sld [smem:[#allocation0]]
  $region45: #{_forward_impl.1} parent=0
    _
  %s6 = ssub.s32 1, %s4
  %s7 = scalar_select 0, %s6, %s4
  loop: start=0, step=1, limit=4
  $region2: #{_forward_impl.1} parent=0 // loop_pre_header
    _
  $region3: #{_forward_impl.1} parent=0 // loop_header
    %s9 = sphi 0, %s13
    %p10 = scmp.ge.s32.totalorder %s9, 4
    %s16 = sphi 0, %s35
    %s17 = sphi 0, %s31
    %s18 = sphi 0, %s27
    %s19 = sphi 0, %s16
    %s20 = sphi 0, %s17
    %s21 = sphi 0, %s18
    %s22 = sphi 0, %s19
    %s23 = sphi 0, %s20
    %s24 = sphi 0, %s21
    %s38 = sphi 0, %s40
    %s41 = sphi 0, %s38
    %s42 = sphi 0, %s41
    %s58 = sphi 0, %s42
    %s64 = sphi 0, %s66
    %s67 = sphi 0, %s64
    %s68 = sphi 0, %s67
    %s84 = sphi 0, %s68
    %s90 = sphi 0, %s92
    %s93 = sphi 0, %s90
    %s94 = sphi 0, %s93
    %s110 = sphi 0, %s94
    %s120 = sphi 0, %s122
    %s123 = sphi 0, %s120
    %s124 = sphi 0, %s123
    %s140 = sphi 0, %s124
  $region4: #{_forward_impl.1} parent=0 // loop_header_branch
    %12 = sbr.rel (%p10) target = $region8
  $region5: #{_forward_impl.1} parent=0 // loop_body
    %s14 = ssub.s32 %s9, 1
    %s15 = ssub.s32 %s9, 2
    %s25 = sadd.s32 1, %s18
    %p26 = scmp.ge.s32.totalorder %s25, 1
    %s27 = scalar_select %p26, 0, %s25
    %s28 = sadd.s32 1, %s17
    %s29 = scalar_select %p26, %s28, %s17
    %p30 = scmp.ge.s32.totalorder %s29, 1
    %s31 = scalar_select %p30, 0, %s29
    %s32 = sadd.s32 1, %s16
    %s33 = scalar_select %p30, %s32, %s16
    %p34 = scmp.ge.s32.totalorder %s33, 2
    %s35 = scalar_select %p34, 0, %s33
    %s36 = ssub.s32 %s16, %s35
    %p37 = scmp.eq.s32.totalorder %s36, 0
    %s39 = sadd.s32 %s38, 1
    %s40 = scalar_select %p37, %s38, %s39
    %p43 = pneg %p37
    %p44 = scmp.eq.s32.totalorder %s9, 1
    %p45 = por %p43, %p44
    %p46 = scmp.ne.s32.totalorder %s38, %s41
    %p47 = scmp.eq.s32.totalorder %s9, 0
    %p48 = por %p46, %p47
    %p49 = scmp.ne.s32.totalorder %s38, %s41
    %p50 = scmp.eq.s32.totalorder %s14, 1
    %p51 = por %p49, %p50
    %p52 = scmp.ne.s32.totalorder %s41, %s42
    %p53 = scmp.eq.s32.totalorder %s14, 0
    %p54 = por %p52, %p53
    %p55 = scmp.ne.s32.totalorder %s41, %s42
    %p56 = scmp.eq.s32.totalorder %s15, 1
    %p57 = por %p55, %p56
    %p59 = scmp.ne.s32.totalorder %s42, %s58
    %p60 = scmp.eq.s32.totalorder %s15, 0
    %p61 = por %p59, %p60
    %s62 = ssub.s32 %s17, %s31
    %p63 = scmp.eq.s32.totalorder %s62, 0
    %s65 = sadd.s32 %s64, 1
    %s66 = scalar_select %p63, %s64, %s65
    %p69 = pneg %p63
    %p70 = scmp.eq.s32.totalorder %s9, 1
    %p71 = por %p69, %p70
    %p72 = scmp.ne.s32.totalorder %s64, %s67
    %p73 = scmp.eq.s32.totalorder %s9, 0
    %p74 = por %p72, %p73
    %p75 = scmp.ne.s32.totalorder %s64, %s67
    %p76 = scmp.eq.s32.totalorder %s14, 1
    %p77 = por %p75, %p76
    %p78 = scmp.ne.s32.totalorder %s67, %s68
    %p79 = scmp.eq.s32.totalorder %s14, 0
    %p80 = por %p78, %p79
    %p81 = scmp.ne.s32.totalorder %s67, %s68
    %p82 = scmp.eq.s32.totalorder %s15, 1
    %p83 = por %p81, %p82
    %p85 = scmp.ne.s32.totalorder %s68, %s84
    %p86 = scmp.eq.s32.totalorder %s15, 0
    %p87 = por %p85, %p86
    %s88 = ssub.s32 %s17, %s31
    %p89 = scmp.eq.s32.totalorder %s88, 0
    %s91 = sadd.s32 %s90, 1
    %s92 = scalar_select %p89, %s90, %s91
    %p95 = pneg %p89
    %p96 = scmp.eq.s32.totalorder %s9, 1
    %p97 = por %p95, %p96
    %p98 = scmp.ne.s32.totalorder %s90, %s93
    %p99 = scmp.eq.s32.totalorder %s9, 0
    %p100 = por %p98, %p99
    %p101 = scmp.ne.s32.totalorder %s90, %s93
    %p102 = scmp.eq.s32.totalorder %s14, 1
    %p103 = por %p101, %p102
    %p104 = scmp.ne.s32.totalorder %s93, %s94
    %p105 = scmp.eq.s32.totalorder %s14, 0
    %p106 = por %p104, %p105
    %p107 = scmp.ne.s32.totalorder %s93, %s94
    %p108 = scmp.eq.s32.totalorder %s15, 1
    %p109 = por %p107, %p108
    %p111 = scmp.ne.s32.totalorder %s94, %s110
    %p112 = scmp.eq.s32.totalorder %s15, 0
    %p113 = por %p111, %p112
    %s114 = ssub.s32 %s16, %s35
    %s115 = ssub.s32 %s18, %s27
    %s116 = sor.u32 %s114, %s115
    %s117 = ssub.s32 %s17, %s31
    %s118 = sor.u32 %s116, %s117
    %p119 = scmp.eq.s32.totalorder %s118, 0
    %s121 = sadd.s32 %s120, 1
    %s122 = scalar_select %p119, %s120, %s121
    %p125 = pneg %p119
    %p126 = scmp.eq.s32.totalorder %s9, 1
    %p127 = por %p125, %p126
    %p128 = scmp.ne.s32.totalorder %s120, %s123
    %p129 = scmp.eq.s32.totalorder %s9, 0
    %p130 = por %p128, %p129
    %p131 = scmp.ne.s32.totalorder %s120, %s123
    %p132 = scmp.eq.s32.totalorder %s14, 1
    %p133 = por %p131, %p132
    %p134 = scmp.ne.s32.totalorder %s123, %s124
    %p135 = scmp.eq.s32.totalorder %s14, 0
    %p136 = por %p134, %p135
    %p137 = scmp.ne.s32.totalorder %s123, %s124
    %p138 = scmp.eq.s32.totalorder %s15, 1
    %p139 = por %p137, %p138
    %p141 = scmp.ne.s32.totalorder %s124, %s140
    %p142 = scmp.eq.s32.totalorder %s15, 0
    %p143 = por %p141, %p142
    %p144 = scmp.le.s32.totalorder 1, %s9
    %p145 = scmp.lt.s32.totalorder %s9, 3
    %p146 = pnand %p144, %p145
    %p147 = pneg %p146
    // Predicated region
    $region9: #{_forward_impl.1} parent=5 // pred_check
      _
    $region10: #{_forward_impl.1} parent=5 // pred_check_branch
      %149 = sbr.rel (%p146) target = $region12
    $region11: #{_forward_impl.1} parent=5 // pred_region
      %s150 = ssub.s32 %s9, 1
      // Predicated region
      $region13: #{_forward_impl.1} parent=11 // pred_check
        %p151 = pneg %p80
      $region14: #{_forward_impl.1} parent=11 // pred_check_branch
        %153 = sbr.rel (%p151) target = $region16
      $region15: #{_forward_impl.1} parent=11 // pred_region
        %p154 = scmp.lt.s32.totalorder %s20, 0
        %s155 = scalar_select %p154, %s20, 0
        %s156 = smul.addr %s155, 2
        %s157 = scalar_lea.vmem %s1, %s156
      $region16: #{_forward_impl.1} parent=11 // pred_fallthru
        _
      // Predicated region
      $region17: #{_forward_impl.1} parent=11 // pred_check
        %p158 = pneg %p106
      $region18: #{_forward_impl.1} parent=11 // pred_check_branch
        %160 = sbr.rel (%p158) target = $region20
      $region19: #{_forward_impl.1} parent=11 // pred_region
        %p161 = scmp.lt.s32.totalorder %s20, 0
        %s162 = scalar_select %p161, %s20, 0
        %s163 = scalar_lea.vmem %s2, %s162
      $region20: #{_forward_impl.1} parent=11 // pred_fallthru
        _
    $region12: #{_forward_impl.1} parent=5 // pred_fallthru
      _
    %p164 = scmp.lt.s32.totalorder %s9, 2
    // Predicated region
    $region21: #{_forward_impl.1} parent=5 // pred_check
      %p165 = pneg %p164
    $region22: #{_forward_impl.1} parent=5 // pred_check_branch
      %167 = sbr.rel (%p165) target = $region24
    $region23: #{_forward_impl.1} parent=5 // pred_region
      // Predicated region
      $region25: #{_forward_impl.1} parent=23 // pred_check
        %p168 = pneg %p48
      $region26: #{_forward_impl.1} parent=23 // pred_check_branch
        %170 = sbr.rel (%p168) target = $region28
      $region27: #{_forward_impl.1} parent=23 // pred_region
        %p171 = scmp.lt.s32.totalorder %s16, 1
        %s172 = scalar_select %p171, %s16, 1
        %s173 = smul.addr %s172, 54
        %s174 = smul.addr %s173, 4
        %s175 = scalar_lea.vmem %s0, %s174
      $region28: #{_forward_impl.1} parent=23 // pred_fallthru
        _
    $region24: #{_forward_impl.1} parent=5 // pred_fallthru
      _
    %p176 = scmp.le.s32.totalorder 1, %s9
    %p177 = scmp.lt.s32.totalorder %s9, 3
    %p178 = pnand %p176, %p177
    %p179 = pneg %p178
    // Predicated region
    $region29: #{_forward_impl.1} parent=5 // pred_check
      _
    $region30: #{_forward_impl.1} parent=5 // pred_check_branch
      %181 = sbr.rel (%p178) target = $region32
    $region31: #{_forward_impl.1} parent=5 // pred_region
      %s182 = ssub.s32 %s9, 1
      %p183 = scmp.lt.s32.totalorder %s19, 1
      %s184 = scalar_select %p183, %s19, 1
      %s185 = smul.addr %s184, 54
      %s186 = smul.addr %s185, 4
      %s187 = scalar_lea.vmem %s0, %s186
      %p188 = pneg %p54
      %p189 = pneg %p51
      %p190 = scmp.lt.s32.totalorder %s20, 0
      %s191 = scalar_select %p190, %s20, 0
      %s192 = smul.addr %s191, 2
      %s193 = scalar_lea.vmem %s1, %s192
      %p194 = pneg %p80
      %p195 = pneg %p77
      %p196 = scmp.lt.s32.totalorder %s20, 0
      %s197 = scalar_select %p196, %s20, 0
      %s198 = scalar_lea.vmem %s2, %s197
      %p199 = pneg %p106
      %p200 = pneg %p103
      %p201 = pneg %p136
      %p202 = pneg %p133
      %s203 = smul.u32 32, %s21
      %p204 = scmp.lt.s32.totalorder %s19, 1
      %s205 = scalar_select %p204, %s19, 1
      %p206 = scmp.lt.s32.totalorder %s203, 31
      %s207 = scalar_select %p206, %s203, 31
      %p208 = scmp.lt.s32.totalorder %s20, 0
      %s209 = scalar_select %p208, %s20, 0
      %s210 = sadd.s32 %s209, %s207
      %s211 = smul.addr %s205, 32
      %s212 = sadd.s32 %s210, %s211
      %s213 = smul.addr %s212, 8
      %s214 = scalar_lea.vmem %s3, %s213
      %p215 = scmp.lt.s32.totalorder %s19, 1
      %s216 = scalar_select %p215, %s19, 1
      %s217 = smul.addr %s216, 54
      %s218 = smul.addr %s217, 4
      %s219 = scalar_lea.vmem %s0, %s218
      %p220 = scmp.lt.s32.totalorder %s20, 0
      %s221 = scalar_select %p220, %s20, 0
      %s222 = smul.addr %s221, 2
      %s223 = scalar_lea.vmem %s1, %s222
      %p224 = scmp.lt.s32.totalorder %s20, 0
      %s225 = scalar_select %p224, %s20, 0
      %s226 = scalar_lea.vmem %s2, %s225
      %s227 = smul.u32 32, %s21
      %p228 = scmp.lt.s32.totalorder %s19, 1
      %s229 = scalar_select %p228, %s19, 1
      %p230 = scmp.lt.s32.totalorder %s227, 31
      %s231 = scalar_select %p230, %s227, 31
      %p232 = scmp.lt.s32.totalorder %s20, 0
      %s233 = scalar_select %p232, %s20, 0
      %s234 = sadd.s32 %s233, %s231
      %s235 = smul.addr %s229, 32
      %s236 = sadd.s32 %s234, %s235
      %s237 = smul.addr %s236, 8
      %s238 = scalar_lea.vmem %s3, %s237
      %s239 = smul.u32 32, %s21
      %s241 = smul.u32 %s21, 16
      %v242 = vld [vmem:[%s226] sm:$0x1]
      %v244 = vperm.slane %v242, 0
      %s246 = smul.u32 %s241, 3
      %s247 = smul.addr %s246, 4
      %s248 = scalar_lea.vmem %s219, %s247
      %v249 = vld [vmem:[%s248] sm:$0xf]
      %v250 = vld [vmem:[%s248 + $0x4] sm:$0xf]
      %v251 = vld [vmem:[%s248 + $0xc] sm:$0xf]
      %v252 = vld [vmem:[%s248 + $0x10] sm:$0xf]
      %v253 = vld [vmem:[%s248 + $0x18] sm:$0xf]
      %v254 = vld [vmem:[%s248 + $0x1c] sm:$0xf]
      %v255 = vld [vmem:[%s248 + $0x24] sm:$0xf]
      %v256 = vld [vmem:[%s248 + $0x28] sm:$0xf]
      %v257 = vld [vmem:[%s248 + $0x30] sm:$0xf]
      %v258 = vld [vmem:[%s248 + $0x34] sm:$0xf]
      %v259 = vld [vmem:[%s248 + $0x3c] sm:$0xf]
      %v260 = vld [vmem:[%s248 + $0x40] sm:$0xf]
      %v261 = vld [vmem:[%s248 + $0x48] sm:$0xf]
      %v262 = vld [vmem:[%s248 + $0x4c] sm:$0xf]
      %v263 = vld [vmem:[%s248 + $0x54] sm:$0xf]
      %v264 = vld [vmem:[%s248 + $0x58] sm:$0xf]
      %v265 = vld [vmem:[%s248 + $0x60] sm:$0xf]
      %v266 = vld [vmem:[%s248 + $0x64] sm:$0xf]
      %v267 = vld [vmem:[%s248 + $0x6c] sm:$0xf]
      %v268 = vld [vmem:[%s248 + $0x70] sm:$0xf]
      %v269 = vld [vmem:[%s248 + $0x78] sm:$0xf]
      %v270 = vld [vmem:[%s248 + $0x7c] sm:$0xf]
      %v271 = vld [vmem:[%s248 + $0x84] sm:$0xf]
      %v272 = vld [vmem:[%s248 + $0x88] sm:$0xf]
      %v273 = vld [vmem:[%s248 + $0x90] sm:$0xf]
      %v274 = vld [vmem:[%s248 + $0x94] sm:$0xf]
      %v275 = vld [vmem:[%s248 + $0x9c] sm:$0xf]
      %v276 = vld [vmem:[%s248 + $0xa0] sm:$0xf]
      %v277 = vld [vmem:[%s248 + $0xa8] sm:$0xf]
      %v278 = vld [vmem:[%s248 + $0xac] sm:$0xf]
      %v279 = vld [vmem:[%s248 + $0xb4] sm:$0xf]
      %v280 = vld [vmem:[%s248 + $0xb8] sm:$0xf]
      %v281 = vld [vmem:[%s223] sm:$0x3]
      %v314 = vunpack.c.l.b16 %v249
      %v315 = vunpack.c.l.b16 %v250
      %v316 = vunpack.c.l.b16 %v251
      %v317 = vunpack.c.l.b16 %v252
      %v318 = vunpack.c.l.b16 %v253
      %v319 = vunpack.c.l.b16 %v254
      %v320 = vunpack.c.l.b16 %v255
      %v321 = vunpack.c.l.b16 %v256
      %v322 = vunpack.c.l.b16 %v257
      %v323 = vunpack.c.l.b16 %v258
      %v324 = vunpack.c.l.b16 %v259
      %v325 = vunpack.c.l.b16 %v260
      %v326 = vunpack.c.l.b16 %v261
      %v327 = vunpack.c.l.b16 %v262
      %v328 = vunpack.c.l.b16 %v263
      %v329 = vunpack.c.l.b16 %v264
      %v330 = vunpack.c.l.b16 %v265
      %v331 = vunpack.c.l.b16 %v266
      %v332 = vunpack.c.l.b16 %v267
      %v333 = vunpack.c.l.b16 %v268
      %v334 = vunpack.c.l.b16 %v269
      %v335 = vunpack.c.l.b16 %v270
      %v336 = vunpack.c.l.b16 %v271
      %v337 = vunpack.c.l.b16 %v272
      %v338 = vunpack.c.l.b16 %v273
      %v339 = vunpack.c.l.b16 %v274
      %v340 = vunpack.c.l.b16 %v275
      %v341 = vunpack.c.l.b16 %v276
      %v342 = vunpack.c.l.b16 %v277
      %v343 = vunpack.c.l.b16 %v278
      %v344 = vunpack.c.l.b16 %v279
      %v345 = vunpack.c.l.b16 %v280
      %v346 = vpack.c.b16 %v315, %v314
      %v347 = vpack.c.b16 %v317, %v316
      %v348 = vpack.c.b16 %v319, %v318
      %v349 = vpack.c.b16 %v321, %v320
      %v350 = vpack.c.b16 %v323, %v322
      %v351 = vpack.c.b16 %v325, %v324
      %v352 = vpack.c.b16 %v327, %v326
      %v353 = vpack.c.b16 %v329, %v328
      %v354 = vpack.c.b16 %v331, %v330
      %v355 = vpack.c.b16 %v333, %v332
      %v356 = vpack.c.b16 %v335, %v334
      %v357 = vpack.c.b16 %v337, %v336
      %v358 = vpack.c.b16 %v339, %v338
      %v359 = vpack.c.b16 %v341, %v340
      %v360 = vpack.c.b16 %v343, %v342
      %v361 = vpack.c.b16 %v345, %v344
      %vm362 = vcmask 31744
      %v364 = vsel %vm362, %v346, 0
      %v367 = vsel %vm362, %v347, 0
      %v370 = vsel %vm362, %v348, 0
      %v373 = vsel %vm362, %v349, 0
      %v376 = vsel %vm362, %v350, 0
      %v379 = vsel %vm362, %v351, 0
      %v382 = vsel %vm362, %v352, 0
      %v385 = vsel %vm362, %v353, 0
      %v388 = vsel %vm362, %v354, 0
      %v391 = vsel %vm362, %v355, 0
      %v394 = vsel %vm362, %v356, 0
      %v397 = vsel %vm362, %v357, 0
      %v400 = vsel %vm362, %v358, 0
      %v403 = vsel %vm362, %v359, 0
      %v406 = vsel %vm362, %v360, 0
      %v409 = vsel %vm362, %v361, 0
      %vm411 = vcmask 1041408
      %v413 = vsel %vm411, %v281, 0
      %415 = vmatpush.bf16.msra.mxu0 0
      %416 = vmatpush.bf16.msra.mxu0 0
      %417 = vmatpush.bf16.msra.mxu0 0
      %418 = vmatpush.bf16.msra.mxu0 0
      %419 = vmatpush.bf16.msra.mxu0 0
      %420 = vmatpush.bf16.msra.mxu0 0
      %421 = vmatpush.bf16.msra.mxu0 0
      %422 = vmatpush.bf16.msra.mxu0 %v413
      %423 = vmatmul.bf16.gmra.mxu0 %v364
      %v424 = vpop.f32.mrf.mxu0
      %v425 = vadd.f32 0.0, %v424
      %v426 = vpop.f32.mrf.mxu0
      %v427 = vadd.f32 0.0, %v426
      %428 = vmatmul.bf16.gmra.mxu0 %v367
      %v429 = vpop.f32.mrf.mxu0
      %v430 = vadd.f32 0.0, %v429
      %v431 = vpop.f32.mrf.mxu0
      %v432 = vadd.f32 0.0, %v431
      %433 = vmatmul.bf16.gmra.mxu0 %v370
      %v434 = vpop.f32.mrf.mxu0
      %v435 = vadd.f32 0.0, %v434
      %v436 = vpop.f32.mrf.mxu0
      %v437 = vadd.f32 0.0, %v436
      %438 = vmatmul.bf16.gmra.mxu0 %v373
      %v439 = vpop.f32.mrf.mxu0
      %v440 = vadd.f32 0.0, %v439
      %v441 = vpop.f32.mrf.mxu0
      %v442 = vadd.f32 0.0, %v441
      %443 = vmatmul.bf16.gmra.mxu0 %v376
      %v444 = vpop.f32.mrf.mxu0
      %v445 = vadd.f32 0.0, %v444
      %v446 = vpop.f32.mrf.mxu0
      %v447 = vadd.f32 0.0, %v446
      %448 = vmatmul.bf16.gmra.mxu0 %v379
      %v449 = vpop.f32.mrf.mxu0
      %v450 = vadd.f32 0.0, %v449
      %v451 = vpop.f32.mrf.mxu0
      %v452 = vadd.f32 0.0, %v451
      %453 = vmatmul.bf16.gmra.mxu0 %v382
      %v454 = vpop.f32.mrf.mxu0
      %v455 = vadd.f32 0.0, %v454
      %v456 = vpop.f32.mrf.mxu0
      %v457 = vadd.f32 0.0, %v456
      %458 = vmatmul.bf16.gmra.mxu0 %v385
      %v459 = vpop.f32.mrf.mxu0
      %v460 = vadd.f32 0.0, %v459
      %v461 = vpop.f32.mrf.mxu0
      %v462 = vadd.f32 0.0, %v461
      %463 = vmatmul.bf16.gmra.mxu0 %v388
      %v464 = vpop.f32.mrf.mxu0
      %v465 = vadd.f32 0.0, %v464
      %v466 = vpop.f32.mrf.mxu0
      %v467 = vadd.f32 0.0, %v466
      %468 = vmatmul.bf16.gmra.mxu0 %v391
      %v469 = vpop.f32.mrf.mxu0
      %v470 = vadd.f32 0.0, %v469
      %v471 = vpop.f32.mrf.mxu0
      %v472 = vadd.f32 0.0, %v471
      %473 = vmatmul.bf16.gmra.mxu0 %v394
      %v474 = vpop.f32.mrf.mxu0
      %v475 = vadd.f32 0.0, %v474
      %v476 = vpop.f32.mrf.mxu0
      %v477 = vadd.f32 0.0, %v476
      %478 = vmatmul.bf16.gmra.mxu0 %v397
      %v479 = vpop.f32.mrf.mxu0
      %v480 = vadd.f32 0.0, %v479
      %v481 = vpop.f32.mrf.mxu0
      %v482 = vadd.f32 0.0, %v481
      %483 = vmatmul.bf16.gmra.mxu0 %v400
      %v484 = vpop.f32.mrf.mxu0
      %v485 = vadd.f32 0.0, %v484
      %v486 = vpop.f32.mrf.mxu0
      %v487 = vadd.f32 0.0, %v486
      %488 = vmatmul.bf16.gmra.mxu0 %v403
      %v489 = vpop.f32.mrf.mxu0
      %v490 = vadd.f32 0.0, %v489
      %v491 = vpop.f32.mrf.mxu0
      %v492 = vadd.f32 0.0, %v491
      %493 = vmatmul.bf16.gmra.mxu0 %v406
      %v494 = vpop.f32.mrf.mxu0
      %v495 = vadd.f32 0.0, %v494
      %v496 = vpop.f32.mrf.mxu0
      %v497 = vadd.f32 0.0, %v496
      %498 = vmatmul.bf16.gmra.mxu0 %v409
      %v499 = vpop.f32.mrf.mxu0
      %v500 = vadd.f32 0.0, %v499
      %v501 = vpop.f32.mrf.mxu0
      %v502 = vadd.f32 0.0, %v501
      %503 = vdwg.mxu0
      %v504 = vadd.f32 %v244, %v425
      %v505 = vadd.f32 %v244, %v427
      %v506 = vadd.f32 %v244, %v430
      %v507 = vadd.f32 %v244, %v432
      %v508 = vadd.f32 %v244, %v435
      %v509 = vadd.f32 %v244, %v437
      %v510 = vadd.f32 %v244, %v440
      %v511 = vadd.f32 %v244, %v442
      %v512 = vadd.f32 %v244, %v445
      %v513 = vadd.f32 %v244, %v447
      %v514 = vadd.f32 %v244, %v450
      %v515 = vadd.f32 %v244, %v452
      %v516 = vadd.f32 %v244, %v455
      %v517 = vadd.f32 %v244, %v457
      %v518 = vadd.f32 %v244, %v460
      %v519 = vadd.f32 %v244, %v462
      %v520 = vadd.f32 %v244, %v465
      %v521 = vadd.f32 %v244, %v467
      %v522 = vadd.f32 %v244, %v470
      %v523 = vadd.f32 %v244, %v472
      %v524 = vadd.f32 %v244, %v475
      %v525 = vadd.f32 %v244, %v477
      %v526 = vadd.f32 %v244, %v480
      %v527 = vadd.f32 %v244, %v482
      %v528 = vadd.f32 %v244, %v485
      %v529 = vadd.f32 %v244, %v487
      %v530 = vadd.f32 %v244, %v490
      %v531 = vadd.f32 %v244, %v492
      %v532 = vadd.f32 %v244, %v495
      %v533 = vadd.f32 %v244, %v497
      %v534 = vadd.f32 %v244, %v500
      %v535 = vadd.f32 %v244, %v502
      %v536 = vld [vmem:[%s248] sm:$0xf]
      %v537 = vld [vmem:[%s248 + $0x4] sm:$0xf]
      %v538 = vld [vmem:[%s248 + $0x8] sm:$0x1]
      %v539 = vld [vmem:[%s248 + $0xc] sm:$0xf]
      %v540 = vld [vmem:[%s248 + $0x10] sm:$0xf]
      %v541 = vld [vmem:[%s248 + $0x14] sm:$0x1]
      %v542 = vld [vmem:[%s248 + $0x18] sm:$0xf]
      %v543 = vld [vmem:[%s248 + $0x1c] sm:$0xf]
      %v544 = vld [vmem:[%s248 + $0x20] sm:$0x1]
      %v545 = vld [vmem:[%s248 + $0x24] sm:$0xf]
      %v546 = vld [vmem:[%s248 + $0x28] sm:$0xf]
      %v547 = vld [vmem:[%s248 + $0x2c] sm:$0x1]
      %v548 = vld [vmem:[%s248 + $0x30] sm:$0xf]
      %v549 = vld [vmem:[%s248 + $0x34] sm:$0xf]
      %v550 = vld [vmem:[%s248 + $0x38] sm:$0x1]
      %v551 = vld [vmem:[%s248 + $0x3c] sm:$0xf]
      %v552 = vld [vmem:[%s248 + $0x40] sm:$0xf]
      %v553 = vld [vmem:[%s248 + $0x44] sm:$0x1]
      %v554 = vld [vmem:[%s248 + $0x48] sm:$0xf]
      %v555 = vld [vmem:[%s248 + $0x4c] sm:$0xf]
      %v556 = vld [vmem:[%s248 + $0x50] sm:$0x1]
      %v557 = vld [vmem:[%s248 + $0x54] sm:$0xf]
      %v558 = vld [vmem:[%s248 + $0x58] sm:$0xf]
      %v559 = vld [vmem:[%s248 + $0x5c] sm:$0x1]
      %v560 = vld [vmem:[%s248 + $0x60] sm:$0xf]
      %v561 = vld [vmem:[%s248 + $0x64] sm:$0xf]
      %v562 = vld [vmem:[%s248 + $0x68] sm:$0x1]
      %v563 = vld [vmem:[%s248 + $0x6c] sm:$0xf]
      %v564 = vld [vmem:[%s248 + $0x70] sm:$0xf]
      %v565 = vld [vmem:[%s248 + $0x74] sm:$0x1]
      %v566 = vld [vmem:[%s248 + $0x78] sm:$0xf]
      %v567 = vld [vmem:[%s248 + $0x7c] sm:$0xf]
      %v568 = vld [vmem:[%s248 + $0x80] sm:$0x1]
      %v569 = vld [vmem:[%s248 + $0x84] sm:$0xf]
      %v570 = vld [vmem:[%s248 + $0x88] sm:$0xf]
      %v571 = vld [vmem:[%s248 + $0x8c] sm:$0x1]
      %v572 = vld [vmem:[%s248 + $0x90] sm:$0xf]
      %v573 = vld [vmem:[%s248 + $0x94] sm:$0xf]
      %v574 = vld [vmem:[%s248 + $0x98] sm:$0x1]
      %v575 = vld [vmem:[%s248 + $0x9c] sm:$0xf]
      %v576 = vld [vmem:[%s248 + $0xa0] sm:$0xf]
      %v577 = vld [vmem:[%s248 + $0xa4] sm:$0x1]
      %v578 = vld [vmem:[%s248 + $0xa8] sm:$0xf]
      %v579 = vld [vmem:[%s248 + $0xac] sm:$0xf]
      %v580 = vld [vmem:[%s248 + $0xb0] sm:$0x1]
      %v581 = vld [vmem:[%s248 + $0xb4] sm:$0xf]
      %v582 = vld [vmem:[%s248 + $0xb8] sm:$0xf]
      %v583 = vld [vmem:[%s248 + $0xbc] sm:$0x1]
      %vm584 = vsmask.f32 3328
      %vm585 = vsmask.f32 7440
      %vm586 = vmor %vm584, %vm585
      %v588 = vshrl.u32 %v536, 16
      %v590 = vrot.slane %v588, 4
      %v591 = vshll.u32 %v536, 16
      %v593 = vrot.slane %v591, 5
      %v594 = vor.u32 %v590, %v593
      %v595 = vrot.slane %v594, 4
      %v597 = vshll.u32 %v537, 16
      %v599 = vrot.slane %v597, 5
      %v600 = vsel %vm586, %v595, %v599
      %v601 = vshrl.u32 %v537, 16
      %v603 = vrot.slane %v601, 4
      %v604 = vor.u32 %v603, %v599
      %v605 = vrot.slane %v604, 4
      %v607 = vshll.u32 %v538, 16
      %v609 = vrot.slane %v607, 5
      %v610 = vsel %vm586, %v605, %v609
      %v612 = vshrl.u32 %v539, 16
      %v614 = vrot.slane %v612, 4
      %v615 = vshll.u32 %v539, 16
      %v617 = vrot.slane %v615, 5
      %v618 = vor.u32 %v614, %v617
      %v619 = vrot.slane %v618, 4
      %v621 = vshll.u32 %v540, 16
      %v623 = vrot.slane %v621, 5
      %v624 = vsel %vm586, %v619, %v623
      %v625 = vshrl.u32 %v540, 16
      %v627 = vrot.slane %v625, 4
      %v628 = vor.u32 %v627, %v623
      %v629 = vrot.slane %v628, 4
      %v631 = vshll.u32 %v541, 16
      %v633 = vrot.slane %v631, 5
      %v634 = vsel %vm586, %v629, %v633
      %v636 = vshrl.u32 %v542, 16
      %v638 = vrot.slane %v636, 4
      %v639 = vshll.u32 %v542, 16
      %v641 = vrot.slane %v639, 5
      %v642 = vor.u32 %v638, %v641
      %v643 = vrot.slane %v642, 4
      %v645 = vshll.u32 %v543, 16
      %v647 = vrot.slane %v645, 5
      %v648 = vsel %vm586, %v643, %v647
      %v649 = vshrl.u32 %v543, 16
      %v651 = vrot.slane %v649, 4
      %v652 = vor.u32 %v651, %v647
      %v653 = vrot.slane %v652, 4
      %v655 = vshll.u32 %v544, 16
      %v657 = vrot.slane %v655, 5
      %v658 = vsel %vm586, %v653, %v657
      %v660 = vshrl.u32 %v545, 16
      %v662 = vrot.slane %v660, 4
      %v663 = vshll.u32 %v545, 16
      %v665 = vrot.slane %v663, 5
      %v666 = vor.u32 %v662, %v665
      %v667 = vrot.slane %v666, 4
      %v669 = vshll.u32 %v546, 16
      %v671 = vrot.slane %v669, 5
      %v672 = vsel %vm586, %v667, %v671
      %v673 = vshrl.u32 %v546, 16
      %v675 = vrot.slane %v673, 4
      %v676 = vor.u32 %v675, %v671
      %v677 = vrot.slane %v676, 4
      %v679 = vshll.u32 %v547, 16
      %v681 = vrot.slane %v679, 5
      %v682 = vsel %vm586, %v677, %v681
      %v684 = vshrl.u32 %v548, 16
      %v686 = vrot.slane %v684, 4
      %v687 = vshll.u32 %v548, 16
      %v689 = vrot.slane %v687, 5
      %v690 = vor.u32 %v686, %v689
      %v691 = vrot.slane %v690, 4
      %v693 = vshll.u32 %v549, 16
      %v695 = vrot.slane %v693, 5
      %v696 = vsel %vm586, %v691, %v695
      %v697 = vshrl.u32 %v549, 16
      %v699 = vrot.slane %v697, 4
      %v700 = vor.u32 %v699, %v695
      %v701 = vrot.slane %v700, 4
      %v703 = vshll.u32 %v550, 16
      %v705 = vrot.slane %v703, 5
      %v706 = vsel %vm586, %v701, %v705
      %v708 = vshrl.u32 %v551, 16
      %v710 = vrot.slane %v708, 4
      %v711 = vshll.u32 %v551, 16
      %v713 = vrot.slane %v711, 5
      %v714 = vor.u32 %v710, %v713
      %v715 = vrot.slane %v714, 4
      %v717 = vshll.u32 %v552, 16
      %v719 = vrot.slane %v717, 5
      %v720 = vsel %vm586, %v715, %v719
      %v721 = vshrl.u32 %v552, 16
      %v723 = vrot.slane %v721, 4
      %v724 = vor.u32 %v723, %v719
      %v725 = vrot.slane %v724, 4
      %v727 = vshll.u32 %v553, 16
      %v729 = vrot.slane %v727, 5
      %v730 = vsel %vm586, %v725, %v729
      %v732 = vshrl.u32 %v554, 16
      %v734 = vrot.slane %v732, 4
      %v735 = vshll.u32 %v554, 16
      %v737 = vrot.slane %v735, 5
      %v738 = vor.u32 %v734, %v737
      %v739 = vrot.slane %v738, 4
      %v741 = vshll.u32 %v555, 16
      %v743 = vrot.slane %v741, 5
      %v744 = vsel %vm586, %v739, %v743
      %v745 = vshrl.u32 %v555, 16
      %v747 = vrot.slane %v745, 4
      %v748 = vor.u32 %v747, %v743
      %v749 = vrot.slane %v748, 4
      %v751 = vshll.u32 %v556, 16
      %v753 = vrot.slane %v751, 5
      %v754 = vsel %vm586, %v749, %v753
      %v756 = vshrl.u32 %v557, 16
      %v758 = vrot.slane %v756, 4
      %v759 = vshll.u32 %v557, 16
      %v761 = vrot.slane %v759, 5
      %v762 = vor.u32 %v758, %v761
      %v763 = vrot.slane %v762, 4
      %v765 = vshll.u32 %v558, 16
      %v767 = vrot.slane %v765, 5
      %v768 = vsel %vm586, %v763, %v767
      %v769 = vshrl.u32 %v558, 16
      %v771 = vrot.slane %v769, 4
      %v772 = vor.u32 %v771, %v767
      %v773 = vrot.slane %v772, 4
      %v775 = vshll.u32 %v559, 16
      %v777 = vrot.slane %v775, 5
      %v778 = vsel %vm586, %v773, %v777
      %v780 = vshrl.u32 %v560, 16
      %v782 = vrot.slane %v780, 4
      %v783 = vshll.u32 %v560, 16
      %v785 = vrot.slane %v783, 5
      %v786 = vor.u32 %v782, %v785
      %v787 = vrot.slane %v786, 4
      %v789 = vshll.u32 %v561, 16
      %v791 = vrot.slane %v789, 5
      %v792 = vsel %vm586, %v787, %v791
      %v793 = vshrl.u32 %v561, 16
      %v795 = vrot.slane %v793, 4
      %v796 = vor.u32 %v795, %v791
      %v797 = vrot.slane %v796, 4
      %v799 = vshll.u32 %v562, 16
      %v801 = vrot.slane %v799, 5
      %v802 = vsel %vm586, %v797, %v801
      %v804 = vshrl.u32 %v563, 16
      %v806 = vrot.slane %v804, 4
      %v807 = vshll.u32 %v563, 16
      %v809 = vrot.slane %v807, 5
      %v810 = vor.u32 %v806, %v809
      %v811 = vrot.slane %v810, 4
      %v813 = vshll.u32 %v564, 16
      %v815 = vrot.slane %v813, 5
      %v816 = vsel %vm586, %v811, %v815
      %v817 = vshrl.u32 %v564, 16
      %v819 = vrot.slane %v817, 4
      %v820 = vor.u32 %v819, %v815
      %v821 = vrot.slane %v820, 4
      %v823 = vshll.u32 %v565, 16
      %v825 = vrot.slane %v823, 5
      %v826 = vsel %vm586, %v821, %v825
      %v828 = vshrl.u32 %v566, 16
      %v830 = vrot.slane %v828, 4
      %v831 = vshll.u32 %v566, 16
      %v833 = vrot.slane %v831, 5
      %v834 = vor.u32 %v830, %v833
      %v835 = vrot.slane %v834, 4
      %v837 = vshll.u32 %v567, 16
      %v839 = vrot.slane %v837, 5
      %v840 = vsel %vm586, %v835, %v839
      %v841 = vshrl.u32 %v567, 16
      %v843 = vrot.slane %v841, 4
      %v844 = vor.u32 %v843, %v839
      %v845 = vrot.slane %v844, 4
      %v847 = vshll.u32 %v568, 16
      %v849 = vrot.slane %v847, 5
      %v850 = vsel %vm586, %v845, %v849
      %v852 = vshrl.u32 %v569, 16
      %v854 = vrot.slane %v852, 4
      %v855 = vshll.u32 %v569, 16
      %v857 = vrot.slane %v855, 5
      %v858 = vor.u32 %v854, %v857
      %v859 = vrot.slane %v858, 4
      %v861 = vshll.u32 %v570, 16
      %v863 = vrot.slane %v861, 5
      %v864 = vsel %vm586, %v859, %v863
      %v865 = vshrl.u32 %v570, 16
      %v867 = vrot.slane %v865, 4
      %v868 = vor.u32 %v867, %v863
      %v869 = vrot.slane %v868, 4
      %v871 = vshll.u32 %v571, 16
      %v873 = vrot.slane %v871, 5
      %v874 = vsel %vm586, %v869, %v873
      %v876 = vshrl.u32 %v572, 16
      %v878 = vrot.slane %v876, 4
      %v879 = vshll.u32 %v572, 16
      %v881 = vrot.slane %v879, 5
      %v882 = vor.u32 %v878, %v881
      %v883 = vrot.slane %v882, 4
      %v885 = vshll.u32 %v573, 16
      %v887 = vrot.slane %v885, 5
      %v888 = vsel %vm586, %v883, %v887
      %v889 = vshrl.u32 %v573, 16
      %v891 = vrot.slane %v889, 4
      %v892 = vor.u32 %v891, %v887
      %v893 = vrot.slane %v892, 4
      %v895 = vshll.u32 %v574, 16
      %v897 = vrot.slane %v895, 5
      %v898 = vsel %vm586, %v893, %v897
      %v900 = vshrl.u32 %v575, 16
      %v902 = vrot.slane %v900, 4
      %v903 = vshll.u32 %v575, 16
      %v905 = vrot.slane %v903, 5
      %v906 = vor.u32 %v902, %v905
      %v907 = vrot.slane %v906, 4
      %v909 = vshll.u32 %v576, 16
      %v911 = vrot.slane %v909, 5
      %v912 = vsel %vm586, %v907, %v911
      %v913 = vshrl.u32 %v576, 16
      %v915 = vrot.slane %v913, 4
      %v916 = vor.u32 %v915, %v911
      %v917 = vrot.slane %v916, 4
      %v919 = vshll.u32 %v577, 16
      %v921 = vrot.slane %v919, 5
      %v922 = vsel %vm586, %v917, %v921
      %v924 = vshrl.u32 %v578, 16
      %v926 = vrot.slane %v924, 4
      %v927 = vshll.u32 %v578, 16
      %v929 = vrot.slane %v927, 5
      %v930 = vor.u32 %v926, %v929
      %v931 = vrot.slane %v930, 4
      %v933 = vshll.u32 %v579, 16
      %v935 = vrot.slane %v933, 5
      %v936 = vsel %vm586, %v931, %v935
      %v937 = vshrl.u32 %v579, 16
      %v939 = vrot.slane %v937, 4
      %v940 = vor.u32 %v939, %v935
      %v941 = vrot.slane %v940, 4
      %v943 = vshll.u32 %v580, 16
      %v945 = vrot.slane %v943, 5
      %v946 = vsel %vm586, %v941, %v945
      %v948 = vshrl.u32 %v581, 16
      %v950 = vrot.slane %v948, 4
      %v951 = vshll.u32 %v581, 16
      %v953 = vrot.slane %v951, 5
      %v954 = vor.u32 %v950, %v953
      %v955 = vrot.slane %v954, 4
      %v957 = vshll.u32 %v582, 16
      %v959 = vrot.slane %v957, 5
      %v960 = vsel %vm586, %v955, %v959
      %v961 = vshrl.u32 %v582, 16
      %v963 = vrot.slane %v961, 4
      %v964 = vor.u32 %v963, %v959
      %v965 = vrot.slane %v964, 4
      %v967 = vshll.u32 %v583, 16
      %v969 = vrot.slane %v967, 5
      %v970 = vsel %vm586, %v965, %v969
      %s971 = scalar_lea.vmem %s223, 2
      %v972 = vld [vmem:[%s971] sm:$0x3]
      %v973 = vunpack.c.l.b16 %v600
      %v974 = vunpack.c.l.b16 %v610
      %v975 = vunpack.c.l.b16 %v624
      %v976 = vunpack.c.l.b16 %v634
      %v977 = vunpack.c.l.b16 %v648
      %v978 = vunpack.c.l.b16 %v658
      %v979 = vunpack.c.l.b16 %v672
      %v980 = vunpack.c.l.b16 %v682
      %v981 = vunpack.c.l.b16 %v696
      %v982 = vunpack.c.l.b16 %v706
      %v983 = vunpack.c.l.b16 %v720
      %v984 = vunpack.c.l.b16 %v730
      %v985 = vunpack.c.l.b16 %v744
      %v986 = vunpack.c.l.b16 %v754
      %v987 = vunpack.c.l.b16 %v768
      %v988 = vunpack.c.l.b16 %v778
      %v989 = vunpack.c.l.b16 %v792
      %v990 = vunpack.c.l.b16 %v802
      %v991 = vunpack.c.l.b16 %v816
      %v992 = vunpack.c.l.b16 %v826
      %v993 = vunpack.c.l.b16 %v840
      %v994 = vunpack.c.l.b16 %v850
      %v995 = vunpack.c.l.b16 %v864
      %v996 = vunpack.c.l.b16 %v874
      %v997 = vunpack.c.l.b16 %v888
      %v998 = vunpack.c.l.b16 %v898
      %v999 = vunpack.c.l.b16 %v912
      %v1000 = vunpack.c.l.b16 %v922
      %v1001 = vunpack.c.l.b16 %v936
      %v1002 = vunpack.c.l.b16 %v946
      %v1003 = vunpack.c.l.b16 %v960
      %v1004 = vunpack.c.l.b16 %v970
      %v1005 = vpack.c.b16 %v974, %v973
      %v1006 = vpack.c.b16 %v976, %v975
      %v1007 = vpack.c.b16 %v978, %v977
      %v1008 = vpack.c.b16 %v980, %v979
      %v1009 = vpack.c.b16 %v982, %v981
      %v1010 = vpack.c.b16 %v984, %v983
      %v1011 = vpack.c.b16 %v986, %v985
      %v1012 = vpack.c.b16 %v988, %v987
      %v1013 = vpack.c.b16 %v990, %v989
      %v1014 = vpack.c.b16 %v992, %v991
      %v1015 = vpack.c.b16 %v994, %v993
      %v1016 = vpack.c.b16 %v996, %v995
      %v1017 = vpack.c.b16 %v998, %v997
      %v1018 = vpack.c.b16 %v1000, %v999
      %v1019 = vpack.c.b16 %v1002, %v1001
      %v1020 = vpack.c.b16 %v1004, %v1003
      %v1022 = vsel %vm362, %v1005, 0
      %v1025 = vsel %vm362, %v1006, 0
      %v1028 = vsel %vm362, %v1007, 0
      %v1031 = vsel %vm362, %v1008, 0
      %v1034 = vsel %vm362, %v1009, 0
      %v1037 = vsel %vm362, %v1010, 0
      %v1040 = vsel %vm362, %v1011, 0
      %v1043 = vsel %vm362, %v1012, 0
      %v1046 = vsel %vm362, %v1013, 0
      %v1049 = vsel %vm362, %v1014, 0
      %v1052 = vsel %vm362, %v1015, 0
      %v1055 = vsel %vm362, %v1016, 0
      %v1058 = vsel %vm362, %v1017, 0
      %v1061 = vsel %vm362, %v1018, 0
      %v1064 = vsel %vm362, %v1019, 0
      %v1067 = vsel %vm362, %v1020, 0
      %v1070 = vsel %vm411, %v972, 0
      %1072 = vmatpush.bf16.msra.mxu0 0
      %1073 = vmatpush.bf16.msra.mxu0 0
      %1074 = vmatpush.bf16.msra.mxu0 0
      %1075 = vmatpush.bf16.msra.mxu0 0
      %1076 = vmatpush.bf16.msra.mxu0 0
      %1077 = vmatpush.bf16.msra.mxu0 0
      %1078 = vmatpush.bf16.msra.mxu0 0
      %1079 = vmatpush.bf16.msra.mxu0 %v1070
      %1080 = vmatmul.bf16.gmra.mxu0 %v1022
      %v1081 = vpop.f32.mrf.mxu0
      %v1082 = vadd.f32 0.0, %v1081
      %v1083 = vpop.f32.mrf.mxu0
      %v1084 = vadd.f32 0.0, %v1083
      %1085 = vmatmul.bf16.gmra.mxu0 %v1025
      %v1086 = vpop.f32.mrf.mxu0
      %v1087 = vadd.f32 0.0, %v1086
      %v1088 = vpop.f32.mrf.mxu0
      %v1089 = vadd.f32 0.0, %v1088
      %1090 = vmatmul.bf16.gmra.mxu0 %v1028
      %v1091 = vpop.f32.mrf.mxu0
      %v1092 = vadd.f32 0.0, %v1091
      %v1093 = vpop.f32.mrf.mxu0
      %v1094 = vadd.f32 0.0, %v1093
      %1095 = vmatmul.bf16.gmra.mxu0 %v1031
      %v1096 = vpop.f32.mrf.mxu0
      %v1097 = vadd.f32 0.0, %v1096
      %v1098 = vpop.f32.mrf.mxu0
      %v1099 = vadd.f32 0.0, %v1098
      %1100 = vmatmul.bf16.gmra.mxu0 %v1034
      %v1101 = vpop.f32.mrf.mxu0
      %v1102 = vadd.f32 0.0, %v1101
      %v1103 = vpop.f32.mrf.mxu0
      %v1104 = vadd.f32 0.0, %v1103
      %1105 = vmatmul.bf16.gmra.mxu0 %v1037
      %v1106 = vpop.f32.mrf.mxu0
      %v1107 = vadd.f32 0.0, %v1106
      %v1108 = vpop.f32.mrf.mxu0
      %v1109 = vadd.f32 0.0, %v1108
      %1110 = vmatmul.bf16.gmra.mxu0 %v1040
      %v1111 = vpop.f32.mrf.mxu0
      %v1112 = vadd.f32 0.0, %v1111
      %v1113 = vpop.f32.mrf.mxu0
      %v1114 = vadd.f32 0.0, %v1113
      %1115 = vmatmul.bf16.gmra.mxu0 %v1043
      %v1116 = vpop.f32.mrf.mxu0
      %v1117 = vadd.f32 0.0, %v1116
      %v1118 = vpop.f32.mrf.mxu0
      %v1119 = vadd.f32 0.0, %v1118
      %1120 = vmatmul.bf16.gmra.mxu0 %v1046
      %v1121 = vpop.f32.mrf.mxu0
      %v1122 = vadd.f32 0.0, %v1121
      %v1123 = vpop.f32.mrf.mxu0
      %v1124 = vadd.f32 0.0, %v1123
      %1125 = vmatmul.bf16.gmra.mxu0 %v1049
      %v1126 = vpop.f32.mrf.mxu0
      %v1127 = vadd.f32 0.0, %v1126
      %v1128 = vpop.f32.mrf.mxu0
      %v1129 = vadd.f32 0.0, %v1128
      %1130 = vmatmul.bf16.gmra.mxu0 %v1052
      %v1131 = vpop.f32.mrf.mxu0
      %v1132 = vadd.f32 0.0, %v1131
      %v1133 = vpop.f32.mrf.mxu0
      %v1134 = vadd.f32 0.0, %v1133
      %1135 = vmatmul.bf16.gmra.mxu0 %v1055
      %v1136 = vpop.f32.mrf.mxu0
      %v1137 = vadd.f32 0.0, %v1136
      %v1138 = vpop.f32.mrf.mxu0
      %v1139 = vadd.f32 0.0, %v1138
      %1140 = vmatmul.bf16.gmra.mxu0 %v1058
      %v1141 = vpop.f32.mrf.mxu0
      %v1142 = vadd.f32 0.0, %v1141
      %v1143 = vpop.f32.mrf.mxu0
      %v1144 = vadd.f32 0.0, %v1143
      %1145 = vmatmul.bf16.gmra.mxu0 %v1061
      %v1146 = vpop.f32.mrf.mxu0
      %v1147 = vadd.f32 0.0, %v1146
      %v1148 = vpop.f32.mrf.mxu0
      %v1149 = vadd.f32 0.0, %v1148
      %1150 = vmatmul.bf16.gmra.mxu0 %v1064
      %v1151 = vpop.f32.mrf.mxu0
      %v1152 = vadd.f32 0.0, %v1151
      %v1153 = vpop.f32.mrf.mxu0
      %v1154 = vadd.f32 0.0, %v1153
      %1155 = vmatmul.bf16.gmra.mxu0 %v1067
      %v1156 = vpop.f32.mrf.mxu0
      %v1157 = vadd.f32 0.0, %v1156
      %v1158 = vpop.f32.mrf.mxu0
      %v1159 = vadd.f32 0.0, %v1158
      %1160 = vdwg.mxu0
      %v1161 = vadd.f32 %v504, %v1082
      %v1162 = vadd.f32 %v505, %v1084
      %v1163 = vadd.f32 %v506, %v1087
      %v1164 = vadd.f32 %v507, %v1089
      %v1165 = vadd.f32 %v508, %v1092
      %v1166 = vadd.f32 %v509, %v1094
      %v1167 = vadd.f32 %v510, %v1097
      %v1168 = vadd.f32 %v511, %v1099
      %v1169 = vadd.f32 %v512, %v1102
      %v1170 = vadd.f32 %v513, %v1104
      %v1171 = vadd.f32 %v514, %v1107
      %v1172 = vadd.f32 %v515, %v1109
      %v1173 = vadd.f32 %v516, %v1112
      %v1174 = vadd.f32 %v517, %v1114
      %v1175 = vadd.f32 %v518, %v1117
      %v1176 = vadd.f32 %v519, %v1119
      %v1177 = vadd.f32 %v520, %v1122
      %v1178 = vadd.f32 %v521, %v1124
      %v1179 = vadd.f32 %v522, %v1127
      %v1180 = vadd.f32 %v523, %v1129
      %v1181 = vadd.f32 %v524, %v1132
      %v1182 = vadd.f32 %v525, %v1134
      %v1183 = vadd.f32 %v526, %v1137
      %v1184 = vadd.f32 %v527, %v1139
      %v1185 = vadd.f32 %v528, %v1142
      %v1186 = vadd.f32 %v529, %v1144
      %v1187 = vadd.f32 %v530, %v1147
      %v1188 = vadd.f32 %v531, %v1149
      %v1189 = vadd.f32 %v532, %v1152
      %v1190 = vadd.f32 %v533, %v1154
      %v1191 = vadd.f32 %v534, %v1157
      %v1192 = vadd.f32 %v535, %v1159
      %v1193 = vld [vmem:[%s248] sm:$0xe]
      %v1194 = vld [vmem:[%s248 + $0xc] sm:$0xe]
      %v1195 = vld [vmem:[%s248 + $0x18] sm:$0xe]
      %v1196 = vld [vmem:[%s248 + $0x24] sm:$0xe]
      %v1197 = vld [vmem:[%s248 + $0x30] sm:$0xe]
      %v1198 = vld [vmem:[%s248 + $0x3c] sm:$0xe]
      %v1199 = vld [vmem:[%s248 + $0x48] sm:$0xe]
      %v1200 = vld [vmem:[%s248 + $0x54] sm:$0xe]
      %v1201 = vld [vmem:[%s248 + $0x60] sm:$0xe]
      %v1202 = vld [vmem:[%s248 + $0x6c] sm:$0xe]
      %v1203 = vld [vmem:[%s248 + $0x78] sm:$0xe]
      %v1204 = vld [vmem:[%s248 + $0x84] sm:$0xe]
      %v1205 = vld [vmem:[%s248 + $0x90] sm:$0xe]
      %v1206 = vld [vmem:[%s248 + $0x9c] sm:$0xe]
      %v1207 = vld [vmem:[%s248 + $0xa8] sm:$0xe]
      %v1208 = vld [vmem:[%s248 + $0xb4] sm:$0xe]
      %vm1257 = vcmask 1042432
      %vm1258 = vcmask 1046532
      %vm1259 = vmor %vm1257, %vm1258
      %v1260 = vrot.slane %v1193, 5
      %v1261 = vrot.slane %v1260, 4
      %v1262 = vrot.slane %v537, 5
      %v1263 = vsel %vm1259, %v1261, %v1262
      %v1264 = vrot.slane %v1262, 4
      %v1265 = vrot.slane %v538, 5
      %v1266 = vsel %vm1259, %v1264, %v1265
      %v1267 = vrot.slane %v1194, 5
      %v1268 = vrot.slane %v1267, 4
      %v1269 = vrot.slane %v540, 5
      %v1270 = vsel %vm1259, %v1268, %v1269
      %v1271 = vrot.slane %v1269, 4
      %v1272 = vrot.slane %v541, 5
      %v1273 = vsel %vm1259, %v1271, %v1272
      %v1274 = vrot.slane %v1195, 5
      %v1275 = vrot.slane %v1274, 4
      %v1276 = vrot.slane %v543, 5
      %v1277 = vsel %vm1259, %v1275, %v1276
      %v1278 = vrot.slane %v1276, 4
      %v1279 = vrot.slane %v544, 5
      %v1280 = vsel %vm1259, %v1278, %v1279
      %v1281 = vrot.slane %v1196, 5
      %v1282 = vrot.slane %v1281, 4
      %v1283 = vrot.slane %v546, 5
      %v1284 = vsel %vm1259, %v1282, %v1283
      %v1285 = vrot.slane %v1283, 4
      %v1286 = vrot.slane %v547, 5
      %v1287 = vsel %vm1259, %v1285, %v1286
      %v1288 = vrot.slane %v1197, 5
      %v1289 = vrot.slane %v1288, 4
      %v1290 = vrot.slane %v549, 5
      %v1291 = vsel %vm1259, %v1289, %v1290
      %v1292 = vrot.slane %v1290, 4
      %v1293 = vrot.slane %v550, 5
      %v1294 = vsel %vm1259, %v1292, %v1293
      %v1295 = vrot.slane %v1198, 5
      %v1296 = vrot.slane %v1295, 4
      %v1297 = vrot.slane %v552, 5
      %v1298 = vsel %vm1259, %v1296, %v1297
      %v1299 = vrot.slane %v1297, 4
      %v1300 = vrot.slane %v553, 5
      %v1301 = vsel %vm1259, %v1299, %v1300
      %v1302 = vrot.slane %v1199, 5
      %v1303 = vrot.slane %v1302, 4
      %v1304 = vrot.slane %v555, 5
      %v1305 = vsel %vm1259, %v1303, %v1304
      %v1306 = vrot.slane %v1304, 4
      %v1307 = vrot.slane %v556, 5
      %v1308 = vsel %vm1259, %v1306, %v1307
      %v1309 = vrot.slane %v1200, 5
      %v1310 = vrot.slane %v1309, 4
      %v1311 = vrot.slane %v558, 5
      %v1312 = vsel %vm1259, %v1310, %v1311
      %v1313 = vrot.slane %v1311, 4
      %v1314 = vrot.slane %v559, 5
      %v1315 = vsel %vm1259, %v1313, %v1314
      %v1316 = vrot.slane %v1201, 5
      %v1317 = vrot.slane %v1316, 4
      %v1318 = vrot.slane %v561, 5
      %v1319 = vsel %vm1259, %v1317, %v1318
      %v1320 = vrot.slane %v1318, 4
      %v1321 = vrot.slane %v562, 5
      %v1322 = vsel %vm1259, %v1320, %v1321
      %v1323 = vrot.slane %v1202, 5
      %v1324 = vrot.slane %v1323, 4
      %v1325 = vrot.slane %v564, 5
      %v1326 = vsel %vm1259, %v1324, %v1325
      %v1327 = vrot.slane %v1325, 4
      %v1328 = vrot.slane %v565, 5
      %v1329 = vsel %vm1259, %v1327, %v1328
      %v1330 = vrot.slane %v1203, 5
      %v1331 = vrot.slane %v1330, 4
      %v1332 = vrot.slane %v567, 5
      %v1333 = vsel %vm1259, %v1331, %v1332
      %v1334 = vrot.slane %v1332, 4
      %v1335 = vrot.slane %v568, 5
      %v1336 = vsel %vm1259, %v1334, %v1335
      %v1337 = vrot.slane %v1204, 5
      %v1338 = vrot.slane %v1337, 4
      %v1339 = vrot.slane %v570, 5
      %v1340 = vsel %vm1259, %v1338, %v1339
      %v1341 = vrot.slane %v1339, 4
      %v1342 = vrot.slane %v571, 5
      %v1343 = vsel %vm1259, %v1341, %v1342
      %v1344 = vrot.slane %v1205, 5
      %v1345 = vrot.slane %v1344, 4
      %v1346 = vrot.slane %v573, 5
      %v1347 = vsel %vm1259, %v1345, %v1346
      %v1348 = vrot.slane %v1346, 4
      %v1349 = vrot.slane %v574, 5
      %v1350 = vsel %vm1259, %v1348, %v1349
      %v1351 = vrot.slane %v1206, 5
      %v1352 = vrot.slane %v1351, 4
      %v1353 = vrot.slane %v576, 5
      %v1354 = vsel %vm1259, %v1352, %v1353
      %v1355 = vrot.slane %v1353, 4
      %v1356 = vrot.slane %v577, 5
      %v1357 = vsel %vm1259, %v1355, %v1356
      %v1358 = vrot.slane %v1207, 5
      %v1359 = vrot.slane %v1358, 4
      %v1360 = vrot.slane %v579, 5
      %v1361 = vsel %vm1259, %v1359, %v1360
      %v1362 = vrot.slane %v1360, 4
      %v1363 = vrot.slane %v580, 5
      %v1364 = vsel %vm1259, %v1362, %v1363
      %v1365 = vrot.slane %v1208, 5
      %v1366 = vrot.slane %v1365, 4
      %v1367 = vrot.slane %v582, 5
      %v1368 = vsel %vm1259, %v1366, %v1367
      %v1369 = vrot.slane %v1367, 4
      %v1370 = vrot.slane %v583, 5
      %v1371 = vsel %vm1259, %v1369, %v1370
      %s1372 = scalar_lea.vmem %s223, 4
      %v1373 = vld [vmem:[%s1372] sm:$0x3]
      %v1374 = vunpack.c.l.b16 %v1263
      %v1375 = vunpack.c.l.b16 %v1266
      %v1376 = vunpack.c.l.b16 %v1270
      %v1377 = vunpack.c.l.b16 %v1273
      %v1378 = vunpack.c.l.b16 %v1277
      %v1379 = vunpack.c.l.b16 %v1280
      %v1380 = vunpack.c.l.b16 %v1284
      %v1381 = vunpack.c.l.b16 %v1287
      %v1382 = vunpack.c.l.b16 %v1291
      %v1383 = vunpack.c.l.b16 %v1294
      %v1384 = vunpack.c.l.b16 %v1298
      %v1385 = vunpack.c.l.b16 %v1301
      %v1386 = vunpack.c.l.b16 %v1305
      %v1387 = vunpack.c.l.b16 %v1308
      %v1388 = vunpack.c.l.b16 %v1312
      %v1389 = vunpack.c.l.b16 %v1315
      %v1390 = vunpack.c.l.b16 %v1319
      %v1391 = vunpack.c.l.b16 %v1322
      %v1392 = vunpack.c.l.b16 %v1326
      %v1393 = vunpack.c.l.b16 %v1329
      %v1394 = vunpack.c.l.b16 %v1333
      %v1395 = vunpack.c.l.b16 %v1336
      %v1396 = vunpack.c.l.b16 %v1340
      %v1397 = vunpack.c.l.b16 %v1343
      %v1398 = vunpack.c.l.b16 %v1347
      %v1399 = vunpack.c.l.b16 %v1350
      %v1400 = vunpack.c.l.b16 %v1354
      %v1401 = vunpack.c.l.b16 %v1357
      %v1402 = vunpack.c.l.b16 %v1361
      %v1403 = vunpack.c.l.b16 %v1364
      %v1404 = vunpack.c.l.b16 %v1368
      %v1405 = vunpack.c.l.b16 %v1371
      %v1406 = vpack.c.b16 %v1375, %v1374
      %v1407 = vpack.c.b16 %v1377, %v1376
      %v1408 = vpack.c.b16 %v1379, %v1378
      %v1409 = vpack.c.b16 %v1381, %v1380
      %v1410 = vpack.c.b16 %v1383, %v1382
      %v1411 = vpack.c.b16 %v1385, %v1384
      %v1412 = vpack.c.b16 %v1387, %v1386
      %v1413 = vpack.c.b16 %v1389, %v1388
      %v1414 = vpack.c.b16 %v1391, %v1390
      %v1415 = vpack.c.b16 %v1393, %v1392
      %v1416 = vpack.c.b16 %v1395, %v1394
      %v1417 = vpack.c.b16 %v1397, %v1396
      %v1418 = vpack.c.b16 %v1399, %v1398
      %v1419 = vpack.c.b16 %v1401, %v1400
      %v1420 = vpack.c.b16 %v1403, %v1402
      %v1421 = vpack.c.b16 %v1405, %v1404
      %v1423 = vsel %vm362, %v1406, 0
      %v1426 = vsel %vm362, %v1407, 0
      %v1429 = vsel %vm362, %v1408, 0
      %v1432 = vsel %vm362, %v1409, 0
      %v1435 = vsel %vm362, %v1410, 0
      %v1438 = vsel %vm362, %v1411, 0
      %v1441 = vsel %vm362, %v1412, 0
      %v1444 = vsel %vm362, %v1413, 0
      %v1447 = vsel %vm362, %v1414, 0
      %v1450 = vsel %vm362, %v1415, 0
      %v1453 = vsel %vm362, %v1416, 0
      %v1456 = vsel %vm362, %v1417, 0
      %v1459 = vsel %vm362, %v1418, 0
      %v1462 = vsel %vm362, %v1419, 0
      %v1465 = vsel %vm362, %v1420, 0
      %v1468 = vsel %vm362, %v1421, 0
      %v1471 = vsel %vm411, %v1373, 0
      %1473 = vmatpush.bf16.msra.mxu0 0
      %1474 = vmatpush.bf16.msra.mxu0 0
      %1475 = vmatpush.bf16.msra.mxu0 0
      %1476 = vmatpush.bf16.msra.mxu0 0
      %1477 = vmatpush.bf16.msra.mxu0 0
      %1478 = vmatpush.bf16.msra.mxu0 0
      %1479 = vmatpush.bf16.msra.mxu0 0
      %1480 = vmatpush.bf16.msra.mxu0 %v1471
      %1481 = vmatmul.bf16.gmra.mxu0 %v1423
      %v1482 = vpop.f32.mrf.mxu0
      %v1483 = vadd.f32 0.0, %v1482
      %v1484 = vpop.f32.mrf.mxu0
      %v1485 = vadd.f32 0.0, %v1484
      %1486 = vmatmul.bf16.gmra.mxu0 %v1426
      %v1487 = vpop.f32.mrf.mxu0
      %v1488 = vadd.f32 0.0, %v1487
      %v1489 = vpop.f32.mrf.mxu0
      %v1490 = vadd.f32 0.0, %v1489
      %1491 = vmatmul.bf16.gmra.mxu0 %v1429
      %v1492 = vpop.f32.mrf.mxu0
      %v1493 = vadd.f32 0.0, %v1492
      %v1494 = vpop.f32.mrf.mxu0
      %v1495 = vadd.f32 0.0, %v1494
      %1496 = vmatmul.bf16.gmra.mxu0 %v1432
      %v1497 = vpop.f32.mrf.mxu0
      %v1498 = vadd.f32 0.0, %v1497
      %v1499 = vpop.f32.mrf.mxu0
      %v1500 = vadd.f32 0.0, %v1499
      %1501 = vmatmul.bf16.gmra.mxu0 %v1435
      %v1502 = vpop.f32.mrf.mxu0
      %v1503 = vadd.f32 0.0, %v1502
      %v1504 = vpop.f32.mrf.mxu0
      %v1505 = vadd.f32 0.0, %v1504
      %1506 = vmatmul.bf16.gmra.mxu0 %v1438
      %v1507 = vpop.f32.mrf.mxu0
      %v1508 = vadd.f32 0.0, %v1507
      %v1509 = vpop.f32.mrf.mxu0
      %v1510 = vadd.f32 0.0, %v1509
      %1511 = vmatmul.bf16.gmra.mxu0 %v1441
      %v1512 = vpop.f32.mrf.mxu0
      %v1513 = vadd.f32 0.0, %v1512
      %v1514 = vpop.f32.mrf.mxu0
      %v1515 = vadd.f32 0.0, %v1514
      %1516 = vmatmul.bf16.gmra.mxu0 %v1444
      %v1517 = vpop.f32.mrf.mxu0
      %v1518 = vadd.f32 0.0, %v1517
      %v1519 = vpop.f32.mrf.mxu0
      %v1520 = vadd.f32 0.0, %v1519
      %1521 = vmatmul.bf16.gmra.mxu0 %v1447
      %v1522 = vpop.f32.mrf.mxu0
      %v1523 = vadd.f32 0.0, %v1522
      %v1524 = vpop.f32.mrf.mxu0
      %v1525 = vadd.f32 0.0, %v1524
      %1526 = vmatmul.bf16.gmra.mxu0 %v1450
      %v1527 = vpop.f32.mrf.mxu0
      %v1528 = vadd.f32 0.0, %v1527
      %v1529 = vpop.f32.mrf.mxu0
      %v1530 = vadd.f32 0.0, %v1529
      %1531 = vmatmul.bf16.gmra.mxu0 %v1453
      %v1532 = vpop.f32.mrf.mxu0
      %v1533 = vadd.f32 0.0, %v1532
      %v1534 = vpop.f32.mrf.mxu0
      %v1535 = vadd.f32 0.0, %v1534
      %1536 = vmatmul.bf16.gmra.mxu0 %v1456
      %v1537 = vpop.f32.mrf.mxu0
      %v1538 = vadd.f32 0.0, %v1537
      %v1539 = vpop.f32.mrf.mxu0
      %v1540 = vadd.f32 0.0, %v1539
      %1541 = vmatmul.bf16.gmra.mxu0 %v1459
      %v1542 = vpop.f32.mrf.mxu0
      %v1543 = vadd.f32 0.0, %v1542
      %v1544 = vpop.f32.mrf.mxu0
      %v1545 = vadd.f32 0.0, %v1544
      %1546 = vmatmul.bf16.gmra.mxu0 %v1462
      %v1547 = vpop.f32.mrf.mxu0
      %v1548 = vadd.f32 0.0, %v1547
      %v1549 = vpop.f32.mrf.mxu0
      %v1550 = vadd.f32 0.0, %v1549
      %1551 = vmatmul.bf16.gmra.mxu0 %v1465
      %v1552 = vpop.f32.mrf.mxu0
      %v1553 = vadd.f32 0.0, %v1552
      %v1554 = vpop.f32.mrf.mxu0
      %v1555 = vadd.f32 0.0, %v1554
      %1556 = vmatmul.bf16.gmra.mxu0 %v1468
      %v1557 = vpop.f32.mrf.mxu0
      %v1558 = vadd.f32 0.0, %v1557
      %v1559 = vpop.f32.mrf.mxu0
      %v1560 = vadd.f32 0.0, %v1559
      %1561 = vdwg.mxu0
      %v1562 = vadd.f32 %v1161, %v1483
      %v1563 = vadd.f32 %v1162, %v1485
      %v1564 = vadd.f32 %v1163, %v1488
      %v1565 = vadd.f32 %v1164, %v1490
      %v1566 = vadd.f32 %v1165, %v1493
      %v1567 = vadd.f32 %v1166, %v1495
      %v1568 = vadd.f32 %v1167, %v1498
      %v1569 = vadd.f32 %v1168, %v1500
      %v1570 = vadd.f32 %v1169, %v1503
      %v1571 = vadd.f32 %v1170, %v1505
      %v1572 = vadd.f32 %v1171, %v1508
      %v1573 = vadd.f32 %v1172, %v1510
      %v1574 = vadd.f32 %v1173, %v1513
      %v1575 = vadd.f32 %v1174, %v1515
      %v1576 = vadd.f32 %v1175, %v1518
      %v1577 = vadd.f32 %v1176, %v1520
      %v1578 = vadd.f32 %v1177, %v1523
      %v1579 = vadd.f32 %v1178, %v1525
      %v1580 = vadd.f32 %v1179, %v1528
      %v1581 = vadd.f32 %v1180, %v1530
      %v1582 = vadd.f32 %v1181, %v1533
      %v1583 = vadd.f32 %v1182, %v1535
      %v1584 = vadd.f32 %v1183, %v1538
      %v1585 = vadd.f32 %v1184, %v1540
      %v1586 = vadd.f32 %v1185, %v1543
      %v1587 = vadd.f32 %v1186, %v1545
      %v1588 = vadd.f32 %v1187, %v1548
      %v1589 = vadd.f32 %v1188, %v1550
      %v1590 = vadd.f32 %v1189, %v1553
      %v1591 = vadd.f32 %v1190, %v1555
      %v1592 = vadd.f32 %v1191, %v1558
      %v1593 = vadd.f32 %v1192, %v1560
      %s1594 = sadd.s32 %s241, 1
      %s1595 = smul.u32 %s1594, 3
      %s1596 = smul.addr %s1595, 4
      %s1597 = scalar_lea.vmem %s219, %s1596
      %v1598 = vld [vmem:[%s1597] sm:$0xf]
      %v1599 = vld [vmem:[%s1597 + $0x4] sm:$0xf]
      %v1600 = vld [vmem:[%s1597 + $0xc] sm:$0xf]
      %v1601 = vld [vmem:[%s1597 + $0x10] sm:$0xf]
      %v1602 = vld [vmem:[%s1597 + $0x18] sm:$0xf]
      %v1603 = vld [vmem:[%s1597 + $0x1c] sm:$0xf]
      %v1604 = vld [vmem:[%s1597 + $0x24] sm:$0xf]
      %v1605 = vld [vmem:[%s1597 + $0x28] sm:$0xf]
      %v1606 = vld [vmem:[%s1597 + $0x30] sm:$0xf]
      %v1607 = vld [vmem:[%s1597 + $0x34] sm:$0xf]
      %v1608 = vld [vmem:[%s1597 + $0x3c] sm:$0xf]
      %v1609 = vld [vmem:[%s1597 + $0x40] sm:$0xf]
      %v1610 = vld [vmem:[%s1597 + $0x48] sm:$0xf]
      %v1611 = vld [vmem:[%s1597 + $0x4c] sm:$0xf]
      %v1612 = vld [vmem:[%s1597 + $0x54] sm:$0xf]
      %v1613 = vld [vmem:[%s1597 + $0x58] sm:$0xf]
      %v1614 = vld [vmem:[%s1597 + $0x60] sm:$0xf]
      %v1615 = vld [vmem:[%s1597 + $0x64] sm:$0xf]
      %v1616 = vld [vmem:[%s1597 + $0x6c] sm:$0xf]
      %v1617 = vld [vmem:[%s1597 + $0x70] sm:$0xf]
      %v1618 = vld [vmem:[%s1597 + $0x78] sm:$0xf]
      %v1619 = vld [vmem:[%s1597 + $0x7c] sm:$0xf]
      %v1620 = vld [vmem:[%s1597 + $0x84] sm:$0xf]
      %v1621 = vld [vmem:[%s1597 + $0x88] sm:$0xf]
      %v1622 = vld [vmem:[%s1597 + $0x90] sm:$0xf]
      %v1623 = vld [vmem:[%s1597 + $0x94] sm:$0xf]
      %v1624 = vld [vmem:[%s1597 + $0x9c] sm:$0xf]
      %v1625 = vld [vmem:[%s1597 + $0xa0] sm:$0xf]
      %v1626 = vld [vmem:[%s1597 + $0xa8] sm:$0xf]
      %v1627 = vld [vmem:[%s1597 + $0xac] sm:$0xf]
      %v1628 = vld [vmem:[%s1597 + $0xb4] sm:$0xf]
      %v1629 = vld [vmem:[%s1597 + $0xb8] sm:$0xf]
      %s1630 = scalar_lea.vmem %s223, 6
      %v1631 = vld [vmem:[%s1630] sm:$0x3]
      %v1664 = vunpack.c.l.b16 %v1598
      %v1665 = vunpack.c.l.b16 %v1599
      %v1666 = vunpack.c.l.b16 %v1600
      %v1667 = vunpack.c.l.b16 %v1601
      %v1668 = vunpack.c.l.b16 %v1602
      %v1669 = vunpack.c.l.b16 %v1603
      %v1670 = vunpack.c.l.b16 %v1604
      %v1671 = vunpack.c.l.b16 %v1605
      %v1672 = vunpack.c.l.b16 %v1606
      %v1673 = vunpack.c.l.b16 %v1607
      %v1674 = vunpack.c.l.b16 %v1608
      %v1675 = vunpack.c.l.b16 %v1609
      %v1676 = vunpack.c.l.b16 %v1610
      %v1677 = vunpack.c.l.b16 %v1611
      %v1678 = vunpack.c.l.b16 %v1612
      %v1679 = vunpack.c.l.b16 %v1613
      %v1680 = vunpack.c.l.b16 %v1614
      %v1681 = vunpack.c.l.b16 %v1615
      %v1682 = vunpack.c.l.b16 %v1616
      %v1683 = vunpack.c.l.b16 %v1617
      %v1684 = vunpack.c.l.b16 %v1618
      %v1685 = vunpack.c.l.b16 %v1619
      %v1686 = vunpack.c.l.b16 %v1620
      %v1687 = vunpack.c.l.b16 %v1621
      %v1688 = vunpack.c.l.b16 %v1622
      %v1689 = vunpack.c.l.b16 %v1623
      %v1690 = vunpack.c.l.b16 %v1624
      %v1691 = vunpack.c.l.b16 %v1625
      %v1692 = vunpack.c.l.b16 %v1626
      %v1693 = vunpack.c.l.b16 %v1627
      %v1694 = vunpack.c.l.b16 %v1628
      %v1695 = vunpack.c.l.b16 %v1629
      %v1696 = vpack.c.b16 %v1665, %v1664
      %v1697 = vpack.c.b16 %v1667, %v1666
      %v1698 = vpack.c.b16 %v1669, %v1668
      %v1699 = vpack.c.b16 %v1671, %v1670
      %v1700 = vpack.c.b16 %v1673, %v1672
      %v1701 = vpack.c.b16 %v1675, %v1674
      %v1702 = vpack.c.b16 %v1677, %v1676
      %v1703 = vpack.c.b16 %v1679, %v1678
      %v1704 = vpack.c.b16 %v1681, %v1680
      %v1705 = vpack.c.b16 %v1683, %v1682
      %v1706 = vpack.c.b16 %v1685, %v1684
      %v1707 = vpack.c.b16 %v1687, %v1686
      %v1708 = vpack.c.b16 %v1689, %v1688
      %v1709 = vpack.c.b16 %v1691, %v1690
      %v1710 = vpack.c.b16 %v1693, %v1692
      %v1711 = vpack.c.b16 %v1695, %v1694
      %v1713 = vsel %vm362, %v1696, 0
      %v1716 = vsel %vm362, %v1697, 0
      %v1719 = vsel %vm362, %v1698, 0
      %v1722 = vsel %vm362, %v1699, 0
      %v1725 = vsel %vm362, %v1700, 0
      %v1728 = vsel %vm362, %v1701, 0
      %v1731 = vsel %vm362, %v1702, 0
      %v1734 = vsel %vm362, %v1703, 0
      %v1737 = vsel %vm362, %v1704, 0
      %v1740 = vsel %vm362, %v1705, 0
      %v1743 = vsel %vm362, %v1706, 0
      %v1746 = vsel %vm362, %v1707, 0
      %v1749 = vsel %vm362, %v1708, 0
      %v1752 = vsel %vm362, %v1709, 0
      %v1755 = vsel %vm362, %v1710, 0
      %v1758 = vsel %vm362, %v1711, 0
      %v1761 = vsel %vm411, %v1631, 0
      %1763 = vmatpush.bf16.msra.mxu0 0
      %1764 = vmatpush.bf16.msra.mxu0 0
      %1765 = vmatpush.bf16.msra.mxu0 0
      %1766 = vmatpush.bf16.msra.mxu0 0
      %1767 = vmatpush.bf16.msra.mxu0 0
      %1768 = vmatpush.bf16.msra.mxu0 0
      %1769 = vmatpush.bf16.msra.mxu0 0
      %1770 = vmatpush.bf16.msra.mxu0 %v1761
      %1771 = vmatmul.bf16.gmra.mxu0 %v1713
      %v1772 = vpop.f32.mrf.mxu0
      %v1773 = vadd.f32 0.0, %v1772
      %v1774 = vpop.f32.mrf.mxu0
      %v1775 = vadd.f32 0.0, %v1774
      %1776 = vmatmul.bf16.gmra.mxu0 %v1716
      %v1777 = vpop.f32.mrf.mxu0
      %v1778 = vadd.f32 0.0, %v1777
      %v1779 = vpop.f32.mrf.mxu0
      %v1780 = vadd.f32 0.0, %v1779
      %1781 = vmatmul.bf16.gmra.mxu0 %v1719
      %v1782 = vpop.f32.mrf.mxu0
      %v1783 = vadd.f32 0.0, %v1782
      %v1784 = vpop.f32.mrf.mxu0
      %v1785 = vadd.f32 0.0, %v1784
      %1786 = vmatmul.bf16.gmra.mxu0 %v1722
      %v1787 = vpop.f32.mrf.mxu0
      %v1788 = vadd.f32 0.0, %v1787
      %v1789 = vpop.f32.mrf.mxu0
      %v1790 = vadd.f32 0.0, %v1789
      %1791 = vmatmul.bf16.gmra.mxu0 %v1725
      %v1792 = vpop.f32.mrf.mxu0
      %v1793 = vadd.f32 0.0, %v1792
      %v1794 = vpop.f32.mrf.mxu0
      %v1795 = vadd.f32 0.0, %v1794
      %1796 = vmatmul.bf16.gmra.mxu0 %v1728
      %v1797 = vpop.f32.mrf.mxu0
      %v1798 = vadd.f32 0.0, %v1797
      %v1799 = vpop.f32.mrf.mxu0
      %v1800 = vadd.f32 0.0, %v1799
      %1801 = vmatmul.bf16.gmra.mxu0 %v1731
      %v1802 = vpop.f32.mrf.mxu0
      %v1803 = vadd.f32 0.0, %v1802
      %v1804 = vpop.f32.mrf.mxu0
      %v1805 = vadd.f32 0.0, %v1804
      %1806 = vmatmul.bf16.gmra.mxu0 %v1734
      %v1807 = vpop.f32.mrf.mxu0
      %v1808 = vadd.f32 0.0, %v1807
      %v1809 = vpop.f32.mrf.mxu0
      %v1810 = vadd.f32 0.0, %v1809
      %1811 = vmatmul.bf16.gmra.mxu0 %v1737
      %v1812 = vpop.f32.mrf.mxu0
      %v1813 = vadd.f32 0.0, %v1812
      %v1814 = vpop.f32.mrf.mxu0
      %v1815 = vadd.f32 0.0, %v1814
      %1816 = vmatmul.bf16.gmra.mxu0 %v1740
      %v1817 = vpop.f32.mrf.mxu0
      %v1818 = vadd.f32 0.0, %v1817
      %v1819 = vpop.f32.mrf.mxu0
      %v1820 = vadd.f32 0.0, %v1819
      %1821 = vmatmul.bf16.gmra.mxu0 %v1743
      %v1822 = vpop.f32.mrf.mxu0
      %v1823 = vadd.f32 0.0, %v1822
      %v1824 = vpop.f32.mrf.mxu0
      %v1825 = vadd.f32 0.0, %v1824
      %1826 = vmatmul.bf16.gmra.mxu0 %v1746
      %v1827 = vpop.f32.mrf.mxu0
      %v1828 = vadd.f32 0.0, %v1827
      %v1829 = vpop.f32.mrf.mxu0
      %v1830 = vadd.f32 0.0, %v1829
      %1831 = vmatmul.bf16.gmra.mxu0 %v1749
      %v1832 = vpop.f32.mrf.mxu0
      %v1833 = vadd.f32 0.0, %v1832
      %v1834 = vpop.f32.mrf.mxu0
      %v1835 = vadd.f32 0.0, %v1834
      %1836 = vmatmul.bf16.gmra.mxu0 %v1752
      %v1837 = vpop.f32.mrf.mxu0
      %v1838 = vadd.f32 0.0, %v1837
      %v1839 = vpop.f32.mrf.mxu0
      %v1840 = vadd.f32 0.0, %v1839
      %1841 = vmatmul.bf16.gmra.mxu0 %v1755
      %v1842 = vpop.f32.mrf.mxu0
      %v1843 = vadd.f32 0.0, %v1842
      %v1844 = vpop.f32.mrf.mxu0
      %v1845 = vadd.f32 0.0, %v1844
      %1846 = vmatmul.bf16.gmra.mxu0 %v1758
      %v1847 = vpop.f32.mrf.mxu0
      %v1848 = vadd.f32 0.0, %v1847
      %v1849 = vpop.f32.mrf.mxu0
      %v1850 = vadd.f32 0.0, %v1849
      %1851 = vdwg.mxu0
      %v1852 = vadd.f32 %v1562, %v1773
      %v1853 = vadd.f32 %v1563, %v1775
      %v1854 = vadd.f32 %v1564, %v1778
      %v1855 = vadd.f32 %v1565, %v1780
      %v1856 = vadd.f32 %v1566, %v1783
      %v1857 = vadd.f32 %v1567, %v1785
      %v1858 = vadd.f32 %v1568, %v1788
      %v1859 = vadd.f32 %v1569, %v1790
      %v1860 = vadd.f32 %v1570, %v1793
      %v1861 = vadd.f32 %v1571, %v1795
      %v1862 = vadd.f32 %v1572, %v1798
      %v1863 = vadd.f32 %v1573, %v1800
      %v1864 = vadd.f32 %v1574, %v1803
      %v1865 = vadd.f32 %v1575, %v1805
      %v1866 = vadd.f32 %v1576, %v1808
      %v1867 = vadd.f32 %v1577, %v1810
      %v1868 = vadd.f32 %v1578, %v1813
      %v1869 = vadd.f32 %v1579, %v1815
      %v1870 = vadd.f32 %v1580, %v1818
      %v1871 = vadd.f32 %v1581, %v1820
      %v1872 = vadd.f32 %v1582, %v1823
      %v1873 = vadd.f32 %v1583, %v1825
      %v1874 = vadd.f32 %v1584, %v1828
      %v1875 = vadd.f32 %v1585, %v1830
      %v1876 = vadd.f32 %v1586, %v1833
      %v1877 = vadd.f32 %v1587, %v1835
      %v1878 = vadd.f32 %v1588, %v1838
      %v1879 = vadd.f32 %v1589, %v1840
      %v1880 = vadd.f32 %v1590, %v1843
      %v1881 = vadd.f32 %v1591, %v1845
      %v1882 = vadd.f32 %v1592, %v1848
      %v1883 = vadd.f32 %v1593, %v1850
      %v1884 = vld [vmem:[%s1597] sm:$0xf]
      %v1885 = vld [vmem:[%s1597 + $0x4] sm:$0xf]
      %v1886 = vld [vmem:[%s1597 + $0x8] sm:$0x1]
      %v1887 = vld [vmem:[%s1597 + $0xc] sm:$0xf]
      %v1888 = vld [vmem:[%s1597 + $0x10] sm:$0xf]
      %v1889 = vld [vmem:[%s1597 + $0x14] sm:$0x1]
      %v1890 = vld [vmem:[%s1597 + $0x18] sm:$0xf]
      %v1891 = vld [vmem:[%s1597 + $0x1c] sm:$0xf]
      %v1892 = vld [vmem:[%s1597 + $0x20] sm:$0x1]
      %v1893 = vld [vmem:[%s1597 + $0x24] sm:$0xf]
      %v1894 = vld [vmem:[%s1597 + $0x28] sm:$0xf]
      %v1895 = vld [vmem:[%s1597 + $0x2c] sm:$0x1]
      %v1896 = vld [vmem:[%s1597 + $0x30] sm:$0xf]
      %v1897 = vld [vmem:[%s1597 + $0x34] sm:$0xf]
      %v1898 = vld [vmem:[%s1597 + $0x38] sm:$0x1]
      %v1899 = vld [vmem:[%s1597 + $0x3c] sm:$0xf]
      %v1900 = vld [vmem:[%s1597 + $0x40] sm:$0xf]
      %v1901 = vld [vmem:[%s1597 + $0x44] sm:$0x1]
      %v1902 = vld [vmem:[%s1597 + $0x48] sm:$0xf]
      %v1903 = vld [vmem:[%s1597 + $0x4c] sm:$0xf]
      %v1904 = vld [vmem:[%s1597 + $0x50] sm:$0x1]
      %v1905 = vld [vmem:[%s1597 + $0x54] sm:$0xf]
      %v1906 = vld [vmem:[%s1597 + $0x58] sm:$0xf]
      %v1907 = vld [vmem:[%s1597 + $0x5c] sm:$0x1]
      %v1908 = vld [vmem:[%s1597 + $0x60] sm:$0xf]
      %v1909 = vld [vmem:[%s1597 + $0x64] sm:$0xf]
      %v1910 = vld [vmem:[%s1597 + $0x68] sm:$0x1]
      %v1911 = vld [vmem:[%s1597 + $0x6c] sm:$0xf]
      %v1912 = vld [vmem:[%s1597 + $0x70] sm:$0xf]
      %v1913 = vld [vmem:[%s1597 + $0x74] sm:$0x1]
      %v1914 = vld [vmem:[%s1597 + $0x78] sm:$0xf]
      %v1915 = vld [vmem:[%s1597 + $0x7c] sm:$0xf]
      %v1916 = vld [vmem:[%s1597 + $0x80] sm:$0x1]
      %v1917 = vld [vmem:[%s1597 + $0x84] sm:$0xf]
      %v1918 = vld [vmem:[%s1597 + $0x88] sm:$0xf]
      %v1919 = vld [vmem:[%s1597 + $0x8c] sm:$0x1]
      %v1920 = vld [vmem:[%s1597 + $0x90] sm:$0xf]
      %v1921 = vld [vmem:[%s1597 + $0x94] sm:$0xf]
      %v1922 = vld [vmem:[%s1597 + $0x98] sm:$0x1]
      %v1923 = vld [vmem:[%s1597 + $0x9c] sm:$0xf]
      %v1924 = vld [vmem:[%s1597 + $0xa0] sm:$0xf]
      %v1925 = vld [vmem:[%s1597 + $0xa4] sm:$0x1]
      %v1926 = vld [vmem:[%s1597 + $0xa8] sm:$0xf]
      %v1927 = vld [vmem:[%s1597 + $0xac] sm:$0xf]
      %v1928 = vld [vmem:[%s1597 + $0xb0] sm:$0x1]
      %v1929 = vld [vmem:[%s1597 + $0xb4] sm:$0xf]
      %v1930 = vld [vmem:[%s1597 + $0xb8] sm:$0xf]
      %v1931 = vld [vmem:[%s1597 + $0xbc] sm:$0x1]
      %v1933 = vshrl.u32 %v1884, 16
      %v1935 = vrot.slane %v1933, 4
      %v1936 = vshll.u32 %v1884, 16
      %v1938 = vrot.slane %v1936, 5
      %v1939 = vor.u32 %v1935, %v1938
      %v1940 = vrot.slane %v1939, 4
      %v1942 = vshll.u32 %v1885, 16
      %v1944 = vrot.slane %v1942, 5
      %v1945 = vsel %vm586, %v1940, %v1944
      %v1946 = vshrl.u32 %v1885, 16
      %v1948 = vrot.slane %v1946, 4
      %v1949 = vor.u32 %v1948, %v1944
      %v1950 = vrot.slane %v1949, 4
      %v1952 = vshll.u32 %v1886, 16
      %v1954 = vrot.slane %v1952, 5
      %v1955 = vsel %vm586, %v1950, %v1954
      %v1957 = vshrl.u32 %v1887, 16
      %v1959 = vrot.slane %v1957, 4
      %v1960 = vshll.u32 %v1887, 16
      %v1962 = vrot.slane %v1960, 5
      %v1963 = vor.u32 %v1959, %v1962
      %v1964 = vrot.slane %v1963, 4
      %v1966 = vshll.u32 %v1888, 16
      %v1968 = vrot.slane %v1966, 5
      %v1969 = vsel %vm586, %v1964, %v1968
      %v1970 = vshrl.u32 %v1888, 16
      %v1972 = vrot.slane %v1970, 4
      %v1973 = vor.u32 %v1972, %v1968
      %v1974 = vrot.slane %v1973, 4
      %v1976 = vshll.u32 %v1889, 16
      %v1978 = vrot.slane %v1976, 5
      %v1979 = vsel %vm586, %v1974, %v1978
      %v1981 = vshrl.u32 %v1890, 16
      %v1983 = vrot.slane %v1981, 4
      %v1984 = vshll.u32 %v1890, 16
      %v1986 = vrot.slane %v1984, 5
      %v1987 = vor.u32 %v1983, %v1986
      %v1988 = vrot.slane %v1987, 4
      %v1990 = vshll.u32 %v1891, 16
      %v1992 = vrot.slane %v1990, 5
      %v1993 = vsel %vm586, %v1988, %v1992
      %v1994 = vshrl.u32 %v1891, 16
      %v1996 = vrot.slane %v1994, 4
      %v1997 = vor.u32 %v1996, %v1992
      %v1998 = vrot.slane %v1997, 4
      %v2000 = vshll.u32 %v1892, 16
      %v2002 = vrot.slane %v2000, 5
      %v2003 = vsel %vm586, %v1998, %v2002
      %v2005 = vshrl.u32 %v1893, 16
      %v2007 = vrot.slane %v2005, 4
      %v2008 = vshll.u32 %v1893, 16
      %v2010 = vrot.slane %v2008, 5
      %v2011 = vor.u32 %v2007, %v2010
      %v2012 = vrot.slane %v2011, 4
      %v2014 = vshll.u32 %v1894, 16
      %v2016 = vrot.slane %v2014, 5
      %v2017 = vsel %vm586, %v2012, %v2016
      %v2018 = vshrl.u32 %v1894, 16
      %v2020 = vrot.slane %v2018, 4
      %v2021 = vor.u32 %v2020, %v2016
      %v2022 = vrot.slane %v2021, 4
      %v2024 = vshll.u32 %v1895, 16
      %v2026 = vrot.slane %v2024, 5
      %v2027 = vsel %vm586, %v2022, %v2026
      %v2029 = vshrl.u32 %v1896, 16
      %v2031 = vrot.slane %v2029, 4
      %v2032 = vshll.u32 %v1896, 16
      %v2034 = vrot.slane %v2032, 5
      %v2035 = vor.u32 %v2031, %v2034
      %v2036 = vrot.slane %v2035, 4
      %v2038 = vshll.u32 %v1897, 16
      %v2040 = vrot.slane %v2038, 5
      %v2041 = vsel %vm586, %v2036, %v2040
      %v2042 = vshrl.u32 %v1897, 16
      %v2044 = vrot.slane %v2042, 4
      %v2045 = vor.u32 %v2044, %v2040
      %v2046 = vrot.slane %v2045, 4
      %v2048 = vshll.u32 %v1898, 16
      %v2050 = vrot.slane %v2048, 5
      %v2051 = vsel %vm586, %v2046, %v2050
      %v2053 = vshrl.u32 %v1899, 16
      %v2055 = vrot.slane %v2053, 4
      %v2056 = vshll.u32 %v1899, 16
      %v2058 = vrot.slane %v2056, 5
      %v2059 = vor.u32 %v2055, %v2058
      %v2060 = vrot.slane %v2059, 4
      %v2062 = vshll.u32 %v1900, 16
      %v2064 = vrot.slane %v2062, 5
      %v2065 = vsel %vm586, %v2060, %v2064
      %v2066 = vshrl.u32 %v1900, 16
      %v2068 = vrot.slane %v2066, 4
      %v2069 = vor.u32 %v2068, %v2064
      %v2070 = vrot.slane %v2069, 4
      %v2072 = vshll.u32 %v1901, 16
      %v2074 = vrot.slane %v2072, 5
      %v2075 = vsel %vm586, %v2070, %v2074
      %v2077 = vshrl.u32 %v1902, 16
      %v2079 = vrot.slane %v2077, 4
      %v2080 = vshll.u32 %v1902, 16
      %v2082 = vrot.slane %v2080, 5
      %v2083 = vor.u32 %v2079, %v2082
      %v2084 = vrot.slane %v2083, 4
      %v2086 = vshll.u32 %v1903, 16
      %v2088 = vrot.slane %v2086, 5
      %v2089 = vsel %vm586, %v2084, %v2088
      %v2090 = vshrl.u32 %v1903, 16
      %v2092 = vrot.slane %v2090, 4
      %v2093 = vor.u32 %v2092, %v2088
      %v2094 = vrot.slane %v2093, 4
      %v2096 = vshll.u32 %v1904, 16
      %v2098 = vrot.slane %v2096, 5
      %v2099 = vsel %vm586, %v2094, %v2098
      %v2101 = vshrl.u32 %v1905, 16
      %v2103 = vrot.slane %v2101, 4
      %v2104 = vshll.u32 %v1905, 16
      %v2106 = vrot.slane %v2104, 5
      %v2107 = vor.u32 %v2103, %v2106
      %v2108 = vrot.slane %v2107, 4
      %v2110 = vshll.u32 %v1906, 16
      %v2112 = vrot.slane %v2110, 5
      %v2113 = vsel %vm586, %v2108, %v2112
      %v2114 = vshrl.u32 %v1906, 16
      %v2116 = vrot.slane %v2114, 4
      %v2117 = vor.u32 %v2116, %v2112
      %v2118 = vrot.slane %v2117, 4
      %v2120 = vshll.u32 %v1907, 16
      %v2122 = vrot.slane %v2120, 5
      %v2123 = vsel %vm586, %v2118, %v2122
      %v2125 = vshrl.u32 %v1908, 16
      %v2127 = vrot.slane %v2125, 4
      %v2128 = vshll.u32 %v1908, 16
      %v2130 = vrot.slane %v2128, 5
      %v2131 = vor.u32 %v2127, %v2130
      %v2132 = vrot.slane %v2131, 4
      %v2134 = vshll.u32 %v1909, 16
      %v2136 = vrot.slane %v2134, 5
      %v2137 = vsel %vm586, %v2132, %v2136
      %v2138 = vshrl.u32 %v1909, 16
      %v2140 = vrot.slane %v2138, 4
      %v2141 = vor.u32 %v2140, %v2136
      %v2142 = vrot.slane %v2141, 4
      %v2144 = vshll.u32 %v1910, 16
      %v2146 = vrot.slane %v2144, 5
      %v2147 = vsel %vm586, %v2142, %v2146
      %v2149 = vshrl.u32 %v1911, 16
      %v2151 = vrot.slane %v2149, 4
      %v2152 = vshll.u32 %v1911, 16
      %v2154 = vrot.slane %v2152, 5
      %v2155 = vor.u32 %v2151, %v2154
      %v2156 = vrot.slane %v2155, 4
      %v2158 = vshll.u32 %v1912, 16
      %v2160 = vrot.slane %v2158, 5
      %v2161 = vsel %vm586, %v2156, %v2160
      %v2162 = vshrl.u32 %v1912, 16
      %v2164 = vrot.slane %v2162, 4
      %v2165 = vor.u32 %v2164, %v2160
      %v2166 = vrot.slane %v2165, 4
      %v2168 = vshll.u32 %v1913, 16
      %v2170 = vrot.slane %v2168, 5
      %v2171 = vsel %vm586, %v2166, %v2170
      %v2173 = vshrl.u32 %v1914, 16
      %v2175 = vrot.slane %v2173, 4
      %v2176 = vshll.u32 %v1914, 16
      %v2178 = vrot.slane %v2176, 5
      %v2179 = vor.u32 %v2175, %v2178
      %v2180 = vrot.slane %v2179, 4
      %v2182 = vshll.u32 %v1915, 16
      %v2184 = vrot.slane %v2182, 5
      %v2185 = vsel %vm586, %v2180, %v2184
      %v2186 = vshrl.u32 %v1915, 16
      %v2188 = vrot.slane %v2186, 4
      %v2189 = vor.u32 %v2188, %v2184
      %v2190 = vrot.slane %v2189, 4
      %v2192 = vshll.u32 %v1916, 16
      %v2194 = vrot.slane %v2192, 5
      %v2195 = vsel %vm586, %v2190, %v2194
      %v2197 = vshrl.u32 %v1917, 16
      %v2199 = vrot.slane %v2197, 4
      %v2200 = vshll.u32 %v1917, 16
      %v2202 = vrot.slane %v2200, 5
      %v2203 = vor.u32 %v2199, %v2202
      %v2204 = vrot.slane %v2203, 4
      %v2206 = vshll.u32 %v1918, 16
      %v2208 = vrot.slane %v2206, 5
      %v2209 = vsel %vm586, %v2204, %v2208
      %v2210 = vshrl.u32 %v1918, 16
      %v2212 = vrot.slane %v2210, 4
      %v2213 = vor.u32 %v2212, %v2208
      %v2214 = vrot.slane %v2213, 4
      %v2216 = vshll.u32 %v1919, 16
      %v2218 = vrot.slane %v2216, 5
      %v2219 = vsel %vm586, %v2214, %v2218
      %v2221 = vshrl.u32 %v1920, 16
      %v2223 = vrot.slane %v2221, 4
      %v2224 = vshll.u32 %v1920, 16
      %v2226 = vrot.slane %v2224, 5
      %v2227 = vor.u32 %v2223, %v2226
      %v2228 = vrot.slane %v2227, 4
      %v2230 = vshll.u32 %v1921, 16
      %v2232 = vrot.slane %v2230, 5
      %v2233 = vsel %vm586, %v2228, %v2232
      %v2234 = vshrl.u32 %v1921, 16
      %v2236 = vrot.slane %v2234, 4
      %v2237 = vor.u32 %v2236, %v2232
      %v2238 = vrot.slane %v2237, 4
      %v2240 = vshll.u32 %v1922, 16
      %v2242 = vrot.slane %v2240, 5
      %v2243 = vsel %vm586, %v2238, %v2242
      %v2245 = vshrl.u32 %v1923, 16
      %v2247 = vrot.slane %v2245, 4
      %v2248 = vshll.u32 %v1923, 16
      %v2250 = vrot.slane %v2248, 5
      %v2251 = vor.u32 %v2247, %v2250
      %v2252 = vrot.slane %v2251, 4
      %v2254 = vshll.u32 %v1924, 16
      %v2256 = vrot.slane %v2254, 5
      %v2257 = vsel %vm586, %v2252, %v2256
      %v2258 = vshrl.u32 %v1924, 16
      %v2260 = vrot.slane %v2258, 4
      %v2261 = vor.u32 %v2260, %v2256
      %v2262 = vrot.slane %v2261, 4
      %v2264 = vshll.u32 %v1925, 16
      %v2266 = vrot.slane %v2264, 5
      %v2267 = vsel %vm586, %v2262, %v2266
      %v2269 = vshrl.u32 %v1926, 16
      %v2271 = vrot.slane %v2269, 4
      %v2272 = vshll.u32 %v1926, 16
      %v2274 = vrot.slane %v2272, 5
      %v2275 = vor.u32 %v2271, %v2274
      %v2276 = vrot.slane %v2275, 4
      %v2278 = vshll.u32 %v1927, 16
      %v2280 = vrot.slane %v2278, 5
      %v2281 = vsel %vm586, %v2276, %v2280
      %v2282 = vshrl.u32 %v1927, 16
      %v2284 = vrot.slane %v2282, 4
      %v2285 = vor.u32 %v2284, %v2280
      %v2286 = vrot.slane %v2285, 4
      %v2288 = vshll.u32 %v1928, 16
      %v2290 = vrot.slane %v2288, 5
      %v2291 = vsel %vm586, %v2286, %v2290
      %v2293 = vshrl.u32 %v1929, 16
      %v2295 = vrot.slane %v2293, 4
      %v2296 = vshll.u32 %v1929, 16
      %v2298 = vrot.slane %v2296, 5
      %v2299 = vor.u32 %v2295, %v2298
      %v2300 = vrot.slane %v2299, 4
      %v2302 = vshll.u32 %v1930, 16
      %v2304 = vrot.slane %v2302, 5
      %v2305 = vsel %vm586, %v2300, %v2304
      %v2306 = vshrl.u32 %v1930, 16
      %v2308 = vrot.slane %v2306, 4
      %v2309 = vor.u32 %v2308, %v2304
      %v2310 = vrot.slane %v2309, 4
      %v2312 = vshll.u32 %v1931, 16
      %v2314 = vrot.slane %v2312, 5
      %v2315 = vsel %vm586, %v2310, %v2314
      %s2316 = scalar_lea.vmem %s223, 8
      %v2317 = vld [vmem:[%s2316] sm:$0x3]
      %v2318 = vunpack.c.l.b16 %v1945
      %v2319 = vunpack.c.l.b16 %v1955
      %v2320 = vunpack.c.l.b16 %v1969
      %v2321 = vunpack.c.l.b16 %v1979
      %v2322 = vunpack.c.l.b16 %v1993
      %v2323 = vunpack.c.l.b16 %v2003
      %v2324 = vunpack.c.l.b16 %v2017
      %v2325 = vunpack.c.l.b16 %v2027
      %v2326 = vunpack.c.l.b16 %v2041
      %v2327 = vunpack.c.l.b16 %v2051
      %v2328 = vunpack.c.l.b16 %v2065
      %v2329 = vunpack.c.l.b16 %v2075
      %v2330 = vunpack.c.l.b16 %v2089
      %v2331 = vunpack.c.l.b16 %v2099
      %v2332 = vunpack.c.l.b16 %v2113
      %v2333 = vunpack.c.l.b16 %v2123
      %v2334 = vunpack.c.l.b16 %v2137
      %v2335 = vunpack.c.l.b16 %v2147
      %v2336 = vunpack.c.l.b16 %v2161
      %v2337 = vunpack.c.l.b16 %v2171
      %v2338 = vunpack.c.l.b16 %v2185
      %v2339 = vunpack.c.l.b16 %v2195
      %v2340 = vunpack.c.l.b16 %v2209
      %v2341 = vunpack.c.l.b16 %v2219
      %v2342 = vunpack.c.l.b16 %v2233
      %v2343 = vunpack.c.l.b16 %v2243
      %v2344 = vunpack.c.l.b16 %v2257
      %v2345 = vunpack.c.l.b16 %v2267
      %v2346 = vunpack.c.l.b16 %v2281
      %v2347 = vunpack.c.l.b16 %v2291
      %v2348 = vunpack.c.l.b16 %v2305
      %v2349 = vunpack.c.l.b16 %v2315
      %v2350 = vpack.c.b16 %v2319, %v2318
      %v2351 = vpack.c.b16 %v2321, %v2320
      %v2352 = vpack.c.b16 %v2323, %v2322
      %v2353 = vpack.c.b16 %v2325, %v2324
      %v2354 = vpack.c.b16 %v2327, %v2326
      %v2355 = vpack.c.b16 %v2329, %v2328
      %v2356 = vpack.c.b16 %v2331, %v2330
      %v2357 = vpack.c.b16 %v2333, %v2332
      %v2358 = vpack.c.b16 %v2335, %v2334
      %v2359 = vpack.c.b16 %v2337, %v2336
      %v2360 = vpack.c.b16 %v2339, %v2338
      %v2361 = vpack.c.b16 %v2341, %v2340
      %v2362 = vpack.c.b16 %v2343, %v2342
      %v2363 = vpack.c.b16 %v2345, %v2344
      %v2364 = vpack.c.b16 %v2347, %v2346
      %v2365 = vpack.c.b16 %v2349, %v2348
      %v2367 = vsel %vm362, %v2350, 0
      %v2370 = vsel %vm362, %v2351, 0
      %v2373 = vsel %vm362, %v2352, 0
      %v2376 = vsel %vm362, %v2353, 0
      %v2379 = vsel %vm362, %v2354, 0
      %v2382 = vsel %vm362, %v2355, 0
      %v2385 = vsel %vm362, %v2356, 0
      %v2388 = vsel %vm362, %v2357, 0
      %v2391 = vsel %vm362, %v2358, 0
      %v2394 = vsel %vm362, %v2359, 0
      %v2397 = vsel %vm362, %v2360, 0
      %v2400 = vsel %vm362, %v2361, 0
      %v2403 = vsel %vm362, %v2362, 0
      %v2406 = vsel %vm362, %v2363, 0
      %v2409 = vsel %vm362, %v2364, 0
      %v2412 = vsel %vm362, %v2365, 0
      %v2415 = vsel %vm411, %v2317, 0
      %2417 = vmatpush.bf16.msra.mxu0 0
      %2418 = vmatpush.bf16.msra.mxu0 0
      %2419 = vmatpush.bf16.msra.mxu0 0
      %2420 = vmatpush.bf16.msra.mxu0 0
      %2421 = vmatpush.bf16.msra.mxu0 0
      %2422 = vmatpush.bf16.msra.mxu0 0
      %2423 = vmatpush.bf16.msra.mxu0 0
      %2424 = vmatpush.bf16.msra.mxu0 %v2415
      %2425 = vmatmul.bf16.gmra.mxu0 %v2367
      %v2426 = vpop.f32.mrf.mxu0
      %v2427 = vadd.f32 0.0, %v2426
      %v2428 = vpop.f32.mrf.mxu0
      %v2429 = vadd.f32 0.0, %v2428
      %2430 = vmatmul.bf16.gmra.mxu0 %v2370
      %v2431 = vpop.f32.mrf.mxu0
      %v2432 = vadd.f32 0.0, %v2431
      %v2433 = vpop.f32.mrf.mxu0
      %v2434 = vadd.f32 0.0, %v2433
      %2435 = vmatmul.bf16.gmra.mxu0 %v2373
      %v2436 = vpop.f32.mrf.mxu0
      %v2437 = vadd.f32 0.0, %v2436
      %v2438 = vpop.f32.mrf.mxu0
      %v2439 = vadd.f32 0.0, %v2438
      %2440 = vmatmul.bf16.gmra.mxu0 %v2376
      %v2441 = vpop.f32.mrf.mxu0
      %v2442 = vadd.f32 0.0, %v2441
      %v2443 = vpop.f32.mrf.mxu0
      %v2444 = vadd.f32 0.0, %v2443
      %2445 = vmatmul.bf16.gmra.mxu0 %v2379
      %v2446 = vpop.f32.mrf.mxu0
      %v2447 = vadd.f32 0.0, %v2446
      %v2448 = vpop.f32.mrf.mxu0
      %v2449 = vadd.f32 0.0, %v2448
      %2450 = vmatmul.bf16.gmra.mxu0 %v2382
      %v2451 = vpop.f32.mrf.mxu0
      %v2452 = vadd.f32 0.0, %v2451
      %v2453 = vpop.f32.mrf.mxu0
      %v2454 = vadd.f32 0.0, %v2453
      %2455 = vmatmul.bf16.gmra.mxu0 %v2385
      %v2456 = vpop.f32.mrf.mxu0
      %v2457 = vadd.f32 0.0, %v2456
      %v2458 = vpop.f32.mrf.mxu0
      %v2459 = vadd.f32 0.0, %v2458
      %2460 = vmatmul.bf16.gmra.mxu0 %v2388
      %v2461 = vpop.f32.mrf.mxu0
      %v2462 = vadd.f32 0.0, %v2461
      %v2463 = vpop.f32.mrf.mxu0
      %v2464 = vadd.f32 0.0, %v2463
      %2465 = vmatmul.bf16.gmra.mxu0 %v2391
      %v2466 = vpop.f32.mrf.mxu0
      %v2467 = vadd.f32 0.0, %v2466
      %v2468 = vpop.f32.mrf.mxu0
      %v2469 = vadd.f32 0.0, %v2468
      %2470 = vmatmul.bf16.gmra.mxu0 %v2394
      %v2471 = vpop.f32.mrf.mxu0
      %v2472 = vadd.f32 0.0, %v2471
      %v2473 = vpop.f32.mrf.mxu0
      %v2474 = vadd.f32 0.0, %v2473
      %2475 = vmatmul.bf16.gmra.mxu0 %v2397
      %v2476 = vpop.f32.mrf.mxu0
      %v2477 = vadd.f32 0.0, %v2476
      %v2478 = vpop.f32.mrf.mxu0
      %v2479 = vadd.f32 0.0, %v2478
      %2480 = vmatmul.bf16.gmra.mxu0 %v2400
      %v2481 = vpop.f32.mrf.mxu0
      %v2482 = vadd.f32 0.0, %v2481
      %v2483 = vpop.f32.mrf.mxu0
      %v2484 = vadd.f32 0.0, %v2483
      %2485 = vmatmul.bf16.gmra.mxu0 %v2403
      %v2486 = vpop.f32.mrf.mxu0
      %v2487 = vadd.f32 0.0, %v2486
      %v2488 = vpop.f32.mrf.mxu0
      %v2489 = vadd.f32 0.0, %v2488
      %2490 = vmatmul.bf16.gmra.mxu0 %v2406
      %v2491 = vpop.f32.mrf.mxu0
      %v2492 = vadd.f32 0.0, %v2491
      %v2493 = vpop.f32.mrf.mxu0
      %v2494 = vadd.f32 0.0, %v2493
      %2495 = vmatmul.bf16.gmra.mxu0 %v2409
      %v2496 = vpop.f32.mrf.mxu0
      %v2497 = vadd.f32 0.0, %v2496
      %v2498 = vpop.f32.mrf.mxu0
      %v2499 = vadd.f32 0.0, %v2498
      %2500 = vmatmul.bf16.gmra.mxu0 %v2412
      %v2501 = vpop.f32.mrf.mxu0
      %v2502 = vadd.f32 0.0, %v2501
      %v2503 = vpop.f32.mrf.mxu0
      %v2504 = vadd.f32 0.0, %v2503
      %2505 = vdwg.mxu0
      %v2506 = vadd.f32 %v1852, %v2427
      %v2507 = vadd.f32 %v1853, %v2429
      %v2508 = vadd.f32 %v1854, %v2432
      %v2509 = vadd.f32 %v1855, %v2434
      %v2510 = vadd.f32 %v1856, %v2437
      %v2511 = vadd.f32 %v1857, %v2439
      %v2512 = vadd.f32 %v1858, %v2442
      %v2513 = vadd.f32 %v1859, %v2444
      %v2514 = vadd.f32 %v1860, %v2447
      %v2515 = vadd.f32 %v1861, %v2449
      %v2516 = vadd.f32 %v1862, %v2452
      %v2517 = vadd.f32 %v1863, %v2454
      %v2518 = vadd.f32 %v1864, %v2457
      %v2519 = vadd.f32 %v1865, %v2459
      %v2520 = vadd.f32 %v1866, %v2462
      %v2521 = vadd.f32 %v1867, %v2464
      %v2522 = vadd.f32 %v1868, %v2467
      %v2523 = vadd.f32 %v1869, %v2469
      %v2524 = vadd.f32 %v1870, %v2472
      %v2525 = vadd.f32 %v1871, %v2474
      %v2526 = vadd.f32 %v1872, %v2477
      %v2527 = vadd.f32 %v1873, %v2479
      %v2528 = vadd.f32 %v1874, %v2482
      %v2529 = vadd.f32 %v1875, %v2484
      %v2530 = vadd.f32 %v1876, %v2487
      %v2531 = vadd.f32 %v1877, %v2489
      %v2532 = vadd.f32 %v1878, %v2492
      %v2533 = vadd.f32 %v1879, %v2494
      %v2534 = vadd.f32 %v1880, %v2497
      %v2535 = vadd.f32 %v1881, %v2499
      %v2536 = vadd.f32 %v1882, %v2502
      %v2537 = vadd.f32 %v1883, %v2504
      %v2538 = vld [vmem:[%s1597] sm:$0xe]
      %v2539 = vld [vmem:[%s1597 + $0xc] sm:$0xe]
      %v2540 = vld [vmem:[%s1597 + $0x18] sm:$0xe]
      %v2541 = vld [vmem:[%s1597 + $0x24] sm:$0xe]
      %v2542 = vld [vmem:[%s1597 + $0x30] sm:$0xe]
      %v2543 = vld [vmem:[%s1597 + $0x3c] sm:$0xe]
      %v2544 = vld [vmem:[%s1597 + $0x48] sm:$0xe]
      %v2545 = vld [vmem:[%s1597 + $0x54] sm:$0xe]
      %v2546 = vld [vmem:[%s1597 + $0x60] sm:$0xe]
      %v2547 = vld [vmem:[%s1597 + $0x6c] sm:$0xe]
      %v2548 = vld [vmem:[%s1597 + $0x78] sm:$0xe]
      %v2549 = vld [vmem:[%s1597 + $0x84] sm:$0xe]
      %v2550 = vld [vmem:[%s1597 + $0x90] sm:$0xe]
      %v2551 = vld [vmem:[%s1597 + $0x9c] sm:$0xe]
      %v2552 = vld [vmem:[%s1597 + $0xa8] sm:$0xe]
      %v2553 = vld [vmem:[%s1597 + $0xb4] sm:$0xe]
      %v2602 = vrot.slane %v2538, 5
      %v2603 = vrot.slane %v2602, 4
      %v2604 = vrot.slane %v1885, 5
      %v2605 = vsel %vm1259, %v2603, %v2604
      %v2606 = vrot.slane %v2604, 4
      %v2607 = vrot.slane %v1886, 5
      %v2608 = vsel %vm1259, %v2606, %v2607
      %v2609 = vrot.slane %v2539, 5
      %v2610 = vrot.slane %v2609, 4
      %v2611 = vrot.slane %v1888, 5
      %v2612 = vsel %vm1259, %v2610, %v2611
      %v2613 = vrot.slane %v2611, 4
      %v2614 = vrot.slane %v1889, 5
      %v2615 = vsel %vm1259, %v2613, %v2614
      %v2616 = vrot.slane %v2540, 5
      %v2617 = vrot.slane %v2616, 4
      %v2618 = vrot.slane %v1891, 5
      %v2619 = vsel %vm1259, %v2617, %v2618
      %v2620 = vrot.slane %v2618, 4
      %v2621 = vrot.slane %v1892, 5
      %v2622 = vsel %vm1259, %v2620, %v2621
      %v2623 = vrot.slane %v2541, 5
      %v2624 = vrot.slane %v2623, 4
      %v2625 = vrot.slane %v1894, 5
      %v2626 = vsel %vm1259, %v2624, %v2625
      %v2627 = vrot.slane %v2625, 4
      %v2628 = vrot.slane %v1895, 5
      %v2629 = vsel %vm1259, %v2627, %v2628
      %v2630 = vrot.slane %v2542, 5
      %v2631 = vrot.slane %v2630, 4
      %v2632 = vrot.slane %v1897, 5
      %v2633 = vsel %vm1259, %v2631, %v2632
      %v2634 = vrot.slane %v2632, 4
      %v2635 = vrot.slane %v1898, 5
      %v2636 = vsel %vm1259, %v2634, %v2635
      %v2637 = vrot.slane %v2543, 5
      %v2638 = vrot.slane %v2637, 4
      %v2639 = vrot.slane %v1900, 5
      %v2640 = vsel %vm1259, %v2638, %v2639
      %v2641 = vrot.slane %v2639, 4
      %v2642 = vrot.slane %v1901, 5
      %v2643 = vsel %vm1259, %v2641, %v2642
      %v2644 = vrot.slane %v2544, 5
      %v2645 = vrot.slane %v2644, 4
      %v2646 = vrot.slane %v1903, 5
      %v2647 = vsel %vm1259, %v2645, %v2646
      %v2648 = vrot.slane %v2646, 4
      %v2649 = vrot.slane %v1904, 5
      %v2650 = vsel %vm1259, %v2648, %v2649
      %v2651 = vrot.slane %v2545, 5
      %v2652 = vrot.slane %v2651, 4
      %v2653 = vrot.slane %v1906, 5
      %v2654 = vsel %vm1259, %v2652, %v2653
      %v2655 = vrot.slane %v2653, 4
      %v2656 = vrot.slane %v1907, 5
      %v2657 = vsel %vm1259, %v2655, %v2656
      %v2658 = vrot.slane %v2546, 5
      %v2659 = vrot.slane %v2658, 4
      %v2660 = vrot.slane %v1909, 5
      %v2661 = vsel %vm1259, %v2659, %v2660
      %v2662 = vrot.slane %v2660, 4
      %v2663 = vrot.slane %v1910, 5
      %v2664 = vsel %vm1259, %v2662, %v2663
      %v2665 = vrot.slane %v2547, 5
      %v2666 = vrot.slane %v2665, 4
      %v2667 = vrot.slane %v1912, 5
      %v2668 = vsel %vm1259, %v2666, %v2667
      %v2669 = vrot.slane %v2667, 4
      %v2670 = vrot.slane %v1913, 5
      %v2671 = vsel %vm1259, %v2669, %v2670
      %v2672 = vrot.slane %v2548, 5
      %v2673 = vrot.slane %v2672, 4
      %v2674 = vrot.slane %v1915, 5
      %v2675 = vsel %vm1259, %v2673, %v2674
      %v2676 = vrot.slane %v2674, 4
      %v2677 = vrot.slane %v1916, 5
      %v2678 = vsel %vm1259, %v2676, %v2677
      %v2679 = vrot.slane %v2549, 5
      %v2680 = vrot.slane %v2679, 4
      %v2681 = vrot.slane %v1918, 5
      %v2682 = vsel %vm1259, %v2680, %v2681
      %v2683 = vrot.slane %v2681, 4
      %v2684 = vrot.slane %v1919, 5
      %v2685 = vsel %vm1259, %v2683, %v2684
      %v2686 = vrot.slane %v2550, 5
      %v2687 = vrot.slane %v2686, 4
      %v2688 = vrot.slane %v1921, 5
      %v2689 = vsel %vm1259, %v2687, %v2688
      %v2690 = vrot.slane %v2688, 4
      %v2691 = vrot.slane %v1922, 5
      %v2692 = vsel %vm1259, %v2690, %v2691
      %v2693 = vrot.slane %v2551, 5
      %v2694 = vrot.slane %v2693, 4
      %v2695 = vrot.slane %v1924, 5
      %v2696 = vsel %vm1259, %v2694, %v2695
      %v2697 = vrot.slane %v2695, 4
      %v2698 = vrot.slane %v1925, 5
      %v2699 = vsel %vm1259, %v2697, %v2698
      %v2700 = vrot.slane %v2552, 5
      %v2701 = vrot.slane %v2700, 4
      %v2702 = vrot.slane %v1927, 5
      %v2703 = vsel %vm1259, %v2701, %v2702
      %v2704 = vrot.slane %v2702, 4
      %v2705 = vrot.slane %v1928, 5
      %v2706 = vsel %vm1259, %v2704, %v2705
      %v2707 = vrot.slane %v2553, 5
      %v2708 = vrot.slane %v2707, 4
      %v2709 = vrot.slane %v1930, 5
      %v2710 = vsel %vm1259, %v2708, %v2709
      %v2711 = vrot.slane %v2709, 4
      %v2712 = vrot.slane %v1931, 5
      %v2713 = vsel %vm1259, %v2711, %v2712
      %s2714 = scalar_lea.vmem %s223, 10
      %v2715 = vld [vmem:[%s2714] sm:$0x3]
      %v2716 = vunpack.c.l.b16 %v2605
      %v2717 = vunpack.c.l.b16 %v2608
      %v2718 = vunpack.c.l.b16 %v2612
      %v2719 = vunpack.c.l.b16 %v2615
      %v2720 = vunpack.c.l.b16 %v2619
      %v2721 = vunpack.c.l.b16 %v2622
      %v2722 = vunpack.c.l.b16 %v2626
      %v2723 = vunpack.c.l.b16 %v2629
      %v2724 = vunpack.c.l.b16 %v2633
      %v2725 = vunpack.c.l.b16 %v2636
      %v2726 = vunpack.c.l.b16 %v2640
      %v2727 = vunpack.c.l.b16 %v2643
      %v2728 = vunpack.c.l.b16 %v2647
      %v2729 = vunpack.c.l.b16 %v2650
      %v2730 = vunpack.c.l.b16 %v2654
      %v2731 = vunpack.c.l.b16 %v2657
      %v2732 = vunpack.c.l.b16 %v2661
      %v2733 = vunpack.c.l.b16 %v2664
      %v2734 = vunpack.c.l.b16 %v2668
      %v2735 = vunpack.c.l.b16 %v2671
      %v2736 = vunpack.c.l.b16 %v2675
      %v2737 = vunpack.c.l.b16 %v2678
      %v2738 = vunpack.c.l.b16 %v2682
      %v2739 = vunpack.c.l.b16 %v2685
      %v2740 = vunpack.c.l.b16 %v2689
      %v2741 = vunpack.c.l.b16 %v2692
      %v2742 = vunpack.c.l.b16 %v2696
      %v2743 = vunpack.c.l.b16 %v2699
      %v2744 = vunpack.c.l.b16 %v2703
      %v2745 = vunpack.c.l.b16 %v2706
      %v2746 = vunpack.c.l.b16 %v2710
      %v2747 = vunpack.c.l.b16 %v2713
      %v2748 = vpack.c.b16 %v2717, %v2716
      %v2749 = vpack.c.b16 %v2719, %v2718
      %v2750 = vpack.c.b16 %v2721, %v2720
      %v2751 = vpack.c.b16 %v2723, %v2722
      %v2752 = vpack.c.b16 %v2725, %v2724
      %v2753 = vpack.c.b16 %v2727, %v2726
      %v2754 = vpack.c.b16 %v2729, %v2728
      %v2755 = vpack.c.b16 %v2731, %v2730
      %v2756 = vpack.c.b16 %v2733, %v2732
      %v2757 = vpack.c.b16 %v2735, %v2734
      %v2758 = vpack.c.b16 %v2737, %v2736
      %v2759 = vpack.c.b16 %v2739, %v2738
      %v2760 = vpack.c.b16 %v2741, %v2740
      %v2761 = vpack.c.b16 %v2743, %v2742
      %v2762 = vpack.c.b16 %v2745, %v2744
      %v2763 = vpack.c.b16 %v2747, %v2746
      %v2765 = vsel %vm362, %v2748, 0
      %v2768 = vsel %vm362, %v2749, 0
      %v2771 = vsel %vm362, %v2750, 0
      %v2774 = vsel %vm362, %v2751, 0
      %v2777 = vsel %vm362, %v2752, 0
      %v2780 = vsel %vm362, %v2753, 0
      %v2783 = vsel %vm362, %v2754, 0
      %v2786 = vsel %vm362, %v2755, 0
      %v2789 = vsel %vm362, %v2756, 0
      %v2792 = vsel %vm362, %v2757, 0
      %v2795 = vsel %vm362, %v2758, 0
      %v2798 = vsel %vm362, %v2759, 0
      %v2801 = vsel %vm362, %v2760, 0
      %v2804 = vsel %vm362, %v2761, 0
      %v2807 = vsel %vm362, %v2762, 0
      %v2810 = vsel %vm362, %v2763, 0
      %v2813 = vsel %vm411, %v2715, 0
      %2815 = vmatpush.bf16.msra.mxu0 0
      %2816 = vmatpush.bf16.msra.mxu0 0
      %2817 = vmatpush.bf16.msra.mxu0 0
      %2818 = vmatpush.bf16.msra.mxu0 0
      %2819 = vmatpush.bf16.msra.mxu0 0
      %2820 = vmatpush.bf16.msra.mxu0 0
      %2821 = vmatpush.bf16.msra.mxu0 0
      %2822 = vmatpush.bf16.msra.mxu0 %v2813
      %2823 = vmatmul.bf16.gmra.mxu0 %v2765
      %v2824 = vpop.f32.mrf.mxu0
      %v2825 = vadd.f32 0.0, %v2824
      %v2826 = vpop.f32.mrf.mxu0
      %v2827 = vadd.f32 0.0, %v2826
      %2828 = vmatmul.bf16.gmra.mxu0 %v2768
      %v2829 = vpop.f32.mrf.mxu0
      %v2830 = vadd.f32 0.0, %v2829
      %v2831 = vpop.f32.mrf.mxu0
      %v2832 = vadd.f32 0.0, %v2831
      %2833 = vmatmul.bf16.gmra.mxu0 %v2771
      %v2834 = vpop.f32.mrf.mxu0
      %v2835 = vadd.f32 0.0, %v2834
      %v2836 = vpop.f32.mrf.mxu0
      %v2837 = vadd.f32 0.0, %v2836
      %2838 = vmatmul.bf16.gmra.mxu0 %v2774
      %v2839 = vpop.f32.mrf.mxu0
      %v2840 = vadd.f32 0.0, %v2839
      %v2841 = vpop.f32.mrf.mxu0
      %v2842 = vadd.f32 0.0, %v2841
      %2843 = vmatmul.bf16.gmra.mxu0 %v2777
      %v2844 = vpop.f32.mrf.mxu0
      %v2845 = vadd.f32 0.0, %v2844
      %v2846 = vpop.f32.mrf.mxu0
      %v2847 = vadd.f32 0.0, %v2846
      %2848 = vmatmul.bf16.gmra.mxu0 %v2780
      %v2849 = vpop.f32.mrf.mxu0
      %v2850 = vadd.f32 0.0, %v2849
      %v2851 = vpop.f32.mrf.mxu0
      %v2852 = vadd.f32 0.0, %v2851
      %2853 = vmatmul.bf16.gmra.mxu0 %v2783
      %v2854 = vpop.f32.mrf.mxu0
      %v2855 = vadd.f32 0.0, %v2854
      %v2856 = vpop.f32.mrf.mxu0
      %v2857 = vadd.f32 0.0, %v2856
      %2858 = vmatmul.bf16.gmra.mxu0 %v2786
      %v2859 = vpop.f32.mrf.mxu0
      %v2860 = vadd.f32 0.0, %v2859
      %v2861 = vpop.f32.mrf.mxu0
      %v2862 = vadd.f32 0.0, %v2861
      %2863 = vmatmul.bf16.gmra.mxu0 %v2789
      %v2864 = vpop.f32.mrf.mxu0
      %v2865 = vadd.f32 0.0, %v2864
      %v2866 = vpop.f32.mrf.mxu0
      %v2867 = vadd.f32 0.0, %v2866
      %2868 = vmatmul.bf16.gmra.mxu0 %v2792
      %v2869 = vpop.f32.mrf.mxu0
      %v2870 = vadd.f32 0.0, %v2869
      %v2871 = vpop.f32.mrf.mxu0
      %v2872 = vadd.f32 0.0, %v2871
      %2873 = vmatmul.bf16.gmra.mxu0 %v2795
      %v2874 = vpop.f32.mrf.mxu0
      %v2875 = vadd.f32 0.0, %v2874
      %v2876 = vpop.f32.mrf.mxu0
      %v2877 = vadd.f32 0.0, %v2876
      %2878 = vmatmul.bf16.gmra.mxu0 %v2798
      %v2879 = vpop.f32.mrf.mxu0
      %v2880 = vadd.f32 0.0, %v2879
      %v2881 = vpop.f32.mrf.mxu0
      %v2882 = vadd.f32 0.0, %v2881
      %2883 = vmatmul.bf16.gmra.mxu0 %v2801
      %v2884 = vpop.f32.mrf.mxu0
      %v2885 = vadd.f32 0.0, %v2884
      %v2886 = vpop.f32.mrf.mxu0
      %v2887 = vadd.f32 0.0, %v2886
      %2888 = vmatmul.bf16.gmra.mxu0 %v2804
      %v2889 = vpop.f32.mrf.mxu0
      %v2890 = vadd.f32 0.0, %v2889
      %v2891 = vpop.f32.mrf.mxu0
      %v2892 = vadd.f32 0.0, %v2891
      %2893 = vmatmul.bf16.gmra.mxu0 %v2807
      %v2894 = vpop.f32.mrf.mxu0
      %v2895 = vadd.f32 0.0, %v2894
      %v2896 = vpop.f32.mrf.mxu0
      %v2897 = vadd.f32 0.0, %v2896
      %2898 = vmatmul.bf16.gmra.mxu0 %v2810
      %v2899 = vpop.f32.mrf.mxu0
      %v2900 = vadd.f32 0.0, %v2899
      %v2901 = vpop.f32.mrf.mxu0
      %v2902 = vadd.f32 0.0, %v2901
      %2903 = vdwg.mxu0
      %v2904 = vadd.f32 %v2506, %v2825
      %v2905 = vadd.f32 %v2507, %v2827
      %v2906 = vadd.f32 %v2508, %v2830
      %v2907 = vadd.f32 %v2509, %v2832
      %v2908 = vadd.f32 %v2510, %v2835
      %v2909 = vadd.f32 %v2511, %v2837
      %v2910 = vadd.f32 %v2512, %v2840
      %v2911 = vadd.f32 %v2513, %v2842
      %v2912 = vadd.f32 %v2514, %v2845
      %v2913 = vadd.f32 %v2515, %v2847
      %v2914 = vadd.f32 %v2516, %v2850
      %v2915 = vadd.f32 %v2517, %v2852
      %v2916 = vadd.f32 %v2518, %v2855
      %v2917 = vadd.f32 %v2519, %v2857
      %v2918 = vadd.f32 %v2520, %v2860
      %v2919 = vadd.f32 %v2521, %v2862
      %v2920 = vadd.f32 %v2522, %v2865
      %v2921 = vadd.f32 %v2523, %v2867
      %v2922 = vadd.f32 %v2524, %v2870
      %v2923 = vadd.f32 %v2525, %v2872
      %v2924 = vadd.f32 %v2526, %v2875
      %v2925 = vadd.f32 %v2527, %v2877
      %v2926 = vadd.f32 %v2528, %v2880
      %v2927 = vadd.f32 %v2529, %v2882
      %v2928 = vadd.f32 %v2530, %v2885
      %v2929 = vadd.f32 %v2531, %v2887
      %v2930 = vadd.f32 %v2532, %v2890
      %v2931 = vadd.f32 %v2533, %v2892
      %v2932 = vadd.f32 %v2534, %v2895
      %v2933 = vadd.f32 %v2535, %v2897
      %v2934 = vadd.f32 %v2536, %v2900
      %v2935 = vadd.f32 %v2537, %v2902
      %s2936 = sadd.s32 %s241, 2
      %s2937 = smul.u32 %s2936, 3
      %s2938 = smul.addr %s2937, 4
      %s2939 = scalar_lea.vmem %s219, %s2938
      %v2940 = vld [vmem:[%s2939] sm:$0xf]
      %v2941 = vld [vmem:[%s2939 + $0x4] sm:$0xf]
      %v2942 = vld [vmem:[%s2939 + $0xc] sm:$0xf]
      %v2943 = vld [vmem:[%s2939 + $0x10] sm:$0xf]
      %v2944 = vld [vmem:[%s2939 + $0x18] sm:$0xf]
      %v2945 = vld [vmem:[%s2939 + $0x1c] sm:$0xf]
      %v2946 = vld [vmem:[%s2939 + $0x24] sm:$0xf]
      %v2947 = vld [vmem:[%s2939 + $0x28] sm:$0xf]
      %v2948 = vld [vmem:[%s2939 + $0x30] sm:$0xf]
      %v2949 = vld [vmem:[%s2939 + $0x34] sm:$0xf]
      %v2950 = vld [vmem:[%s2939 + $0x3c] sm:$0xf]
      %v2951 = vld [vmem:[%s2939 + $0x40] sm:$0xf]
      %v2952 = vld [vmem:[%s2939 + $0x48] sm:$0xf]
      %v2953 = vld [vmem:[%s2939 + $0x4c] sm:$0xf]
      %v2954 = vld [vmem:[%s2939 + $0x54] sm:$0xf]
      %v2955 = vld [vmem:[%s2939 + $0x58] sm:$0xf]
      %v2956 = vld [vmem:[%s2939 + $0x60] sm:$0xf]
      %v2957 = vld [vmem:[%s2939 + $0x64] sm:$0xf]
      %v2958 = vld [vmem:[%s2939 + $0x6c] sm:$0xf]
      %v2959 = vld [vmem:[%s2939 + $0x70] sm:$0xf]
      %v2960 = vld [vmem:[%s2939 + $0x78] sm:$0xf]
      %v2961 = vld [vmem:[%s2939 + $0x7c] sm:$0xf]
      %v2962 = vld [vmem:[%s2939 + $0x84] sm:$0xf]
      %v2963 = vld [vmem:[%s2939 + $0x88] sm:$0xf]
      %v2964 = vld [vmem:[%s2939 + $0x90] sm:$0xf]
      %v2965 = vld [vmem:[%s2939 + $0x94] sm:$0xf]
      %v2966 = vld [vmem:[%s2939 + $0x9c] sm:$0xf]
      %v2967 = vld [vmem:[%s2939 + $0xa0] sm:$0xf]
      %v2968 = vld [vmem:[%s2939 + $0xa8] sm:$0xf]
      %v2969 = vld [vmem:[%s2939 + $0xac] sm:$0xf]
      %v2970 = vld [vmem:[%s2939 + $0xb4] sm:$0xf]
      %v2971 = vld [vmem:[%s2939 + $0xb8] sm:$0xf]
      %s2972 = scalar_lea.vmem %s223, 12
      %v2973 = vld [vmem:[%s2972] sm:$0x3]
      %v3006 = vunpack.c.l.b16 %v2940
      %v3007 = vunpack.c.l.b16 %v2941
      %v3008 = vunpack.c.l.b16 %v2942
      %v3009 = vunpack.c.l.b16 %v2943
      %v3010 = vunpack.c.l.b16 %v2944
      %v3011 = vunpack.c.l.b16 %v2945
      %v3012 = vunpack.c.l.b16 %v2946
      %v3013 = vunpack.c.l.b16 %v2947
      %v3014 = vunpack.c.l.b16 %v2948
      %v3015 = vunpack.c.l.b16 %v2949
      %v3016 = vunpack.c.l.b16 %v2950
      %v3017 = vunpack.c.l.b16 %v2951
      %v3018 = vunpack.c.l.b16 %v2952
      %v3019 = vunpack.c.l.b16 %v2953
      %v3020 = vunpack.c.l.b16 %v2954
      %v3021 = vunpack.c.l.b16 %v2955
      %v3022 = vunpack.c.l.b16 %v2956
      %v3023 = vunpack.c.l.b16 %v2957
      %v3024 = vunpack.c.l.b16 %v2958
      %v3025 = vunpack.c.l.b16 %v2959
      %v3026 = vunpack.c.l.b16 %v2960
      %v3027 = vunpack.c.l.b16 %v2961
      %v3028 = vunpack.c.l.b16 %v2962
      %v3029 = vunpack.c.l.b16 %v2963
      %v3030 = vunpack.c.l.b16 %v2964
      %v3031 = vunpack.c.l.b16 %v2965
      %v3032 = vunpack.c.l.b16 %v2966
      %v3033 = vunpack.c.l.b16 %v2967
      %v3034 = vunpack.c.l.b16 %v2968
      %v3035 = vunpack.c.l.b16 %v2969
      %v3036 = vunpack.c.l.b16 %v2970
      %v3037 = vunpack.c.l.b16 %v2971
      %v3038 = vpack.c.b16 %v3007, %v3006
      %v3039 = vpack.c.b16 %v3009, %v3008
      %v3040 = vpack.c.b16 %v3011, %v3010
      %v3041 = vpack.c.b16 %v3013, %v3012
      %v3042 = vpack.c.b16 %v3015, %v3014
      %v3043 = vpack.c.b16 %v3017, %v3016
      %v3044 = vpack.c.b16 %v3019, %v3018
      %v3045 = vpack.c.b16 %v3021, %v3020
      %v3046 = vpack.c.b16 %v3023, %v3022
      %v3047 = vpack.c.b16 %v3025, %v3024
      %v3048 = vpack.c.b16 %v3027, %v3026
      %v3049 = vpack.c.b16 %v3029, %v3028
      %v3050 = vpack.c.b16 %v3031, %v3030
      %v3051 = vpack.c.b16 %v3033, %v3032
      %v3052 = vpack.c.b16 %v3035, %v3034
      %v3053 = vpack.c.b16 %v3037, %v3036
      %v3055 = vsel %vm362, %v3038, 0
      %v3058 = vsel %vm362, %v3039, 0
      %v3061 = vsel %vm362, %v3040, 0
      %v3064 = vsel %vm362, %v3041, 0
      %v3067 = vsel %vm362, %v3042, 0
      %v3070 = vsel %vm362, %v3043, 0
      %v3073 = vsel %vm362, %v3044, 0
      %v3076 = vsel %vm362, %v3045, 0
      %v3079 = vsel %vm362, %v3046, 0
      %v3082 = vsel %vm362, %v3047, 0
      %v3085 = vsel %vm362, %v3048, 0
      %v3088 = vsel %vm362, %v3049, 0
      %v3091 = vsel %vm362, %v3050, 0
      %v3094 = vsel %vm362, %v3051, 0
      %v3097 = vsel %vm362, %v3052, 0
      %v3100 = vsel %vm362, %v3053, 0
      %v3103 = vsel %vm411, %v2973, 0
      %3105 = vmatpush.bf16.msra.mxu0 0
      %3106 = vmatpush.bf16.msra.mxu0 0
      %3107 = vmatpush.bf16.msra.mxu0 0
      %3108 = vmatpush.bf16.msra.mxu0 0
      %3109 = vmatpush.bf16.msra.mxu0 0
      %3110 = vmatpush.bf16.msra.mxu0 0
      %3111 = vmatpush.bf16.msra.mxu0 0
      %3112 = vmatpush.bf16.msra.mxu0 %v3103
      %3113 = vmatmul.bf16.gmra.mxu0 %v3055
      %v3114 = vpop.f32.mrf.mxu0
      %v3115 = vadd.f32 0.0, %v3114
      %v3116 = vpop.f32.mrf.mxu0
      %v3117 = vadd.f32 0.0, %v3116
      %3118 = vmatmul.bf16.gmra.mxu0 %v3058
      %v3119 = vpop.f32.mrf.mxu0
      %v3120 = vadd.f32 0.0, %v3119
      %v3121 = vpop.f32.mrf.mxu0
      %v3122 = vadd.f32 0.0, %v3121
      %3123 = vmatmul.bf16.gmra.mxu0 %v3061
      %v3124 = vpop.f32.mrf.mxu0
      %v3125 = vadd.f32 0.0, %v3124
      %v3126 = vpop.f32.mrf.mxu0
      %v3127 = vadd.f32 0.0, %v3126
      %3128 = vmatmul.bf16.gmra.mxu0 %v3064
      %v3129 = vpop.f32.mrf.mxu0
      %v3130 = vadd.f32 0.0, %v3129
      %v3131 = vpop.f32.mrf.mxu0
      %v3132 = vadd.f32 0.0, %v3131
      %3133 = vmatmul.bf16.gmra.mxu0 %v3067
      %v3134 = vpop.f32.mrf.mxu0
      %v3135 = vadd.f32 0.0, %v3134
      %v3136 = vpop.f32.mrf.mxu0
      %v3137 = vadd.f32 0.0, %v3136
      %3138 = vmatmul.bf16.gmra.mxu0 %v3070
      %v3139 = vpop.f32.mrf.mxu0
      %v3140 = vadd.f32 0.0, %v3139
      %v3141 = vpop.f32.mrf.mxu0
      %v3142 = vadd.f32 0.0, %v3141
      %3143 = vmatmul.bf16.gmra.mxu0 %v3073
      %v3144 = vpop.f32.mrf.mxu0
      %v3145 = vadd.f32 0.0, %v3144
      %v3146 = vpop.f32.mrf.mxu0
      %v3147 = vadd.f32 0.0, %v3146
      %3148 = vmatmul.bf16.gmra.mxu0 %v3076
      %v3149 = vpop.f32.mrf.mxu0
      %v3150 = vadd.f32 0.0, %v3149
      %v3151 = vpop.f32.mrf.mxu0
      %v3152 = vadd.f32 0.0, %v3151
      %3153 = vmatmul.bf16.gmra.mxu0 %v3079
      %v3154 = vpop.f32.mrf.mxu0
      %v3155 = vadd.f32 0.0, %v3154
      %v3156 = vpop.f32.mrf.mxu0
      %v3157 = vadd.f32 0.0, %v3156
      %3158 = vmatmul.bf16.gmra.mxu0 %v3082
      %v3159 = vpop.f32.mrf.mxu0
      %v3160 = vadd.f32 0.0, %v3159
      %v3161 = vpop.f32.mrf.mxu0
      %v3162 = vadd.f32 0.0, %v3161
      %3163 = vmatmul.bf16.gmra.mxu0 %v3085
      %v3164 = vpop.f32.mrf.mxu0
      %v3165 = vadd.f32 0.0, %v3164
      %v3166 = vpop.f32.mrf.mxu0
      %v3167 = vadd.f32 0.0, %v3166
      %3168 = vmatmul.bf16.gmra.mxu0 %v3088
      %v3169 = vpop.f32.mrf.mxu0
      %v3170 = vadd.f32 0.0, %v3169
      %v3171 = vpop.f32.mrf.mxu0
      %v3172 = vadd.f32 0.0, %v3171
      %3173 = vmatmul.bf16.gmra.mxu0 %v3091
      %v3174 = vpop.f32.mrf.mxu0
      %v3175 = vadd.f32 0.0, %v3174
      %v3176 = vpop.f32.mrf.mxu0
      %v3177 = vadd.f32 0.0, %v3176
      %3178 = vmatmul.bf16.gmra.mxu0 %v3094
      %v3179 = vpop.f32.mrf.mxu0
      %v3180 = vadd.f32 0.0, %v3179
      %v3181 = vpop.f32.mrf.mxu0
      %v3182 = vadd.f32 0.0, %v3181
      %3183 = vmatmul.bf16.gmra.mxu0 %v3097
      %v3184 = vpop.f32.mrf.mxu0
      %v3185 = vadd.f32 0.0, %v3184
      %v3186 = vpop.f32.mrf.mxu0
      %v3187 = vadd.f32 0.0, %v3186
      %3188 = vmatmul.bf16.gmra.mxu0 %v3100
      %v3189 = vpop.f32.mrf.mxu0
      %v3190 = vadd.f32 0.0, %v3189
      %v3191 = vpop.f32.mrf.mxu0
      %v3192 = vadd.f32 0.0, %v3191
      %3193 = vdwg.mxu0
      %v3194 = vadd.f32 %v2904, %v3115
      %v3195 = vadd.f32 %v2905, %v3117
      %v3196 = vadd.f32 %v2906, %v3120
      %v3197 = vadd.f32 %v2907, %v3122
      %v3198 = vadd.f32 %v2908, %v3125
      %v3199 = vadd.f32 %v2909, %v3127
      %v3200 = vadd.f32 %v2910, %v3130
      %v3201 = vadd.f32 %v2911, %v3132
      %v3202 = vadd.f32 %v2912, %v3135
      %v3203 = vadd.f32 %v2913, %v3137
      %v3204 = vadd.f32 %v2914, %v3140
      %v3205 = vadd.f32 %v2915, %v3142
      %v3206 = vadd.f32 %v2916, %v3145
      %v3207 = vadd.f32 %v2917, %v3147
      %v3208 = vadd.f32 %v2918, %v3150
      %v3209 = vadd.f32 %v2919, %v3152
      %v3210 = vadd.f32 %v2920, %v3155
      %v3211 = vadd.f32 %v2921, %v3157
      %v3212 = vadd.f32 %v2922, %v3160
      %v3213 = vadd.f32 %v2923, %v3162
      %v3214 = vadd.f32 %v2924, %v3165
      %v3215 = vadd.f32 %v2925, %v3167
      %v3216 = vadd.f32 %v2926, %v3170
      %v3217 = vadd.f32 %v2927, %v3172
      %v3218 = vadd.f32 %v2928, %v3175
      %v3219 = vadd.f32 %v2929, %v3177
      %v3220 = vadd.f32 %v2930, %v3180
      %v3221 = vadd.f32 %v2931, %v3182
      %v3222 = vadd.f32 %v2932, %v3185
      %v3223 = vadd.f32 %v2933, %v3187
      %v3224 = vadd.f32 %v2934, %v3190
      %v3225 = vadd.f32 %v2935, %v3192
      %v3226 = vld [vmem:[%s2939] sm:$0xf]
      %v3227 = vld [vmem:[%s2939 + $0x4] sm:$0xf]
      %v3228 = vld [vmem:[%s2939 + $0x8] sm:$0x1]
      %v3229 = vld [vmem:[%s2939 + $0xc] sm:$0xf]
      %v3230 = vld [vmem:[%s2939 + $0x10] sm:$0xf]
      %v3231 = vld [vmem:[%s2939 + $0x14] sm:$0x1]
      %v3232 = vld [vmem:[%s2939 + $0x18] sm:$0xf]
      %v3233 = vld [vmem:[%s2939 + $0x1c] sm:$0xf]
      %v3234 = vld [vmem:[%s2939 + $0x20] sm:$0x1]
      %v3235 = vld [vmem:[%s2939 + $0x24] sm:$0xf]
      %v3236 = vld [vmem:[%s2939 + $0x28] sm:$0xf]
      %v3237 = vld [vmem:[%s2939 + $0x2c] sm:$0x1]
      %v3238 = vld [vmem:[%s2939 + $0x30] sm:$0xf]
      %v3239 = vld [vmem:[%s2939 + $0x34] sm:$0xf]
      %v3240 = vld [vmem:[%s2939 + $0x38] sm:$0x1]
      %v3241 = vld [vmem:[%s2939 + $0x3c] sm:$0xf]
      %v3242 = vld [vmem:[%s2939 + $0x40] sm:$0xf]
      %v3243 = vld [vmem:[%s2939 + $0x44] sm:$0x1]
      %v3244 = vld [vmem:[%s2939 + $0x48] sm:$0xf]
      %v3245 = vld [vmem:[%s2939 + $0x4c] sm:$0xf]
      %v3246 = vld [vmem:[%s2939 + $0x50] sm:$0x1]
      %v3247 = vld [vmem:[%s2939 + $0x54] sm:$0xf]
      %v3248 = vld [vmem:[%s2939 + $0x58] sm:$0xf]
      %v3249 = vld [vmem:[%s2939 + $0x5c] sm:$0x1]
      %v3250 = vld [vmem:[%s2939 + $0x60] sm:$0xf]
      %v3251 = vld [vmem:[%s2939 + $0x64] sm:$0xf]
      %v3252 = vld [vmem:[%s2939 + $0x68] sm:$0x1]
      %v3253 = vld [vmem:[%s2939 + $0x6c] sm:$0xf]
      %v3254 = vld [vmem:[%s2939 + $0x70] sm:$0xf]
      %v3255 = vld [vmem:[%s2939 + $0x74] sm:$0x1]
      %v3256 = vld [vmem:[%s2939 + $0x78] sm:$0xf]
      %v3257 = vld [vmem:[%s2939 + $0x7c] sm:$0xf]
      %v3258 = vld [vmem:[%s2939 + $0x80] sm:$0x1]
      %v3259 = vld [vmem:[%s2939 + $0x84] sm:$0xf]
      %v3260 = vld [vmem:[%s2939 + $0x88] sm:$0xf]
      %v3261 = vld [vmem:[%s2939 + $0x8c] sm:$0x1]
      %v3262 = vld [vmem:[%s2939 + $0x90] sm:$0xf]
      %v3263 = vld [vmem:[%s2939 + $0x94] sm:$0xf]
      %v3264 = vld [vmem:[%s2939 + $0x98] sm:$0x1]
      %v3265 = vld [vmem:[%s2939 + $0x9c] sm:$0xf]
      %v3266 = vld [vmem:[%s2939 + $0xa0] sm:$0xf]
      %v3267 = vld [vmem:[%s2939 + $0xa4] sm:$0x1]
      %v3268 = vld [vmem:[%s2939 + $0xa8] sm:$0xf]
      %v3269 = vld [vmem:[%s2939 + $0xac] sm:$0xf]
      %v3270 = vld [vmem:[%s2939 + $0xb0] sm:$0x1]
      %v3271 = vld [vmem:[%s2939 + $0xb4] sm:$0xf]
      %v3272 = vld [vmem:[%s2939 + $0xb8] sm:$0xf]
      %v3273 = vld [vmem:[%s2939 + $0xbc] sm:$0x1]
      %v3275 = vshrl.u32 %v3226, 16
      %v3277 = vrot.slane %v3275, 4
      %v3278 = vshll.u32 %v3226, 16
      %v3280 = vrot.slane %v3278, 5
      %v3281 = vor.u32 %v3277, %v3280
      %v3282 = vrot.slane %v3281, 4
      %v3284 = vshll.u32 %v3227, 16
      %v3286 = vrot.slane %v3284, 5
      %v3287 = vsel %vm586, %v3282, %v3286
      %v3288 = vshrl.u32 %v3227, 16
      %v3290 = vrot.slane %v3288, 4
      %v3291 = vor.u32 %v3290, %v3286
      %v3292 = vrot.slane %v3291, 4
      %v3294 = vshll.u32 %v3228, 16
      %v3296 = vrot.slane %v3294, 5
      %v3297 = vsel %vm586, %v3292, %v3296
      %v3299 = vshrl.u32 %v3229, 16
      %v3301 = vrot.slane %v3299, 4
      %v3302 = vshll.u32 %v3229, 16
      %v3304 = vrot.slane %v3302, 5
      %v3305 = vor.u32 %v3301, %v3304
      %v3306 = vrot.slane %v3305, 4
      %v3308 = vshll.u32 %v3230, 16
      %v3310 = vrot.slane %v3308, 5
      %v3311 = vsel %vm586, %v3306, %v3310
      %v3312 = vshrl.u32 %v3230, 16
      %v3314 = vrot.slane %v3312, 4
      %v3315 = vor.u32 %v3314, %v3310
      %v3316 = vrot.slane %v3315, 4
      %v3318 = vshll.u32 %v3231, 16
      %v3320 = vrot.slane %v3318, 5
      %v3321 = vsel %vm586, %v3316, %v3320
      %v3323 = vshrl.u32 %v3232, 16
      %v3325 = vrot.slane %v3323, 4
      %v3326 = vshll.u32 %v3232, 16
      %v3328 = vrot.slane %v3326, 5
      %v3329 = vor.u32 %v3325, %v3328
      %v3330 = vrot.slane %v3329, 4
      %v3332 = vshll.u32 %v3233, 16
      %v3334 = vrot.slane %v3332, 5
      %v3335 = vsel %vm586, %v3330, %v3334
      %v3336 = vshrl.u32 %v3233, 16
      %v3338 = vrot.slane %v3336, 4
      %v3339 = vor.u32 %v3338, %v3334
      %v3340 = vrot.slane %v3339, 4
      %v3342 = vshll.u32 %v3234, 16
      %v3344 = vrot.slane %v3342, 5
      %v3345 = vsel %vm586, %v3340, %v3344
      %v3347 = vshrl.u32 %v3235, 16
      %v3349 = vrot.slane %v3347, 4
      %v3350 = vshll.u32 %v3235, 16
      %v3352 = vrot.slane %v3350, 5
      %v3353 = vor.u32 %v3349, %v3352
      %v3354 = vrot.slane %v3353, 4
      %v3356 = vshll.u32 %v3236, 16
      %v3358 = vrot.slane %v3356, 5
      %v3359 = vsel %vm586, %v3354, %v3358
      %v3360 = vshrl.u32 %v3236, 16
      %v3362 = vrot.slane %v3360, 4
      %v3363 = vor.u32 %v3362, %v3358
      %v3364 = vrot.slane %v3363, 4
      %v3366 = vshll.u32 %v3237, 16
      %v3368 = vrot.slane %v3366, 5
      %v3369 = vsel %vm586, %v3364, %v3368
      %v3371 = vshrl.u32 %v3238, 16
      %v3373 = vrot.slane %v3371, 4
      %v3374 = vshll.u32 %v3238, 16
      %v3376 = vrot.slane %v3374, 5
      %v3377 = vor.u32 %v3373, %v3376
      %v3378 = vrot.slane %v3377, 4
      %v3380 = vshll.u32 %v3239, 16
      %v3382 = vrot.slane %v3380, 5
      %v3383 = vsel %vm586, %v3378, %v3382
      %v3384 = vshrl.u32 %v3239, 16
      %v3386 = vrot.slane %v3384, 4
      %v3387 = vor.u32 %v3386, %v3382
      %v3388 = vrot.slane %v3387, 4
      %v3390 = vshll.u32 %v3240, 16
      %v3392 = vrot.slane %v3390, 5
      %v3393 = vsel %vm586, %v3388, %v3392
      %v3395 = vshrl.u32 %v3241, 16
      %v3397 = vrot.slane %v3395, 4
      %v3398 = vshll.u32 %v3241, 16
      %v3400 = vrot.slane %v3398, 5
      %v3401 = vor.u32 %v3397, %v3400
      %v3402 = vrot.slane %v3401, 4
      %v3404 = vshll.u32 %v3242, 16
      %v3406 = vrot.slane %v3404, 5
      %v3407 = vsel %vm586, %v3402, %v3406
      %v3408 = vshrl.u32 %v3242, 16
      %v3410 = vrot.slane %v3408, 4
      %v3411 = vor.u32 %v3410, %v3406
      %v3412 = vrot.slane %v3411, 4
      %v3414 = vshll.u32 %v3243, 16
      %v3416 = vrot.slane %v3414, 5
      %v3417 = vsel %vm586, %v3412, %v3416
      %v3419 = vshrl.u32 %v3244, 16
      %v3421 = vrot.slane %v3419, 4
      %v3422 = vshll.u32 %v3244, 16
      %v3424 = vrot.slane %v3422, 5
      %v3425 = vor.u32 %v3421, %v3424
      %v3426 = vrot.slane %v3425, 4
      %v3428 = vshll.u32 %v3245, 16
      %v3430 = vrot.slane %v3428, 5
      %v3431 = vsel %vm586, %v3426, %v3430
      %v3432 = vshrl.u32 %v3245, 16
      %v3434 = vrot.slane %v3432, 4
      %v3435 = vor.u32 %v3434, %v3430
      %v3436 = vrot.slane %v3435, 4
      %v3438 = vshll.u32 %v3246, 16
      %v3440 = vrot.slane %v3438, 5
      %v3441 = vsel %vm586, %v3436, %v3440
      %v3443 = vshrl.u32 %v3247, 16
      %v3445 = vrot.slane %v3443, 4
      %v3446 = vshll.u32 %v3247, 16
      %v3448 = vrot.slane %v3446, 5
      %v3449 = vor.u32 %v3445, %v3448
      %v3450 = vrot.slane %v3449, 4
      %v3452 = vshll.u32 %v3248, 16
      %v3454 = vrot.slane %v3452, 5
      %v3455 = vsel %vm586, %v3450, %v3454
      %v3456 = vshrl.u32 %v3248, 16
      %v3458 = vrot.slane %v3456, 4
      %v3459 = vor.u32 %v3458, %v3454
      %v3460 = vrot.slane %v3459, 4
      %v3462 = vshll.u32 %v3249, 16
      %v3464 = vrot.slane %v3462, 5
      %v3465 = vsel %vm586, %v3460, %v3464
      %v3467 = vshrl.u32 %v3250, 16
      %v3469 = vrot.slane %v3467, 4
      %v3470 = vshll.u32 %v3250, 16
      %v3472 = vrot.slane %v3470, 5
      %v3473 = vor.u32 %v3469, %v3472
      %v3474 = vrot.slane %v3473, 4
      %v3476 = vshll.u32 %v3251, 16
      %v3478 = vrot.slane %v3476, 5
      %v3479 = vsel %vm586, %v3474, %v3478
      %v3480 = vshrl.u32 %v3251, 16
      %v3482 = vrot.slane %v3480, 4
      %v3483 = vor.u32 %v3482, %v3478
      %v3484 = vrot.slane %v3483, 4
      %v3486 = vshll.u32 %v3252, 16
      %v3488 = vrot.slane %v3486, 5
      %v3489 = vsel %vm586, %v3484, %v3488
      %v3491 = vshrl.u32 %v3253, 16
      %v3493 = vrot.slane %v3491, 4
      %v3494 = vshll.u32 %v3253, 16
      %v3496 = vrot.slane %v3494, 5
      %v3497 = vor.u32 %v3493, %v3496
      %v3498 = vrot.slane %v3497, 4
      %v3500 = vshll.u32 %v3254, 16
      %v3502 = vrot.slane %v3500, 5
      %v3503 = vsel %vm586, %v3498, %v3502
      %v3504 = vshrl.u32 %v3254, 16
      %v3506 = vrot.slane %v3504, 4
      %v3507 = vor.u32 %v3506, %v3502
      %v3508 = vrot.slane %v3507, 4
      %v3510 = vshll.u32 %v3255, 16
      %v3512 = vrot.slane %v3510, 5
      %v3513 = vsel %vm586, %v3508, %v3512
      %v3515 = vshrl.u32 %v3256, 16
      %v3517 = vrot.slane %v3515, 4
      %v3518 = vshll.u32 %v3256, 16
      %v3520 = vrot.slane %v3518, 5
      %v3521 = vor.u32 %v3517, %v3520
      %v3522 = vrot.slane %v3521, 4
      %v3524 = vshll.u32 %v3257, 16
      %v3526 = vrot.slane %v3524, 5
      %v3527 = vsel %vm586, %v3522, %v3526
      %v3528 = vshrl.u32 %v3257, 16
      %v3530 = vrot.slane %v3528, 4
      %v3531 = vor.u32 %v3530, %v3526
      %v3532 = vrot.slane %v3531, 4
      %v3534 = vshll.u32 %v3258, 16
      %v3536 = vrot.slane %v3534, 5
      %v3537 = vsel %vm586, %v3532, %v3536
      %v3539 = vshrl.u32 %v3259, 16
      %v3541 = vrot.slane %v3539, 4
      %v3542 = vshll.u32 %v3259, 16
      %v3544 = vrot.slane %v3542, 5
      %v3545 = vor.u32 %v3541, %v3544
      %v3546 = vrot.slane %v3545, 4
      %v3548 = vshll.u32 %v3260, 16
      %v3550 = vrot.slane %v3548, 5
      %v3551 = vsel %vm586, %v3546, %v3550
      %v3552 = vshrl.u32 %v3260, 16
      %v3554 = vrot.slane %v3552, 4
      %v3555 = vor.u32 %v3554, %v3550
      %v3556 = vrot.slane %v3555, 4
      %v3558 = vshll.u32 %v3261, 16
      %v3560 = vrot.slane %v3558, 5
      %v3561 = vsel %vm586, %v3556, %v3560
      %v3563 = vshrl.u32 %v3262, 16
      %v3565 = vrot.slane %v3563, 4
      %v3566 = vshll.u32 %v3262, 16
      %v3568 = vrot.slane %v3566, 5
      %v3569 = vor.u32 %v3565, %v3568
      %v3570 = vrot.slane %v3569, 4
      %v3572 = vshll.u32 %v3263, 16
      %v3574 = vrot.slane %v3572, 5
      %v3575 = vsel %vm586, %v3570, %v3574
      %v3576 = vshrl.u32 %v3263, 16
      %v3578 = vrot.slane %v3576, 4
      %v3579 = vor.u32 %v3578, %v3574
      %v3580 = vrot.slane %v3579, 4
      %v3582 = vshll.u32 %v3264, 16
      %v3584 = vrot.slane %v3582, 5
      %v3585 = vsel %vm586, %v3580, %v3584
      %v3587 = vshrl.u32 %v3265, 16
      %v3589 = vrot.slane %v3587, 4
      %v3590 = vshll.u32 %v3265, 16
      %v3592 = vrot.slane %v3590, 5
      %v3593 = vor.u32 %v3589, %v3592
      %v3594 = vrot.slane %v3593, 4
      %v3596 = vshll.u32 %v3266, 16
      %v3598 = vrot.slane %v3596, 5
      %v3599 = vsel %vm586, %v3594, %v3598
      %v3600 = vshrl.u32 %v3266, 16
      %v3602 = vrot.slane %v3600, 4
      %v3603 = vor.u32 %v3602, %v3598
      %v3604 = vrot.slane %v3603, 4
      %v3606 = vshll.u32 %v3267, 16
      %v3608 = vrot.slane %v3606, 5
      %v3609 = vsel %vm586, %v3604, %v3608
      %v3611 = vshrl.u32 %v3268, 16
      %v3613 = vrot.slane %v3611, 4
      %v3614 = vshll.u32 %v3268, 16
      %v3616 = vrot.slane %v3614, 5
      %v3617 = vor.u32 %v3613, %v3616
      %v3618 = vrot.slane %v3617, 4
      %v3620 = vshll.u32 %v3269, 16
      %v3622 = vrot.slane %v3620, 5
      %v3623 = vsel %vm586, %v3618, %v3622
      %v3624 = vshrl.u32 %v3269, 16
      %v3626 = vrot.slane %v3624, 4
      %v3627 = vor.u32 %v3626, %v3622
      %v3628 = vrot.slane %v3627, 4
      %v3630 = vshll.u32 %v3270, 16
      %v3632 = vrot.slane %v3630, 5
      %v3633 = vsel %vm586, %v3628, %v3632
      %v3635 = vshrl.u32 %v3271, 16
      %v3637 = vrot.slane %v3635, 4
      %v3638 = vshll.u32 %v3271, 16
      %v3640 = vrot.slane %v3638, 5
      %v3641 = vor.u32 %v3637, %v3640
      %v3642 = vrot.slane %v3641, 4
      %v3644 = vshll.u32 %v3272, 16
      %v3646 = vrot.slane %v3644, 5
      %v3647 = vsel %vm586, %v3642, %v3646
      %v3648 = vshrl.u32 %v3272, 16
      %v3650 = vrot.slane %v3648, 4
      %v3651 = vor.u32 %v3650, %v3646
      %v3652 = vrot.slane %v3651, 4
      %v3654 = vshll.u32 %v3273, 16
      %v3656 = vrot.slane %v3654, 5
      %v3657 = vsel %vm586, %v3652, %v3656
      %s3658 = scalar_lea.vmem %s223, 14
      %v3659 = vld [vmem:[%s3658] sm:$0x3]
      %v3660 = vunpack.c.l.b16 %v3287
      %v3661 = vunpack.c.l.b16 %v3297
      %v3662 = vunpack.c.l.b16 %v3311
      %v3663 = vunpack.c.l.b16 %v3321
      %v3664 = vunpack.c.l.b16 %v3335
      %v3665 = vunpack.c.l.b16 %v3345
      %v3666 = vunpack.c.l.b16 %v3359
      %v3667 = vunpack.c.l.b16 %v3369
      %v3668 = vunpack.c.l.b16 %v3383
      %v3669 = vunpack.c.l.b16 %v3393
      %v3670 = vunpack.c.l.b16 %v3407
      %v3671 = vunpack.c.l.b16 %v3417
      %v3672 = vunpack.c.l.b16 %v3431
      %v3673 = vunpack.c.l.b16 %v3441
      %v3674 = vunpack.c.l.b16 %v3455
      %v3675 = vunpack.c.l.b16 %v3465
      %v3676 = vunpack.c.l.b16 %v3479
      %v3677 = vunpack.c.l.b16 %v3489
      %v3678 = vunpack.c.l.b16 %v3503
      %v3679 = vunpack.c.l.b16 %v3513
      %v3680 = vunpack.c.l.b16 %v3527
      %v3681 = vunpack.c.l.b16 %v3537
      %v3682 = vunpack.c.l.b16 %v3551
      %v3683 = vunpack.c.l.b16 %v3561
      %v3684 = vunpack.c.l.b16 %v3575
      %v3685 = vunpack.c.l.b16 %v3585
      %v3686 = vunpack.c.l.b16 %v3599
      %v3687 = vunpack.c.l.b16 %v3609
      %v3688 = vunpack.c.l.b16 %v3623
      %v3689 = vunpack.c.l.b16 %v3633
      %v3690 = vunpack.c.l.b16 %v3647
      %v3691 = vunpack.c.l.b16 %v3657
      %v3692 = vpack.c.b16 %v3661, %v3660
      %v3693 = vpack.c.b16 %v3663, %v3662
      %v3694 = vpack.c.b16 %v3665, %v3664
      %v3695 = vpack.c.b16 %v3667, %v3666
      %v3696 = vpack.c.b16 %v3669, %v3668
      %v3697 = vpack.c.b16 %v3671, %v3670
      %v3698 = vpack.c.b16 %v3673, %v3672
      %v3699 = vpack.c.b16 %v3675, %v3674
      %v3700 = vpack.c.b16 %v3677, %v3676
      %v3701 = vpack.c.b16 %v3679, %v3678
      %v3702 = vpack.c.b16 %v3681, %v3680
      %v3703 = vpack.c.b16 %v3683, %v3682
      %v3704 = vpack.c.b16 %v3685, %v3684
      %v3705 = vpack.c.b16 %v3687, %v3686
      %v3706 = vpack.c.b16 %v3689, %v3688
      %v3707 = vpack.c.b16 %v3691, %v3690
      %v3709 = vsel %vm362, %v3692, 0
      %v3712 = vsel %vm362, %v3693, 0
      %v3715 = vsel %vm362, %v3694, 0
      %v3718 = vsel %vm362, %v3695, 0
      %v3721 = vsel %vm362, %v3696, 0
      %v3724 = vsel %vm362, %v3697, 0
      %v3727 = vsel %vm362, %v3698, 0
      %v3730 = vsel %vm362, %v3699, 0
      %v3733 = vsel %vm362, %v3700, 0
      %v3736 = vsel %vm362, %v3701, 0
      %v3739 = vsel %vm362, %v3702, 0
      %v3742 = vsel %vm362, %v3703, 0
      %v3745 = vsel %vm362, %v3704, 0
      %v3748 = vsel %vm362, %v3705, 0
      %v3751 = vsel %vm362, %v3706, 0
      %v3754 = vsel %vm362, %v3707, 0
      %v3757 = vsel %vm411, %v3659, 0
      %3759 = vmatpush.bf16.msra.mxu0 0
      %3760 = vmatpush.bf16.msra.mxu0 0
      %3761 = vmatpush.bf16.msra.mxu0 0
      %3762 = vmatpush.bf16.msra.mxu0 0
      %3763 = vmatpush.bf16.msra.mxu0 0
      %3764 = vmatpush.bf16.msra.mxu0 0
      %3765 = vmatpush.bf16.msra.mxu0 0
      %3766 = vmatpush.bf16.msra.mxu0 %v3757
      %3767 = vmatmul.bf16.gmra.mxu0 %v3709
      %v3768 = vpop.f32.mrf.mxu0
      %v3769 = vadd.f32 0.0, %v3768
      %v3770 = vpop.f32.mrf.mxu0
      %v3771 = vadd.f32 0.0, %v3770
      %3772 = vmatmul.bf16.gmra.mxu0 %v3712
      %v3773 = vpop.f32.mrf.mxu0
      %v3774 = vadd.f32 0.0, %v3773
      %v3775 = vpop.f32.mrf.mxu0
      %v3776 = vadd.f32 0.0, %v3775
      %3777 = vmatmul.bf16.gmra.mxu0 %v3715
      %v3778 = vpop.f32.mrf.mxu0
      %v3779 = vadd.f32 0.0, %v3778
      %v3780 = vpop.f32.mrf.mxu0
      %v3781 = vadd.f32 0.0, %v3780
      %3782 = vmatmul.bf16.gmra.mxu0 %v3718
      %v3783 = vpop.f32.mrf.mxu0
      %v3784 = vadd.f32 0.0, %v3783
      %v3785 = vpop.f32.mrf.mxu0
      %v3786 = vadd.f32 0.0, %v3785
      %3787 = vmatmul.bf16.gmra.mxu0 %v3721
      %v3788 = vpop.f32.mrf.mxu0
      %v3789 = vadd.f32 0.0, %v3788
      %v3790 = vpop.f32.mrf.mxu0
      %v3791 = vadd.f32 0.0, %v3790
      %3792 = vmatmul.bf16.gmra.mxu0 %v3724
      %v3793 = vpop.f32.mrf.mxu0
      %v3794 = vadd.f32 0.0, %v3793
      %v3795 = vpop.f32.mrf.mxu0
      %v3796 = vadd.f32 0.0, %v3795
      %3797 = vmatmul.bf16.gmra.mxu0 %v3727
      %v3798 = vpop.f32.mrf.mxu0
      %v3799 = vadd.f32 0.0, %v3798
      %v3800 = vpop.f32.mrf.mxu0
      %v3801 = vadd.f32 0.0, %v3800
      %3802 = vmatmul.bf16.gmra.mxu0 %v3730
      %v3803 = vpop.f32.mrf.mxu0
      %v3804 = vadd.f32 0.0, %v3803
      %v3805 = vpop.f32.mrf.mxu0
      %v3806 = vadd.f32 0.0, %v3805
      %3807 = vmatmul.bf16.gmra.mxu0 %v3733
      %v3808 = vpop.f32.mrf.mxu0
      %v3809 = vadd.f32 0.0, %v3808
      %v3810 = vpop.f32.mrf.mxu0
      %v3811 = vadd.f32 0.0, %v3810
      %3812 = vmatmul.bf16.gmra.mxu0 %v3736
      %v3813 = vpop.f32.mrf.mxu0
      %v3814 = vadd.f32 0.0, %v3813
      %v3815 = vpop.f32.mrf.mxu0
      %v3816 = vadd.f32 0.0, %v3815
      %3817 = vmatmul.bf16.gmra.mxu0 %v3739
      %v3818 = vpop.f32.mrf.mxu0
      %v3819 = vadd.f32 0.0, %v3818
      %v3820 = vpop.f32.mrf.mxu0
      %v3821 = vadd.f32 0.0, %v3820
      %3822 = vmatmul.bf16.gmra.mxu0 %v3742
      %v3823 = vpop.f32.mrf.mxu0
      %v3824 = vadd.f32 0.0, %v3823
      %v3825 = vpop.f32.mrf.mxu0
      %v3826 = vadd.f32 0.0, %v3825
      %3827 = vmatmul.bf16.gmra.mxu0 %v3745
      %v3828 = vpop.f32.mrf.mxu0
      %v3829 = vadd.f32 0.0, %v3828
      %v3830 = vpop.f32.mrf.mxu0
      %v3831 = vadd.f32 0.0, %v3830
      %3832 = vmatmul.bf16.gmra.mxu0 %v3748
      %v3833 = vpop.f32.mrf.mxu0
      %v3834 = vadd.f32 0.0, %v3833
      %v3835 = vpop.f32.mrf.mxu0
      %v3836 = vadd.f32 0.0, %v3835
      %3837 = vmatmul.bf16.gmra.mxu0 %v3751
      %v3838 = vpop.f32.mrf.mxu0
      %v3839 = vadd.f32 0.0, %v3838
      %v3840 = vpop.f32.mrf.mxu0
      %v3841 = vadd.f32 0.0, %v3840
      %3842 = vmatmul.bf16.gmra.mxu0 %v3754
      %v3843 = vpop.f32.mrf.mxu0
      %v3844 = vadd.f32 0.0, %v3843
      %v3845 = vpop.f32.mrf.mxu0
      %v3846 = vadd.f32 0.0, %v3845
      %3847 = vdwg.mxu0
      %v3848 = vadd.f32 %v3194, %v3769
      %v3849 = vadd.f32 %v3195, %v3771
      %v3850 = vadd.f32 %v3196, %v3774
      %v3851 = vadd.f32 %v3197, %v3776
      %v3852 = vadd.f32 %v3198, %v3779
      %v3853 = vadd.f32 %v3199, %v3781
      %v3854 = vadd.f32 %v3200, %v3784
      %v3855 = vadd.f32 %v3201, %v3786
      %v3856 = vadd.f32 %v3202, %v3789
      %v3857 = vadd.f32 %v3203, %v3791
      %v3858 = vadd.f32 %v3204, %v3794
      %v3859 = vadd.f32 %v3205, %v3796
      %v3860 = vadd.f32 %v3206, %v3799
      %v3861 = vadd.f32 %v3207, %v3801
      %v3862 = vadd.f32 %v3208, %v3804
      %v3863 = vadd.f32 %v3209, %v3806
      %v3864 = vadd.f32 %v3210, %v3809
      %v3865 = vadd.f32 %v3211, %v3811
      %v3866 = vadd.f32 %v3212, %v3814
      %v3867 = vadd.f32 %v3213, %v3816
      %v3868 = vadd.f32 %v3214, %v3819
      %v3869 = vadd.f32 %v3215, %v3821
      %v3870 = vadd.f32 %v3216, %v3824
      %v3871 = vadd.f32 %v3217, %v3826
      %v3872 = vadd.f32 %v3218, %v3829
      %v3873 = vadd.f32 %v3219, %v3831
      %v3874 = vadd.f32 %v3220, %v3834
      %v3875 = vadd.f32 %v3221, %v3836
      %v3876 = vadd.f32 %v3222, %v3839
      %v3877 = vadd.f32 %v3223, %v3841
      %v3878 = vadd.f32 %v3224, %v3844
      %v3879 = vadd.f32 %v3225, %v3846
      %v3880 = vld [vmem:[%s2939] sm:$0xe]
      %v3881 = vld [vmem:[%s2939 + $0xc] sm:$0xe]
      %v3882 = vld [vmem:[%s2939 + $0x18] sm:$0xe]
      %v3883 = vld [vmem:[%s2939 + $0x24] sm:$0xe]
      %v3884 = vld [vmem:[%s2939 + $0x30] sm:$0xe]
      %v3885 = vld [vmem:[%s2939 + $0x3c] sm:$0xe]
      %v3886 = vld [vmem:[%s2939 + $0x48] sm:$0xe]
      %v3887 = vld [vmem:[%s2939 + $0x54] sm:$0xe]
      %v3888 = vld [vmem:[%s2939 + $0x60] sm:$0xe]
      %v3889 = vld [vmem:[%s2939 + $0x6c] sm:$0xe]
      %v3890 = vld [vmem:[%s2939 + $0x78] sm:$0xe]
      %v3891 = vld [vmem:[%s2939 + $0x84] sm:$0xe]
      %v3892 = vld [vmem:[%s2939 + $0x90] sm:$0xe]
      %v3893 = vld [vmem:[%s2939 + $0x9c] sm:$0xe]
      %v3894 = vld [vmem:[%s2939 + $0xa8] sm:$0xe]
      %v3895 = vld [vmem:[%s2939 + $0xb4] sm:$0xe]
      %v3944 = vrot.slane %v3880, 5
      %v3945 = vrot.slane %v3944, 4
      %v3946 = vrot.slane %v3227, 5
      %v3947 = vsel %vm1259, %v3945, %v3946
      %v3948 = vrot.slane %v3946, 4
      %v3949 = vrot.slane %v3228, 5
      %v3950 = vsel %vm1259, %v3948, %v3949
      %v3951 = vrot.slane %v3881, 5
      %v3952 = vrot.slane %v3951, 4
      %v3953 = vrot.slane %v3230, 5
      %v3954 = vsel %vm1259, %v3952, %v3953
      %v3955 = vrot.slane %v3953, 4
      %v3956 = vrot.slane %v3231, 5
      %v3957 = vsel %vm1259, %v3955, %v3956
      %v3958 = vrot.slane %v3882, 5
      %v3959 = vrot.slane %v3958, 4
      %v3960 = vrot.slane %v3233, 5
      %v3961 = vsel %vm1259, %v3959, %v3960
      %v3962 = vrot.slane %v3960, 4
      %v3963 = vrot.slane %v3234, 5
      %v3964 = vsel %vm1259, %v3962, %v3963
      %v3965 = vrot.slane %v3883, 5
      %v3966 = vrot.slane %v3965, 4
      %v3967 = vrot.slane %v3236, 5
      %v3968 = vsel %vm1259, %v3966, %v3967
      %v3969 = vrot.slane %v3967, 4
      %v3970 = vrot.slane %v3237, 5
      %v3971 = vsel %vm1259, %v3969, %v3970
      %v3972 = vrot.slane %v3884, 5
      %v3973 = vrot.slane %v3972, 4
      %v3974 = vrot.slane %v3239, 5
      %v3975 = vsel %vm1259, %v3973, %v3974
      %v3976 = vrot.slane %v3974, 4
      %v3977 = vrot.slane %v3240, 5
      %v3978 = vsel %vm1259, %v3976, %v3977
      %v3979 = vrot.slane %v3885, 5
      %v3980 = vrot.slane %v3979, 4
      %v3981 = vrot.slane %v3242, 5
      %v3982 = vsel %vm1259, %v3980, %v3981
      %v3983 = vrot.slane %v3981, 4
      %v3984 = vrot.slane %v3243, 5
      %v3985 = vsel %vm1259, %v3983, %v3984
      %v3986 = vrot.slane %v3886, 5
      %v3987 = vrot.slane %v3986, 4
      %v3988 = vrot.slane %v3245, 5
      %v3989 = vsel %vm1259, %v3987, %v3988
      %v3990 = vrot.slane %v3988, 4
      %v3991 = vrot.slane %v3246, 5
      %v3992 = vsel %vm1259, %v3990, %v3991
      %v3993 = vrot.slane %v3887, 5
      %v3994 = vrot.slane %v3993, 4
      %v3995 = vrot.slane %v3248, 5
      %v3996 = vsel %vm1259, %v3994, %v3995
      %v3997 = vrot.slane %v3995, 4
      %v3998 = vrot.slane %v3249, 5
      %v3999 = vsel %vm1259, %v3997, %v3998
      %v4000 = vrot.slane %v3888, 5
      %v4001 = vrot.slane %v4000, 4
      %v4002 = vrot.slane %v3251, 5
      %v4003 = vsel %vm1259, %v4001, %v4002
      %v4004 = vrot.slane %v4002, 4
      %v4005 = vrot.slane %v3252, 5
      %v4006 = vsel %vm1259, %v4004, %v4005
      %v4007 = vrot.slane %v3889, 5
      %v4008 = vrot.slane %v4007, 4
      %v4009 = vrot.slane %v3254, 5
      %v4010 = vsel %vm1259, %v4008, %v4009
      %v4011 = vrot.slane %v4009, 4
      %v4012 = vrot.slane %v3255, 5
      %v4013 = vsel %vm1259, %v4011, %v4012
      %v4014 = vrot.slane %v3890, 5
      %v4015 = vrot.slane %v4014, 4
      %v4016 = vrot.slane %v3257, 5
      %v4017 = vsel %vm1259, %v4015, %v4016
      %v4018 = vrot.slane %v4016, 4
      %v4019 = vrot.slane %v3258, 5
      %v4020 = vsel %vm1259, %v4018, %v4019
      %v4021 = vrot.slane %v3891, 5
      %v4022 = vrot.slane %v4021, 4
      %v4023 = vrot.slane %v3260, 5
      %v4024 = vsel %vm1259, %v4022, %v4023
      %v4025 = vrot.slane %v4023, 4
      %v4026 = vrot.slane %v3261, 5
      %v4027 = vsel %vm1259, %v4025, %v4026
      %v4028 = vrot.slane %v3892, 5
      %v4029 = vrot.slane %v4028, 4
      %v4030 = vrot.slane %v3263, 5
      %v4031 = vsel %vm1259, %v4029, %v4030
      %v4032 = vrot.slane %v4030, 4
      %v4033 = vrot.slane %v3264, 5
      %v4034 = vsel %vm1259, %v4032, %v4033
      %v4035 = vrot.slane %v3893, 5
      %v4036 = vrot.slane %v4035, 4
      %v4037 = vrot.slane %v3266, 5
      %v4038 = vsel %vm1259, %v4036, %v4037
      %v4039 = vrot.slane %v4037, 4
      %v4040 = vrot.slane %v3267, 5
      %v4041 = vsel %vm1259, %v4039, %v4040
      %v4042 = vrot.slane %v3894, 5
      %v4043 = vrot.slane %v4042, 4
      %v4044 = vrot.slane %v3269, 5
      %v4045 = vsel %vm1259, %v4043, %v4044
      %v4046 = vrot.slane %v4044, 4
      %v4047 = vrot.slane %v3270, 5
      %v4048 = vsel %vm1259, %v4046, %v4047
      %v4049 = vrot.slane %v3895, 5
      %v4050 = vrot.slane %v4049, 4
      %v4051 = vrot.slane %v3272, 5
      %v4052 = vsel %vm1259, %v4050, %v4051
      %v4053 = vrot.slane %v4051, 4
      %v4054 = vrot.slane %v3273, 5
      %v4055 = vsel %vm1259, %v4053, %v4054
      %s4056 = scalar_lea.vmem %s223, 16
      %v4057 = vld [vmem:[%s4056] sm:$0x3]
      %v4058 = vunpack.c.l.b16 %v3947
      %v4059 = vunpack.c.l.b16 %v3950
      %v4060 = vunpack.c.l.b16 %v3954
      %v4061 = vunpack.c.l.b16 %v3957
      %v4062 = vunpack.c.l.b16 %v3961
      %v4063 = vunpack.c.l.b16 %v3964
      %v4064 = vunpack.c.l.b16 %v3968
      %v4065 = vunpack.c.l.b16 %v3971
      %v4066 = vunpack.c.l.b16 %v3975
      %v4067 = vunpack.c.l.b16 %v3978
      %v4068 = vunpack.c.l.b16 %v3982
      %v4069 = vunpack.c.l.b16 %v3985
      %v4070 = vunpack.c.l.b16 %v3989
      %v4071 = vunpack.c.l.b16 %v3992
      %v4072 = vunpack.c.l.b16 %v3996
      %v4073 = vunpack.c.l.b16 %v3999
      %v4074 = vunpack.c.l.b16 %v4003
      %v4075 = vunpack.c.l.b16 %v4006
      %v4076 = vunpack.c.l.b16 %v4010
      %v4077 = vunpack.c.l.b16 %v4013
      %v4078 = vunpack.c.l.b16 %v4017
      %v4079 = vunpack.c.l.b16 %v4020
      %v4080 = vunpack.c.l.b16 %v4024
      %v4081 = vunpack.c.l.b16 %v4027
      %v4082 = vunpack.c.l.b16 %v4031
      %v4083 = vunpack.c.l.b16 %v4034
      %v4084 = vunpack.c.l.b16 %v4038
      %v4085 = vunpack.c.l.b16 %v4041
      %v4086 = vunpack.c.l.b16 %v4045
      %v4087 = vunpack.c.l.b16 %v4048
      %v4088 = vunpack.c.l.b16 %v4052
      %v4089 = vunpack.c.l.b16 %v4055
      %v4090 = vpack.c.b16 %v4059, %v4058
      %v4091 = vpack.c.b16 %v4061, %v4060
      %v4092 = vpack.c.b16 %v4063, %v4062
      %v4093 = vpack.c.b16 %v4065, %v4064
      %v4094 = vpack.c.b16 %v4067, %v4066
      %v4095 = vpack.c.b16 %v4069, %v4068
      %v4096 = vpack.c.b16 %v4071, %v4070
      %v4097 = vpack.c.b16 %v4073, %v4072
      %v4098 = vpack.c.b16 %v4075, %v4074
      %v4099 = vpack.c.b16 %v4077, %v4076
      %v4100 = vpack.c.b16 %v4079, %v4078
      %v4101 = vpack.c.b16 %v4081, %v4080
      %v4102 = vpack.c.b16 %v4083, %v4082
      %v4103 = vpack.c.b16 %v4085, %v4084
      %v4104 = vpack.c.b16 %v4087, %v4086
      %v4105 = vpack.c.b16 %v4089, %v4088
      %v4107 = vsel %vm362, %v4090, 0
      %v4110 = vsel %vm362, %v4091, 0
      %v4113 = vsel %vm362, %v4092, 0
      %v4116 = vsel %vm362, %v4093, 0
      %v4119 = vsel %vm362, %v4094, 0
      %v4122 = vsel %vm362, %v4095, 0
      %v4125 = vsel %vm362, %v4096, 0
      %v4128 = vsel %vm362, %v4097, 0
      %v4131 = vsel %vm362, %v4098, 0
      %v4134 = vsel %vm362, %v4099, 0
      %v4137 = vsel %vm362, %v4100, 0
      %v4140 = vsel %vm362, %v4101, 0
      %v4143 = vsel %vm362, %v4102, 0
      %v4146 = vsel %vm362, %v4103, 0
      %v4149 = vsel %vm362, %v4104, 0
      %v4152 = vsel %vm362, %v4105, 0
      %v4155 = vsel %vm411, %v4057, 0
      %4157 = vmatpush.bf16.msra.mxu0 0
      %4158 = vmatpush.bf16.msra.mxu0 0
      %4159 = vmatpush.bf16.msra.mxu0 0
      %4160 = vmatpush.bf16.msra.mxu0 0
      %4161 = vmatpush.bf16.msra.mxu0 0
      %4162 = vmatpush.bf16.msra.mxu0 0
      %4163 = vmatpush.bf16.msra.mxu0 0
      %4164 = vmatpush.bf16.msra.mxu0 %v4155
      %4165 = vmatmul.bf16.gmra.mxu0 %v4107
      %v4166 = vpop.f32.mrf.mxu0
      %v4167 = vadd.f32 0.0, %v4166
      %v4168 = vpop.f32.mrf.mxu0
      %v4169 = vadd.f32 0.0, %v4168
      %4170 = vmatmul.bf16.gmra.mxu0 %v4110
      %v4171 = vpop.f32.mrf.mxu0
      %v4172 = vadd.f32 0.0, %v4171
      %v4173 = vpop.f32.mrf.mxu0
      %v4174 = vadd.f32 0.0, %v4173
      %4175 = vmatmul.bf16.gmra.mxu0 %v4113
      %v4176 = vpop.f32.mrf.mxu0
      %v4177 = vadd.f32 0.0, %v4176
      %v4178 = vpop.f32.mrf.mxu0
      %v4179 = vadd.f32 0.0, %v4178
      %4180 = vmatmul.bf16.gmra.mxu0 %v4116
      %v4181 = vpop.f32.mrf.mxu0
      %v4182 = vadd.f32 0.0, %v4181
      %v4183 = vpop.f32.mrf.mxu0
      %v4184 = vadd.f32 0.0, %v4183
      %4185 = vmatmul.bf16.gmra.mxu0 %v4119
      %v4186 = vpop.f32.mrf.mxu0
      %v4187 = vadd.f32 0.0, %v4186
      %v4188 = vpop.f32.mrf.mxu0
      %v4189 = vadd.f32 0.0, %v4188
      %4190 = vmatmul.bf16.gmra.mxu0 %v4122
      %v4191 = vpop.f32.mrf.mxu0
      %v4192 = vadd.f32 0.0, %v4191
      %v4193 = vpop.f32.mrf.mxu0
      %v4194 = vadd.f32 0.0, %v4193
      %4195 = vmatmul.bf16.gmra.mxu0 %v4125
      %v4196 = vpop.f32.mrf.mxu0
      %v4197 = vadd.f32 0.0, %v4196
      %v4198 = vpop.f32.mrf.mxu0
      %v4199 = vadd.f32 0.0, %v4198
      %4200 = vmatmul.bf16.gmra.mxu0 %v4128
      %v4201 = vpop.f32.mrf.mxu0
      %v4202 = vadd.f32 0.0, %v4201
      %v4203 = vpop.f32.mrf.mxu0
      %v4204 = vadd.f32 0.0, %v4203
      %4205 = vmatmul.bf16.gmra.mxu0 %v4131
      %v4206 = vpop.f32.mrf.mxu0
      %v4207 = vadd.f32 0.0, %v4206
      %v4208 = vpop.f32.mrf.mxu0
      %v4209 = vadd.f32 0.0, %v4208
      %4210 = vmatmul.bf16.gmra.mxu0 %v4134
      %v4211 = vpop.f32.mrf.mxu0
      %v4212 = vadd.f32 0.0, %v4211
      %v4213 = vpop.f32.mrf.mxu0
      %v4214 = vadd.f32 0.0, %v4213
      %4215 = vmatmul.bf16.gmra.mxu0 %v4137
      %v4216 = vpop.f32.mrf.mxu0
      %v4217 = vadd.f32 0.0, %v4216
      %v4218 = vpop.f32.mrf.mxu0
      %v4219 = vadd.f32 0.0, %v4218
      %4220 = vmatmul.bf16.gmra.mxu0 %v4140
      %v4221 = vpop.f32.mrf.mxu0
      %v4222 = vadd.f32 0.0, %v4221
      %v4223 = vpop.f32.mrf.mxu0
      %v4224 = vadd.f32 0.0, %v4223
      %4225 = vmatmul.bf16.gmra.mxu0 %v4143
      %v4226 = vpop.f32.mrf.mxu0
      %v4227 = vadd.f32 0.0, %v4226
      %v4228 = vpop.f32.mrf.mxu0
      %v4229 = vadd.f32 0.0, %v4228
      %4230 = vmatmul.bf16.gmra.mxu0 %v4146
      %v4231 = vpop.f32.mrf.mxu0
      %v4232 = vadd.f32 0.0, %v4231
      %v4233 = vpop.f32.mrf.mxu0
      %v4234 = vadd.f32 0.0, %v4233
      %4235 = vmatmul.bf16.gmra.mxu0 %v4149
      %v4236 = vpop.f32.mrf.mxu0
      %v4237 = vadd.f32 0.0, %v4236
      %v4238 = vpop.f32.mrf.mxu0
      %v4239 = vadd.f32 0.0, %v4238
      %4240 = vmatmul.bf16.gmra.mxu0 %v4152
      %v4241 = vpop.f32.mrf.mxu0
      %v4242 = vadd.f32 0.0, %v4241
      %v4243 = vpop.f32.mrf.mxu0
      %v4244 = vadd.f32 0.0, %v4243
      %4245 = vdwg.mxu0
      %v4246 = vadd.f32 %v3848, %v4167
      %v4247 = vadd.f32 %v3849, %v4169
      %v4248 = vadd.f32 %v3850, %v4172
      %v4249 = vadd.f32 %v3851, %v4174
      %v4250 = vadd.f32 %v3852, %v4177
      %v4251 = vadd.f32 %v3853, %v4179
      %v4252 = vadd.f32 %v3854, %v4182
      %v4253 = vadd.f32 %v3855, %v4184
      %v4254 = vadd.f32 %v3856, %v4187
      %v4255 = vadd.f32 %v3857, %v4189
      %v4256 = vadd.f32 %v3858, %v4192
      %v4257 = vadd.f32 %v3859, %v4194
      %v4258 = vadd.f32 %v3860, %v4197
      %v4259 = vadd.f32 %v3861, %v4199
      %v4260 = vadd.f32 %v3862, %v4202
      %v4261 = vadd.f32 %v3863, %v4204
      %v4262 = vadd.f32 %v3864, %v4207
      %v4263 = vadd.f32 %v3865, %v4209
      %v4264 = vadd.f32 %v3866, %v4212
      %v4265 = vadd.f32 %v3867, %v4214
      %v4266 = vadd.f32 %v3868, %v4217
      %v4267 = vadd.f32 %v3869, %v4219
      %v4268 = vadd.f32 %v3870, %v4222
      %v4269 = vadd.f32 %v3871, %v4224
      %v4270 = vadd.f32 %v3872, %v4227
      %v4271 = vadd.f32 %v3873, %v4229
      %v4272 = vadd.f32 %v3874, %v4232
      %v4273 = vadd.f32 %v3875, %v4234
      %v4274 = vadd.f32 %v3876, %v4237
      %v4275 = vadd.f32 %v3877, %v4239
      %v4276 = vadd.f32 %v3878, %v4242
      %v4277 = vadd.f32 %v3879, %v4244
      %4278 = vst [vmem:[%s238] sm:$0xff] %v4246
      %4279 = vst [vmem:[%s238 + $0x8] sm:$0xff] %v4247
      %4280 = vst [vmem:[%s238 + $0x10] sm:$0xff] %v4248
      %4281 = vst [vmem:[%s238 + $0x18] sm:$0xff] %v4249
      %4282 = vst [vmem:[%s238 + $0x20] sm:$0xff] %v4250
      %4283 = vst [vmem:[%s238 + $0x28] sm:$0xff] %v4251
      %4284 = vst [vmem:[%s238 + $0x30] sm:$0xff] %v4252
      %4285 = vst [vmem:[%s238 + $0x38] sm:$0xff] %v4253
      %4286 = vst [vmem:[%s238 + $0x40] sm:$0xff] %v4254
      %4287 = vst [vmem:[%s238 + $0x48] sm:$0xff] %v4255
      %4288 = vst [vmem:[%s238 + $0x50] sm:$0xff] %v4256
      %4289 = vst [vmem:[%s238 + $0x58] sm:$0xff] %v4257
      %4290 = vst [vmem:[%s238 + $0x60] sm:$0xff] %v4258
      %4291 = vst [vmem:[%s238 + $0x68] sm:$0xff] %v4259
      %4292 = vst [vmem:[%s238 + $0x70] sm:$0xff] %v4260
      %4293 = vst [vmem:[%s238 + $0x78] sm:$0xff] %v4261
      %4294 = vst [vmem:[%s238 + $0x80] sm:$0xff] %v4262
      %4295 = vst [vmem:[%s238 + $0x88] sm:$0xff] %v4263
      %4296 = vst [vmem:[%s238 + $0x90] sm:$0xff] %v4264
      %4297 = vst [vmem:[%s238 + $0x98] sm:$0xff] %v4265
      %4298 = vst [vmem:[%s238 + $0xa0] sm:$0xff] %v4266
      %4299 = vst [vmem:[%s238 + $0xa8] sm:$0xff] %v4267
      %4300 = vst [vmem:[%s238 + $0xb0] sm:$0xff] %v4268
      %4301 = vst [vmem:[%s238 + $0xb8] sm:$0xff] %v4269
      %4302 = vst [vmem:[%s238 + $0xc0] sm:$0xff] %v4270
      %4303 = vst [vmem:[%s238 + $0xc8] sm:$0xff] %v4271
      %4304 = vst [vmem:[%s238 + $0xd0] sm:$0xff] %v4272
      %4305 = vst [vmem:[%s238 + $0xd8] sm:$0xff] %v4273
      %4306 = vst [vmem:[%s238 + $0xe0] sm:$0xff] %v4274
      %4307 = vst [vmem:[%s238 + $0xe8] sm:$0xff] %v4275
      %4308 = vst [vmem:[%s238 + $0xf0] sm:$0xff] %v4276
      %4309 = vst [vmem:[%s238 + $0xf8] sm:$0xff] %v4277
      %s4310 = smul.u32 32, %s21
      %p4311 = scmp.lt.s32.totalorder %s19, 1
      %s4312 = scalar_select %p4311, %s19, 1
      %p4313 = scmp.lt.s32.totalorder %s4310, 31
      %s4314 = scalar_select %p4313, %s4310, 31
      %p4315 = scmp.lt.s32.totalorder %s20, 0
      %s4316 = scalar_select %p4315, %s20, 0
      %s4317 = sadd.s32 %s4316, %s4314
      %s4318 = smul.addr %s4312, 32
      %s4319 = sadd.s32 %s4317, %s4318
      %s4320 = smul.addr %s4319, 8
      %s4321 = scalar_lea.vmem %s3, %s4320
      // Predicated region
      $region33: #{_forward_impl.1} parent=31 // pred_check
        %p4322 = pneg %p133
      $region34: #{_forward_impl.1} parent=31 // pred_check_branch
        %4324 = sbr.rel (%p4322) target = $region36
      $region35: #{_forward_impl.1} parent=31 // pred_region
        %s4325 = smul.u32 32, %s21
      $region36: #{_forward_impl.1} parent=31 // pred_fallthru
        _
    $region32: #{_forward_impl.1} parent=5 // pred_fallthru
      _
    %p4326 = scmp.le.s32.totalorder 2, %s9
    // Predicated region
    $region37: #{_forward_impl.1} parent=5 // pred_check
      %p4327 = pneg %p4326
    $region38: #{_forward_impl.1} parent=5 // pred_check_branch
      %4329 = sbr.rel (%p4327) target = $region40
    $region39: #{_forward_impl.1} parent=5 // pred_region
      %s4330 = ssub.s32 %s9, 2
      // Predicated region
      $region41: #{_forward_impl.1} parent=39 // pred_check
        %p4331 = pneg %p139
      $region42: #{_forward_impl.1} parent=39 // pred_check_branch
        %4333 = sbr.rel (%p4331) target = $region44
      $region43: #{_forward_impl.1} parent=39 // pred_region
        %s4334 = smul.u32 32, %s24
        %p4335 = scmp.lt.s32.totalorder %s22, 1
        %s4336 = scalar_select %p4335, %s22, 1
        %p4337 = scmp.lt.s32.totalorder %s4334, 31
        %s4338 = scalar_select %p4337, %s4334, 31
        %p4339 = scmp.lt.s32.totalorder %s23, 0
        %s4340 = scalar_select %p4339, %s23, 0
        %s4341 = sadd.s32 %s4340, %s4338
        %s4342 = smul.addr %s4336, 32
        %s4343 = sadd.s32 %s4341, %s4342
        %s4344 = smul.addr %s4343, 8
        %s4345 = scalar_lea.vmem %s3, %s4344
      $region44: #{_forward_impl.1} parent=39 // pred_fallthru
        _
    $region40: #{_forward_impl.1} parent=5 // pred_fallthru
      _
  $region6: #{_forward_impl.1} parent=0 // loop_footer
    %s13 = sadd.s32 1, %s9
  $region7: #{_forward_impl.1} parent=0 // loop_footer_branch
    %8 = sbr.rel target = $region3
  $region8: #{_forward_impl.1} parent=0 // loop_exit
    _

</llo_original>
